<compile_context>
chip_gen: v7x
topology: tpu7x:2x2x1
jax: 0.10.0
libtpu: 0.0.40
codegen_flags: <defaults>
</compile_context>

<pallas_src>
import numpy as np
import jax
import jax.numpy as jnp
from jax import lax
from jax.experimental import pallas as pl
from jax.experimental.pallas import tpu as pltpu

BN_EPS = 1e-5


# --------------------------------------------------------------------------
# Pallas kernel: whole bottleneck forward on one resident tile set (NHWC).
# --------------------------------------------------------------------------
def _bottleneck_kernel(x_ref, w1_ref, g1_ref, b1_ref,
                       w2_ref, g2_ref, b2_ref,
                       w3_ref, g3_ref, b3_ref,
                       out_ref, pad_ref):
    N, H, W, Cin = x_ref.shape
    P = w1_ref.shape[1]           # planes
    Cout = out_ref.shape[3]       # planes * 4 (== Cin, downsample=None)
    NHW = N * H * W
    inv_nhw = 1.0 / float(NHW)

    def bn(y, gamma, beta):
        # Training-mode BatchNorm2d (batch stats, biased variance, eps=1e-5),
        # one-pass stats: var = E[y^2] - mean^2.  f32 throughout.
        # NOTE: for production NHW sizes switch to a shifted/two-pass form.
        s = jnp.sum(y, axis=0, keepdims=True)
        ss = jnp.sum(y * y, axis=0, keepdims=True)
        mean = s * inv_nhw
        var = ss * inv_nhw - mean * mean
        scale = gamma * lax.rsqrt(var + BN_EPS)
        return (y - mean) * scale + beta

    # ---- conv1 (1x1, Cin -> P) + BN1 + ReLU -------------------------------
    # bf16 MXU operands, f32 accumulation.
    xb = x_ref[...].astype(jnp.bfloat16).reshape(NHW, Cin)
    y1 = jnp.dot(xb, w1_ref[...], preferred_element_type=jnp.float32)
    h1 = jnp.maximum(bn(y1, g1_ref[...], b1_ref[...]), 0.0)       # (NHW, P) f32

    # ---- conv2 (3x3, padding=1, P -> P) as a single im2col matmul ---------
    # Stage h1 once into a zero-padded (N, H+2, W+2, P) scratch; padding=1 in
    # both H and W lives in the scratch, so no rolls / boundary masks.
    # TODO(synk): for production tiling store this scratch in bf16 and
    # lane-dense ((N, H+2, (W+2)*P)) to cut its VMEM footprint.
    pad_ref[...] = jnp.zeros(pad_ref.shape, jnp.float32)
    pad_ref[:, 1:H + 1, 1:W + 1, :] = h1.reshape(N, H, W, P)

    # 9 static-slice taps -> (NHW, 9P) bf16 patch matrix, one K=9P contraction.
    taps = []
    for kh in range(3):
        for kw in range(3):
            taps.append(pad_ref[:, kh:kh + H, kw:kw + W, :].astype(jnp.bfloat16))
    patches = jnp.concatenate(taps, axis=-1).reshape(NHW, 9 * P)
    y2 = jnp.dot(patches, w2_ref[...], preferred_element_type=jnp.float32)
    h2 = jnp.maximum(bn(y2, g2_ref[...], b2_ref[...]), 0.0)       # (NHW, P) f32

    # ---- conv3 (1x1, P -> Cout) + BN3 + residual + ReLU --------------------
    y3 = jnp.dot(h2.astype(jnp.bfloat16), w3_ref[...],
                 preferred_element_type=jnp.float32)
    z = bn(y3, g3_ref[...], b3_ref[...])
    # Re-read the identity here (short live range; x stays in its VMEM buffer).
    identity = x_ref[...].reshape(NHW, Cin)
    out = jnp.maximum(z + identity, 0.0)
    out_ref[...] = out.reshape(N, H, W, Cout).astype(out_ref.dtype)


# --------------------------------------------------------------------------
# Parameter init (PyTorch OIHW layout, mirroring the nn.Module's tensors).
# --------------------------------------------------------------------------
def init_params(key, inplanes, planes):
    exp = 4
    ks = jax.random.split(key, 9)
    return {
        'w1': jax.random.normal(ks[0], (planes, inplanes, 1, 1), jnp.float32) * 0.1,
        'bn1_g': 1.0 + 0.1 * jax.random.normal(ks[1], (planes,), jnp.float32),
        'bn1_b': 0.1 * jax.random.normal(ks[2], (planes,), jnp.float32),
        'w2': jax.random.normal(ks[3], (planes, planes, 3, 3), jnp.float32) * 0.1,
        'bn2_g': 1.0 + 0.1 * jax.random.normal(ks[4], (planes,), jnp.float32),
        'bn2_b': 0.1 * jax.random.normal(ks[5], (planes,), jnp.float32),
        'w3': jax.random.normal(ks[6], (planes * exp, planes, 1, 1), jnp.float32) * 0.1,
        'bn3_g': 1.0 + 0.1 * jax.random.normal(ks[7], (planes * exp,), jnp.float32),
        'bn3_b': 0.1 * jax.random.normal(ks[8], (planes * exp,), jnp.float32),
    }


# --------------------------------------------------------------------------
# Wrapper: one-time weight relayout + pallas_call.  Activations stay NHWC
# end-to-end (no NCHW<->NHWC activation transposes around the kernel; an
# NCHW caller should relayout once at the model boundary, not per block).
# --------------------------------------------------------------------------
def bottleneck_forward_nhwc(x_nhwc, params, stride=1, dilation=1):
    """x_nhwc: (N, H, W, Cin) float32.  Returns (N, H, W, Cout) float32.

    Implements BottleneckV1b with the default constructor arguments
    (stride=1, dilation=1, downsample=None, norm_layer=BatchNorm2d in
    training mode)."""
    # TODO(synk): stride>1 / dilation>1 / downsample branches not implemented
    # (module defaults); production spatial tiling + two-stage BN per header.
    assert stride == 1 and dilation == 1, "only default stride/dilation supported"

    n, h, w, cin = x_nhwc.shape
    planes = params['w1'].shape[0]
    cout = params['w3'].shape[0]
    assert cout == cin, "downsample=None residual requires inplanes == planes*4"

    # One-time weight glue: OIHW -> matmul layouts, cast to bf16 (MXU operands).
    w1 = params['w1'][:, :, 0, 0].T.astype(jnp.bfloat16)                 # (Cin, P)
    w2 = (jnp.transpose(params['w2'], (2, 3, 1, 0))                      # (kh,kw,I,O)
          .reshape(9 * planes, planes).astype(jnp.bfloat16))             # (9P, P)
    w3 = params['w3'][:, :, 0, 0].T.astype(jnp.bfloat16)                 # (P, Cout)
    g1 = params['bn1_g'][None, :]; b1 = params['bn1_b'][None, :]
    g2 = params['bn2_g'][None, :]; b2 = params['bn2_b'][None, :]
    g3 = params['bn3_g'][None, :]; b3 = params['bn3_b'][None, :]

    vmem = pl.BlockSpec(memory_space=pltpu.MemorySpace.VMEM)
    return pl.pallas_call(
        _bottleneck_kernel,
        out_shape=jax.ShapeDtypeStruct((n, h, w, cout), jnp.float32),
        in_specs=[vmem] * 10,
        out_specs=vmem,
        scratch_shapes=[pltpu.VMEM((n, h + 2, w + 2, planes), jnp.float32)],
    )(x_nhwc.astype(jnp.float32), w1, g1, b1, w2, g2, b2, w3, g3, b3)


# --------------------------------------------------------------------------
# Pure-JAX reference (independent: lax.conv + two-pass BN), NHWC.
# `bf16_mxu_operands=True` applies the same bf16 rounding the kernel applies
# at each MXU input (the standard TPU mixed-precision recipe for f32 models),
# so it can be compared tightly; the f32 version checks closeness to the
# exact PyTorch-f32 semantics.
# --------------------------------------------------------------------------
def _bn_train_nhwc(x, g, b, eps=BN_EPS):
    mean = jnp.mean(x, axis=(0, 1, 2), keepdims=True)
    var = jnp.mean(jnp.square(x - mean), axis=(0, 1, 2), keepdims=True)
    return (x - mean) * lax.rsqrt(var + eps) * g + b


def _reference_forward(x, p, *, bf16_mxu_operands):
    rd = ((lambda t: t.astype(jnp.bfloat16).astype(jnp.float32))
          if bf16_mxu_operands else (lambda t: t))
    dn = ('NHWC', 'HWIO', 'NHWC')

    def conv(inp, w_oihw, padding):
        w = jnp.transpose(w_oihw, (2, 3, 1, 0))          # OIHW -> HWIO
        return lax.conv_general_dilated(rd(inp), rd(w), (1, 1), padding,
                                        dimension_numbers=dn,
                                        precision=lax.Precision.HIGHEST)

    y = conv(x, p['w1'], 'VALID')
    y = jnp.maximum(_bn_train_nhwc(y, p['bn1_g'], p['bn1_b']), 0.0)
    y = conv(y, p['w2'], ((1, 1), (1, 1)))
    y = jnp.maximum(_bn_train_nhwc(y, p['bn2_g'], p['bn2_b']), 0.0)
    y = conv(y, p['w3'], 'VALID')
    y = _bn_train_nhwc(y, p['bn3_g'], p['bn3_b'])
    return jnp.maximum(y + x, 0.0)


if __name__ == "__main__":
    key = jax.random.PRNGKey(0)
    kx, kp = jax.random.split(key)

    N, planes = 2, 32
    inplanes = planes * 4          # 128: residual valid w/o downsample, lane-dense
    H = W = 16

    x_nhwc = jax.random.normal(kx, (N, H, W, inplanes), jnp.float32)
    params = init_params(kp, inplanes, planes)

    out = jax.block_until_ready(bottleneck_forward_nhwc(x_nhwc, params))

    # Tight check vs. an independent implementation of the same mixed-precision
    # recipe (bf16 MXU operands, f32 accumulation / BN):
    ref_mixed = jax.block_until_ready(
        _reference_forward(x_nhwc, params, bf16_mxu_operands=True))
    np.testing.assert_allclose(np.asarray(out), np.asarray(ref_mixed),
                               rtol=1e-2, atol=1e-2)

    # Loose check vs. pure-f32 module semantics (bounds the bf16-operand drift;
    # observed max |diff| is ~2e-2 at these shapes/statistics):
    ref_f32 = jax.block_until_ready(
        _reference_forward(x_nhwc, params, bf16_mxu_operands=False))
    np.testing.assert_allclose(np.asarray(out), np.asarray(ref_f32),
                               rtol=1e-1, atol=1e-1)

    print("KERNEL_OK")
</pallas_src>

<mosaic_0001>
module attributes {stable_mosaic.version = 11 : i64} {
  func.func @_bottleneck_kernel(%arg0: memref<2x16x16x128xf32, #tpu.memory_space<vmem>>, %arg1: memref<128x32xbf16, #tpu.memory_space<vmem>>, %arg2: memref<1x32xf32, #tpu.memory_space<vmem>>, %arg3: memref<1x32xf32, #tpu.memory_space<vmem>>, %arg4: memref<288x32xbf16, #tpu.memory_space<vmem>>, %arg5: memref<1x32xf32, #tpu.memory_space<vmem>>, %arg6: memref<1x32xf32, #tpu.memory_space<vmem>>, %arg7: memref<32x128xbf16, #tpu.memory_space<vmem>>, %arg8: memref<1x128xf32, #tpu.memory_space<vmem>>, %arg9: memref<1x128xf32, #tpu.memory_space<vmem>>, %arg10: memref<2x16x16x128xf32, #tpu.memory_space<vmem>>, %arg11: memref<2x18x18x32xf32, #tpu.memory_space<vmem>>) attributes {dimension_semantics = [], scalar_prefetch = 0 : i64, scratch_operands = 1 : i64, tpu.core_type = #tpu.core_type<tc>} {
    %c0 = arith.constant 0 : index
    %c0_0 = arith.constant 0 : index
    %c0_1 = arith.constant 0 : index
    %c0_2 = arith.constant 0 : index
    %0 = vector.load %arg0[%c0, %c0_0, %c0_1, %c0_2] : memref<2x16x16x128xf32, #tpu.memory_space<vmem>>, vector<2x16x16x128xf32>
    %1 = arith.truncf %0 : vector<2x16x16x128xf32> to vector<2x16x16x128xbf16>
    %2 = vector.shape_cast %1 : vector<2x16x16x128xbf16> to vector<512x128xbf16>
    %c0_3 = arith.constant 0 : index
    %c0_4 = arith.constant 0 : index
    %3 = vector.load %arg1[%c0_3, %c0_4] : memref<128x32xbf16, #tpu.memory_space<vmem>>, vector<128x32xbf16>
    %cst = arith.constant dense<0.000000e+00> : vector<512x32xf32>
    %4 = tpu.matmul %2, %3, %cst {dimension_numbers = #tpu.dot_dimension_numbers<[1], [0], [0], [1], [0, 0, 1, 1], [], []>} : vector<512x128xbf16>, vector<128x32xbf16>, vector<512x32xf32> -> vector<512x32xf32>
    %c0_5 = arith.constant 0 : index
    %c0_6 = arith.constant 0 : index
    %5 = vector.load %arg2[%c0_5, %c0_6] : memref<1x32xf32, #tpu.memory_space<vmem>>, vector<1x32xf32>
    %c0_7 = arith.constant 0 : index
    %c0_8 = arith.constant 0 : index
    %6 = vector.load %arg3[%c0_7, %c0_8] : memref<1x32xf32, #tpu.memory_space<vmem>>, vector<1x32xf32>
    %cst_9 = arith.constant dense<0.000000e+00> : vector<32xf32>
    %7 = vector.multi_reduction <add>, %4, %cst_9 [0] : vector<512x32xf32> to vector<32xf32>
    %8 = vector.shape_cast %7 : vector<32xf32> to vector<1x32xf32>
    %9 = arith.mulf %4, %4 : vector<512x32xf32>
    %cst_10 = arith.constant dense<0.000000e+00> : vector<32xf32>
    %10 = vector.multi_reduction <add>, %9, %cst_10 [0] : vector<512x32xf32> to vector<32xf32>
    %11 = vector.shape_cast %10 : vector<32xf32> to vector<1x32xf32>
    %cst_11 = arith.constant 0.001953125 : f32
    %12 = vector.broadcast %cst_11 : f32 to vector<1x32xf32>
    %13 = arith.mulf %8, %12 : vector<1x32xf32>
    %cst_12 = arith.constant 0.001953125 : f32
    %14 = vector.broadcast %cst_12 : f32 to vector<1x32xf32>
    %15 = arith.mulf %11, %14 : vector<1x32xf32>
    %16 = arith.mulf %13, %13 : vector<1x32xf32>
    %17 = arith.subf %15, %16 : vector<1x32xf32>
    %cst_13 = arith.constant 9.99999974E-6 : f32
    %18 = vector.broadcast %cst_13 : f32 to vector<1x32xf32>
    %19 = arith.addf %17, %18 : vector<1x32xf32>
    %20 = math.rsqrt %19 : vector<1x32xf32>
    %21 = arith.mulf %5, %20 : vector<1x32xf32>
    %22 = vector.broadcast %13 : vector<1x32xf32> to vector<512x32xf32>
    %23 = arith.subf %4, %22 : vector<512x32xf32>
    %24 = vector.broadcast %21 : vector<1x32xf32> to vector<512x32xf32>
    %25 = arith.mulf %23, %24 : vector<512x32xf32>
    %26 = vector.broadcast %6 : vector<1x32xf32> to vector<512x32xf32>
    %27 = arith.addf %25, %26 : vector<512x32xf32>
    %cst_14 = arith.constant 0.000000e+00 : f32
    %28 = vector.broadcast %cst_14 : f32 to vector<512x32xf32>
    %29 = arith.maximumf %27, %28 : vector<512x32xf32>
    %cst_15 = arith.constant 0.000000e+00 : f32
    %30 = vector.broadcast %cst_15 : f32 to vector<2x18x18x32xf32>
    %c0_16 = arith.constant 0 : index
    %c0_17 = arith.constant 0 : index
    %c0_18 = arith.constant 0 : index
    %c0_19 = arith.constant 0 : index
    %31 = vector.load %arg11[%c0_16, %c0_17, %c0_18, %c0_19] : memref<2x18x18x32xf32, #tpu.memory_space<vmem>>, vector<2x18x18x32xf32>
    tpu.vector_store %arg11[%c0_16, %c0_17, %c0_18, %c0_19], %30 {strides = array<i32>} : memref<2x18x18x32xf32, #tpu.memory_space<vmem>>, vector<2x18x18x32xf32>,
    %32 = vector.shape_cast %29 : vector<512x32xf32> to vector<2x16x16x32xf32>
    %c0_20 = arith.constant 0 : index
    %c1 = arith.constant 1 : index
    %c1_21 = arith.constant 1 : index
    %c0_22 = arith.constant 0 : index
    %33 = vector.load %arg11[%c0_20, %c1, %c1_21, %c0_22] : memref<2x18x18x32xf32, #tpu.memory_space<vmem>>, vector<2x16x16x32xf32>
    tpu.vector_store %arg11[%c0_20, %c1, %c1_21, %c0_22], %32 {strides = array<i32>} : memref<2x18x18x32xf32, #tpu.memory_space<vmem>>, vector<2x16x16x32xf32>,
    %c0_23 = arith.constant 0 : index
    %c0_24 = arith.constant 0 : index
    %c0_25 = arith.constant 0 : index
    %c0_26 = arith.constant 0 : index
    %34 = vector.load %arg11[%c0_23, %c0_24, %c0_25, %c0_26] : memref<2x18x18x32xf32, #tpu.memory_space<vmem>>, vector<2x16x16x32xf32>
    %35 = arith.truncf %34 : vector<2x16x16x32xf32> to vector<2x16x16x32xbf16>
    %c0_27 = arith.constant 0 : index
    %c0_28 = arith.constant 0 : index
    %c1_29 = arith.constant 1 : index
    %c0_30 = arith.constant 0 : index
    %36 = vector.load %arg11[%c0_27, %c0_28, %c1_29, %c0_30] : memref<2x18x18x32xf32, #tpu.memory_space<vmem>>, vector<2x16x16x32xf32>
    %37 = arith.truncf %36 : vector<2x16x16x32xf32> to vector<2x16x16x32xbf16>
    %c0_31 = arith.constant 0 : index
    %c0_32 = arith.constant 0 : index
    %c2 = arith.constant 2 : index
    %c0_33 = arith.constant 0 : index
    %38 = vector.load %arg11[%c0_31, %c0_32, %c2, %c0_33] : memref<2x18x18x32xf32, #tpu.memory_space<vmem>>, vector<2x16x16x32xf32>
    %39 = arith.truncf %38 : vector<2x16x16x32xf32> to vector<2x16x16x32xbf16>
    %c0_34 = arith.constant 0 : index
    %c1_35 = arith.constant 1 : index
    %c0_36 = arith.constant 0 : index
    %c0_37 = arith.constant 0 : index
    %40 = vector.load %arg11[%c0_34, %c1_35, %c0_36, %c0_37] : memref<2x18x18x32xf32, #tpu.memory_space<vmem>>, vector<2x16x16x32xf32>
    %41 = arith.truncf %40 : vector<2x16x16x32xf32> to vector<2x16x16x32xbf16>
    %c0_38 = arith.constant 0 : index
    %c1_39 = arith.constant 1 : index
    %c1_40 = arith.constant 1 : index
    %c0_41 = arith.constant 0 : index
    %42 = vector.load %arg11[%c0_38, %c1_39, %c1_40, %c0_41] : memref<2x18x18x32xf32, #tpu.memory_space<vmem>>, vector<2x16x16x32xf32>
    %43 = arith.truncf %42 : vector<2x16x16x32xf32> to vector<2x16x16x32xbf16>
    %c0_42 = arith.constant 0 : index
    %c1_43 = arith.constant 1 : index
    %c2_44 = arith.constant 2 : index
    %c0_45 = arith.constant 0 : index
    %44 = vector.load %arg11[%c0_42, %c1_43, %c2_44, %c0_45] : memref<2x18x18x32xf32, #tpu.memory_space<vmem>>, vector<2x16x16x32xf32>
    %45 = arith.truncf %44 : vector<2x16x16x32xf32> to vector<2x16x16x32xbf16>
    %c0_46 = arith.constant 0 : index
    %c2_47 = arith.constant 2 : index
    %c0_48 = arith.constant 0 : index
    %c0_49 = arith.constant 0 : index
    %46 = vector.load %arg11[%c0_46, %c2_47, %c0_48, %c0_49] : memref<2x18x18x32xf32, #tpu.memory_space<vmem>>, vector<2x16x16x32xf32>
    %47 = arith.truncf %46 : vector<2x16x16x32xf32> to vector<2x16x16x32xbf16>
    %c0_50 = arith.constant 0 : index
    %c2_51 = arith.constant 2 : index
    %c1_52 = arith.constant 1 : index
    %c0_53 = arith.constant 0 : index
    %48 = vector.load %arg11[%c0_50, %c2_51, %c1_52, %c0_53] : memref<2x18x18x32xf32, #tpu.memory_space<vmem>>, vector<2x16x16x32xf32>
    %49 = arith.truncf %48 : vector<2x16x16x32xf32> to vector<2x16x16x32xbf16>
    %c0_54 = arith.constant 0 : index
    %c2_55 = arith.constant 2 : index
    %c2_56 = arith.constant 2 : index
    %c0_57 = arith.constant 0 : index
    %50 = vector.load %arg11[%c0_54, %c2_55, %c2_56, %c0_57] : memref<2x18x18x32xf32, #tpu.memory_space<vmem>>, vector<2x16x16x32xf32>
    %51 = arith.truncf %50 : vector<2x16x16x32xf32> to vector<2x16x16x32xbf16>
    %52 = tpu.concatenate %35, %37, %39, %41, %43, %45, %47, %49, %51 in 3 : vector<2x16x16x32xbf16>, vector<2x16x16x32xbf16>, vector<2x16x16x32xbf16>, vector<2x16x16x32xbf16>, vector<2x16x16x32xbf16>, vector<2x16x16x32xbf16>, vector<2x16x16x32xbf16>, vector<2x16x16x32xbf16>, vector<2x16x16x32xbf16> -> vector<2x16x16x288xbf16>
    %53 = vector.shape_cast %52 : vector<2x16x16x288xbf16> to vector<512x288xbf16>
    %c0_58 = arith.constant 0 : index
    %c0_59 = arith.constant 0 : index
    %54 = vector.load %arg4[%c0_58, %c0_59] : memref<288x32xbf16, #tpu.memory_space<vmem>>, vector<288x32xbf16>
    %cst_60 = arith.constant dense<0.000000e+00> : vector<512x32xf32>
    %55 = tpu.matmul %53, %54, %cst_60 {dimension_numbers = #tpu.dot_dimension_numbers<[1], [0], [0], [1], [0, 0, 1, 1], [], []>} : vector<512x288xbf16>, vector<288x32xbf16>, vector<512x32xf32> -> vector<512x32xf32>
    %c0_61 = arith.constant 0 : index
    %c0_62 = arith.constant 0 : index
    %56 = vector.load %arg5[%c0_61, %c0_62] : memref<1x32xf32, #tpu.memory_space<vmem>>, vector<1x32xf32>
    %c0_63 = arith.constant 0 : index
    %c0_64 = arith.constant 0 : index
    %57 = vector.load %arg6[%c0_63, %c0_64] : memref<1x32xf32, #tpu.memory_space<vmem>>, vector<1x32xf32>
    %cst_65 = arith.constant dense<0.000000e+00> : vector<32xf32>
    %58 = vector.multi_reduction <add>, %55, %cst_65 [0] : vector<512x32xf32> to vector<32xf32>
    %59 = vector.shape_cast %58 : vector<32xf32> to vector<1x32xf32>
    %60 = arith.mulf %55, %55 : vector<512x32xf32>
    %cst_66 = arith.constant dense<0.000000e+00> : vector<32xf32>
    %61 = vector.multi_reduction <add>, %60, %cst_66 [0] : vector<512x32xf32> to vector<32xf32>
    %62 = vector.shape_cast %61 : vector<32xf32> to vector<1x32xf32>
    %cst_67 = arith.constant 0.001953125 : f32
    %63 = vector.broadcast %cst_67 : f32 to vector<1x32xf32>
    %64 = arith.mulf %59, %63 : vector<1x32xf32>
    %cst_68 = arith.constant 0.001953125 : f32
    %65 = vector.broadcast %cst_68 : f32 to vector<1x32xf32>
    %66 = arith.mulf %62, %65 : vector<1x32xf32>
    %67 = arith.mulf %64, %64 : vector<1x32xf32>
    %68 = arith.subf %66, %67 : vector<1x32xf32>
    %cst_69 = arith.constant 9.99999974E-6 : f32
    %69 = vector.broadcast %cst_69 : f32 to vector<1x32xf32>
    %70 = arith.addf %68, %69 : vector<1x32xf32>
    %71 = math.rsqrt %70 : vector<1x32xf32>
    %72 = arith.mulf %56, %71 : vector<1x32xf32>
    %73 = vector.broadcast %64 : vector<1x32xf32> to vector<512x32xf32>
    %74 = arith.subf %55, %73 : vector<512x32xf32>
    %75 = vector.broadcast %72 : vector<1x32xf32> to vector<512x32xf32>
    %76 = arith.mulf %74, %75 : vector<512x32xf32>
    %77 = vector.broadcast %57 : vector<1x32xf32> to vector<512x32xf32>
    %78 = arith.addf %76, %77 : vector<512x32xf32>
    %cst_70 = arith.constant 0.000000e+00 : f32
    %79 = vector.broadcast %cst_70 : f32 to vector<512x32xf32>
    %80 = arith.maximumf %78, %79 : vector<512x32xf32>
    %81 = arith.truncf %80 : vector<512x32xf32> to vector<512x32xbf16>
    %c0_71 = arith.constant 0 : index
    %c0_72 = arith.constant 0 : index
    %82 = vector.load %arg7[%c0_71, %c0_72] : memref<32x128xbf16, #tpu.memory_space<vmem>>, vector<32x128xbf16>
    %cst_73 = arith.constant dense<0.000000e+00> : vector<512x128xf32>
    %83 = tpu.matmul %81, %82, %cst_73 {dimension_numbers = #tpu.dot_dimension_numbers<[1], [0], [0], [1], [0, 0, 1, 1], [], []>} : vector<512x32xbf16>, vector<32x128xbf16>, vector<512x128xf32> -> vector<512x128xf32>
    %c0_74 = arith.constant 0 : index
    %c0_75 = arith.constant 0 : index
    %84 = vector.load %arg8[%c0_74, %c0_75] : memref<1x128xf32, #tpu.memory_space<vmem>>, vector<1x128xf32>
    %c0_76 = arith.constant 0 : index
    %c0_77 = arith.constant 0 : index
    %85 = vector.load %arg9[%c0_76, %c0_77] : memref<1x128xf32, #tpu.memory_space<vmem>>, vector<1x128xf32>
    %cst_78 = arith.constant dense<0.000000e+00> : vector<128xf32>
    %86 = vector.multi_reduction <add>, %83, %cst_78 [0] : vector<512x128xf32> to vector<128xf32>
    %87 = vector.shape_cast %86 : vector<128xf32> to vector<1x128xf32>
    %88 = arith.mulf %83, %83 : vector<512x128xf32>
    %cst_79 = arith.constant dense<0.000000e+00> : vector<128xf32>
    %89 = vector.multi_reduction <add>, %88, %cst_79 [0] : vector<512x128xf32> to vector<128xf32>
    %90 = vector.shape_cast %89 : vector<128xf32> to vector<1x128xf32>
    %cst_80 = arith.constant 0.001953125 : f32
    %91 = vector.broadcast %cst_80 : f32 to vector<1x128xf32>
    %92 = arith.mulf %87, %91 : vector<1x128xf32>
    %cst_81 = arith.constant 0.001953125 : f32
    %93 = vector.broadcast %cst_81 : f32 to vector<1x128xf32>
    %94 = arith.mulf %90, %93 : vector<1x128xf32>
    %95 = arith.mulf %92, %92 : vector<1x128xf32>
    %96 = arith.subf %94, %95 : vector<1x128xf32>
    %cst_82 = arith.constant 9.99999974E-6 : f32
    %97 = vector.broadcast %cst_82 : f32 to vector<1x128xf32>
    %98 = arith.addf %96, %97 : vector<1x128xf32>
    %99 = math.rsqrt %98 : vector<1x128xf32>
    %100 = arith.mulf %84, %99 : vector<1x128xf32>
    %101 = vector.broadcast %92 : vector<1x128xf32> to vector<512x128xf32>
    %102 = arith.subf %83, %101 : vector<512x128xf32>
    %103 = vector.broadcast %100 : vector<1x128xf32> to vector<512x128xf32>
    %104 = arith.mulf %102, %103 : vector<512x128xf32>
    %105 = vector.broadcast %85 : vector<1x128xf32> to vector<512x128xf32>
    %106 = arith.addf %104, %105 : vector<512x128xf32>
    %c0_83 = arith.constant 0 : index
    %c0_84 = arith.constant 0 : index
    %c0_85 = arith.constant 0 : index
    %c0_86 = arith.constant 0 : index
    %107 = vector.load %arg0[%c0_83, %c0_84, %c0_85, %c0_86] : memref<2x16x16x128xf32, #tpu.memory_space<vmem>>, vector<2x16x16x128xf32>
    %108 = vector.shape_cast %107 : vector<2x16x16x128xf32> to vector<512x128xf32>
    %109 = arith.addf %106, %108 : vector<512x128xf32>
    %cst_87 = arith.constant 0.000000e+00 : f32
    %110 = vector.broadcast %cst_87 : f32 to vector<512x128xf32>
    %111 = arith.maximumf %109, %110 : vector<512x128xf32>
    %112 = vector.shape_cast %111 : vector<512x128xf32> to vector<2x16x16x128xf32>
    %c0_88 = arith.constant 0 : index
    %c0_89 = arith.constant 0 : index
    %c0_90 = arith.constant 0 : index
    %c0_91 = arith.constant 0 : index
    %113 = vector.load %arg10[%c0_88, %c0_89, %c0_90, %c0_91] : memref<2x16x16x128xf32, #tpu.memory_space<vmem>>, vector<2x16x16x128xf32>
    tpu.vector_store %arg10[%c0_88, %c0_89, %c0_90, %c0_91], %112 {strides = array<i32>} : memref<2x16x16x128xf32, #tpu.memory_space<vmem>>, vector<2x16x16x128xf32>,
    return
  }
}

</mosaic_0001>

<llo_original>
// kernel: tpu_custom_call.1
$region0: #{tpu_custom_call.1}
  #allocation0 [shape = 'u32[]', space=smem, size = 0x4, offset = 0x4, fixed_abs, tag = 'smem constant byte address 0x4 - core index']
  #allocation1 [shape = 'u32[144,128]{1,0:T(1,128)}', space=vmem, size = 0x12000, scoped, tag = 'internal scratch']
  #allocation2 [shape = 'f32[2,18,18,32]{3,2,1,0:T(8,128)}', space=vmem, size = 0x6c000, scoped, tag = 'scratch operand']
  %s0 = inlined_call_operand.hbm [shape: f32[2,16,16,128], index: 0, kind: input, shape index: {}]
  %s1 = inlined_call_operand.vmem [shape: bf16[128,32], index: 1, kind: input, shape index: {}]
  %s2 = inlined_call_operand.vmem [shape: f32[1,32], index: 2, kind: input, shape index: {}]
  %s3 = inlined_call_operand.vmem [shape: f32[1,32], index: 3, kind: input, shape index: {}]
  %s4 = inlined_call_operand.vmem [shape: bf16[288,32], index: 4, kind: input, shape index: {}]
  %s5 = inlined_call_operand.vmem [shape: f32[1,32], index: 5, kind: input, shape index: {}]
  %s6 = inlined_call_operand.vmem [shape: f32[1,32], index: 6, kind: input, shape index: {}]
  %s7 = inlined_call_operand.vmem [shape: bf16[32,128], index: 7, kind: input, shape index: {}]
  %s8 = inlined_call_operand.vmem [shape: f32[1,128], index: 8, kind: input, shape index: {}]
  %s9 = inlined_call_operand.vmem [shape: f32[1,128], index: 9, kind: input, shape index: {}]
  %s10 = inlined_call_operand.hbm [shape: f32[2,16,16,128], index: 10, kind: output, shape index: {}]
  %s11 = sld [smem:[#allocation0]]
  $region54: #{tpu_custom_call.1} parent=0
    _
  %s13 = ssub.s32 1, %s11
  %s14 = scalar_select 0, %s13, %s11
  $region1: #{tpu_custom_call.1} parent=0
    #allocation3 [shape = 'u8[262144]{0}', space=vmem, size = 0x40000, scoped, tag = 'input window, operand 0, single buffered']
    #allocation4 [shape = 's32[1]{0}', space=sflag, size = 0x4, scoped, tag = 'scoped memory for tpu_custom_call.1']
    #allocation5 [shape = 's32[1]{0}', space=sflag, size = 0x4, scoped, tag = 'scoped memory for tpu_custom_call.1']
    #allocation6 [shape = 'u8[262144]{0}', space=vmem, size = 0x40000, scoped, tag = 'output window, operand 0, single buffered']
    %15 = vsyncpa [#allocation4], 0
    %16 = vsyncpa [#allocation5], 0
    // Predicated region
    $region2: #{tpu_custom_call.1} parent=1 // pred_check
      _
    $region3: #{tpu_custom_call.1} parent=1 // pred_check_branch
      %18 = sbr.rel (0) target = $region5
    $region4: #{tpu_custom_call.1} parent=1 // pred_region
      %s20 = ssub.s32 8192, 8192
      %21 = vsyncadd [#allocation4], %s20
      %s22 = sshll.u32 [#allocation3], 4
      %s23 = int_to_ptr.vmem [resolvable:$true] %s22
      %28 = dma.hbm_to_vmem [thread:$0]  %s0, 8192, %s23, [#allocation4], 128, 128, 8
    $region5: #{tpu_custom_call.1} parent=1 // pred_fallthru
      _
    // Predicated region
    $region6: #{tpu_custom_call.1} parent=1 // pred_check
      _
    $region7: #{tpu_custom_call.1} parent=1 // pred_check_branch
      %30 = sbr.rel (0) target = $region9
    $region8: #{tpu_custom_call.1} parent=1 // pred_region
      _
    $region9: #{tpu_custom_call.1} parent=1 // pred_fallthru
      _
    // Predicated region
    $region10: #{tpu_custom_call.1} parent=1 // pred_check
      _
    $region11: #{tpu_custom_call.1} parent=1 // pred_check_branch
      %32 = sbr.rel (0) target = $region13
    $region12: #{tpu_custom_call.1} parent=1 // pred_region
      _
    $region13: #{tpu_custom_call.1} parent=1 // pred_fallthru
      _
    // Predicated region
    $region14: #{tpu_custom_call.1} parent=1 // pred_check
      _
    $region15: #{tpu_custom_call.1} parent=1 // pred_check_branch
      %34 = sbr.rel (0) target = $region17
    $region16: #{tpu_custom_call.1} parent=1 // pred_region
      _
    $region17: #{tpu_custom_call.1} parent=1 // pred_fallthru
      _
    // Predicated region
    $region18: #{tpu_custom_call.1} parent=1 // pred_check
      _
    $region19: #{tpu_custom_call.1} parent=1 // pred_check_branch
      %36 = sbr.rel (0) target = $region21
    $region20: #{tpu_custom_call.1} parent=1 // pred_region
      _
    $region21: #{tpu_custom_call.1} parent=1 // pred_fallthru
      _
    // Predicated region
    $region22: #{tpu_custom_call.1} parent=1 // pred_check
      _
    $region23: #{tpu_custom_call.1} parent=1 // pred_check_branch
      %38 = sbr.rel (0) target = $region25
    $region24: #{tpu_custom_call.1} parent=1 // pred_region
      _
    $region25: #{tpu_custom_call.1} parent=1 // pred_fallthru
      _
    // Predicated region
    $region26: #{tpu_custom_call.1} parent=1 // pred_check
      _
    $region27: #{tpu_custom_call.1} parent=1 // pred_check_branch
      %40 = sbr.rel (0) target = $region29
    $region28: #{tpu_custom_call.1} parent=1 // pred_region
      _
    $region29: #{tpu_custom_call.1} parent=1 // pred_fallthru
      _
    // Predicated region
    $region30: #{tpu_custom_call.1} parent=1 // pred_check
      _
    $region31: #{tpu_custom_call.1} parent=1 // pred_check_branch
      %42 = sbr.rel (0) target = $region33
    $region32: #{tpu_custom_call.1} parent=1 // pred_region
      _
    $region33: #{tpu_custom_call.1} parent=1 // pred_fallthru
      _
    // Predicated region
    $region34: #{tpu_custom_call.1} parent=1 // pred_check
      _
    $region35: #{tpu_custom_call.1} parent=1 // pred_check_branch
      %44 = sbr.rel (0) target = $region37
    $region36: #{tpu_custom_call.1} parent=1 // pred_region
      _
    $region37: #{tpu_custom_call.1} parent=1 // pred_fallthru
      _
    // Predicated region
    $region38: #{tpu_custom_call.1} parent=1 // pred_check
      _
    $region39: #{tpu_custom_call.1} parent=1 // pred_check_branch
      %46 = sbr.rel (0) target = $region41
    $region40: #{tpu_custom_call.1} parent=1 // pred_region
      _
    $region41: #{tpu_custom_call.1} parent=1 // pred_fallthru
      _
    // Predicated region
    $region42: #{tpu_custom_call.1} parent=1 // pred_check
      _
    $region43: #{tpu_custom_call.1} parent=1 // pred_check_branch
      %48 = sbr.rel (0) target = $region45
    $region44: #{tpu_custom_call.1} parent=1 // pred_region
      %49 = dma.done [#allocation4], 8192
    $region45: #{tpu_custom_call.1} parent=1 // pred_fallthru
      _
    %v51 = vld [vmem:[#allocation3] sm:$0xff]
    %v52 = vld [vmem:[#allocation3 + $0x8] sm:$0xff]
    %v53 = vld [vmem:[#allocation3 + $0x10] sm:$0xff]
    %v54 = vld [vmem:[#allocation3 + $0x18] sm:$0xff]
    %v55 = vld [vmem:[#allocation3 + $0x20] sm:$0xff]
    %v56 = vld [vmem:[#allocation3 + $0x28] sm:$0xff]
    %v57 = vld [vmem:[#allocation3 + $0x30] sm:$0xff]
    %v58 = vld [vmem:[#allocation3 + $0x38] sm:$0xff]
    %v59 = vld [vmem:[#allocation3 + $0x40] sm:$0xff]
    %v60 = vld [vmem:[#allocation3 + $0x48] sm:$0xff]
    %v61 = vld [vmem:[#allocation3 + $0x50] sm:$0xff]
    %v62 = vld [vmem:[#allocation3 + $0x58] sm:$0xff]
    %v63 = vld [vmem:[#allocation3 + $0x60] sm:$0xff]
    %v64 = vld [vmem:[#allocation3 + $0x68] sm:$0xff]
    %v65 = vld [vmem:[#allocation3 + $0x70] sm:$0xff]
    %v66 = vld [vmem:[#allocation3 + $0x78] sm:$0xff]
    %v67 = vld [vmem:[#allocation3 + $0x80] sm:$0xff]
    %v68 = vld [vmem:[#allocation3 + $0x88] sm:$0xff]
    %v69 = vld [vmem:[#allocation3 + $0x90] sm:$0xff]
    %v70 = vld [vmem:[#allocation3 + $0x98] sm:$0xff]
    %v71 = vld [vmem:[#allocation3 + $0xa0] sm:$0xff]
    %v72 = vld [vmem:[#allocation3 + $0xa8] sm:$0xff]
    %v73 = vld [vmem:[#allocation3 + $0xb0] sm:$0xff]
    %v74 = vld [vmem:[#allocation3 + $0xb8] sm:$0xff]
    %v75 = vld [vmem:[#allocation3 + $0xc0] sm:$0xff]
    %v76 = vld [vmem:[#allocation3 + $0xc8] sm:$0xff]
    %v77 = vld [vmem:[#allocation3 + $0xd0] sm:$0xff]
    %v78 = vld [vmem:[#allocation3 + $0xd8] sm:$0xff]
    %v79 = vld [vmem:[#allocation3 + $0xe0] sm:$0xff]
    %v80 = vld [vmem:[#allocation3 + $0xe8] sm:$0xff]
    %v81 = vld [vmem:[#allocation3 + $0xf0] sm:$0xff]
    %v82 = vld [vmem:[#allocation3 + $0xf8] sm:$0xff]
    %v83 = vld [vmem:[#allocation3 + $0x100] sm:$0xff]
    %v84 = vld [vmem:[#allocation3 + $0x108] sm:$0xff]
    %v85 = vld [vmem:[#allocation3 + $0x110] sm:$0xff]
    %v86 = vld [vmem:[#allocation3 + $0x118] sm:$0xff]
    %v87 = vld [vmem:[#allocation3 + $0x120] sm:$0xff]
    %v88 = vld [vmem:[#allocation3 + $0x128] sm:$0xff]
    %v89 = vld [vmem:[#allocation3 + $0x130] sm:$0xff]
    %v90 = vld [vmem:[#allocation3 + $0x138] sm:$0xff]
    %v91 = vld [vmem:[#allocation3 + $0x140] sm:$0xff]
    %v92 = vld [vmem:[#allocation3 + $0x148] sm:$0xff]
    %v93 = vld [vmem:[#allocation3 + $0x150] sm:$0xff]
    %v94 = vld [vmem:[#allocation3 + $0x158] sm:$0xff]
    %v95 = vld [vmem:[#allocation3 + $0x160] sm:$0xff]
    %v96 = vld [vmem:[#allocation3 + $0x168] sm:$0xff]
    %v97 = vld [vmem:[#allocation3 + $0x170] sm:$0xff]
    %v98 = vld [vmem:[#allocation3 + $0x178] sm:$0xff]
    %v99 = vld [vmem:[#allocation3 + $0x180] sm:$0xff]
    %v100 = vld [vmem:[#allocation3 + $0x188] sm:$0xff]
    %v101 = vld [vmem:[#allocation3 + $0x190] sm:$0xff]
    %v102 = vld [vmem:[#allocation3 + $0x198] sm:$0xff]
    %v103 = vld [vmem:[#allocation3 + $0x1a0] sm:$0xff]
    %v104 = vld [vmem:[#allocation3 + $0x1a8] sm:$0xff]
    %v105 = vld [vmem:[#allocation3 + $0x1b0] sm:$0xff]
    %v106 = vld [vmem:[#allocation3 + $0x1b8] sm:$0xff]
    %v107 = vld [vmem:[#allocation3 + $0x1c0] sm:$0xff]
    %v108 = vld [vmem:[#allocation3 + $0x1c8] sm:$0xff]
    %v109 = vld [vmem:[#allocation3 + $0x1d0] sm:$0xff]
    %v110 = vld [vmem:[#allocation3 + $0x1d8] sm:$0xff]
    %v111 = vld [vmem:[#allocation3 + $0x1e0] sm:$0xff]
    %v112 = vld [vmem:[#allocation3 + $0x1e8] sm:$0xff]
    %v113 = vld [vmem:[#allocation3 + $0x1f0] sm:$0xff]
    %v114 = vld [vmem:[#allocation3 + $0x1f8] sm:$0xff]
    %v115 = vpack.c.bf16 %v52, %v51
    %v116 = vpack.c.bf16 %v54, %v53
    %v117 = vpack.c.bf16 %v56, %v55
    %v118 = vpack.c.bf16 %v58, %v57
    %v119 = vpack.c.bf16 %v60, %v59
    %v120 = vpack.c.bf16 %v62, %v61
    %v121 = vpack.c.bf16 %v64, %v63
    %v122 = vpack.c.bf16 %v66, %v65
    %v123 = vpack.c.bf16 %v68, %v67
    %v124 = vpack.c.bf16 %v70, %v69
    %v125 = vpack.c.bf16 %v72, %v71
    %v126 = vpack.c.bf16 %v74, %v73
    %v127 = vpack.c.bf16 %v76, %v75
    %v128 = vpack.c.bf16 %v78, %v77
    %v129 = vpack.c.bf16 %v80, %v79
    %v130 = vpack.c.bf16 %v82, %v81
    %v131 = vpack.c.bf16 %v84, %v83
    %v132 = vpack.c.bf16 %v86, %v85
    %v133 = vpack.c.bf16 %v88, %v87
    %v134 = vpack.c.bf16 %v90, %v89
    %v135 = vpack.c.bf16 %v92, %v91
    %v136 = vpack.c.bf16 %v94, %v93
    %v137 = vpack.c.bf16 %v96, %v95
    %v138 = vpack.c.bf16 %v98, %v97
    %v139 = vpack.c.bf16 %v100, %v99
    %v140 = vpack.c.bf16 %v102, %v101
    %v141 = vpack.c.bf16 %v104, %v103
    %v142 = vpack.c.bf16 %v106, %v105
    %v143 = vpack.c.bf16 %v108, %v107
    %v144 = vpack.c.bf16 %v110, %v109
    %v145 = vpack.c.bf16 %v112, %v111
    %v146 = vpack.c.bf16 %v114, %v113
    %v147 = vld [vmem:[%s1] sm:$0xf]
    %v148 = vld [vmem:[%s1 + $0x4] sm:$0xf]
    %v149 = vld [vmem:[%s1 + $0x8] sm:$0xf]
    %v150 = vld [vmem:[%s1 + $0xc] sm:$0xf]
    %v151 = vld [vmem:[%s1 + $0x10] sm:$0xf]
    %v152 = vld [vmem:[%s1 + $0x14] sm:$0xf]
    %v153 = vld [vmem:[%s1 + $0x18] sm:$0xf]
    %v154 = vld [vmem:[%s1 + $0x1c] sm:$0xf]
    %v155 = vld [vmem:[%s1 + $0x20] sm:$0xf]
    %v156 = vld [vmem:[%s1 + $0x24] sm:$0xf]
    %v157 = vld [vmem:[%s1 + $0x28] sm:$0xf]
    %v158 = vld [vmem:[%s1 + $0x2c] sm:$0xf]
    %v159 = vld [vmem:[%s1 + $0x30] sm:$0xf]
    %v160 = vld [vmem:[%s1 + $0x34] sm:$0xf]
    %v161 = vld [vmem:[%s1 + $0x38] sm:$0xf]
    %v162 = vld [vmem:[%s1 + $0x3c] sm:$0xf]
    %v179 = vunpack.c.l.b16 %v147
    %v180 = vunpack.c.l.b16 %v148
    %v181 = vunpack.c.l.b16 %v149
    %v182 = vunpack.c.l.b16 %v150
    %v183 = vunpack.c.l.b16 %v151
    %v184 = vunpack.c.l.b16 %v152
    %v185 = vunpack.c.l.b16 %v153
    %v186 = vunpack.c.l.b16 %v154
    %v187 = vunpack.c.l.b16 %v155
    %v188 = vunpack.c.l.b16 %v156
    %v189 = vunpack.c.l.b16 %v157
    %v190 = vunpack.c.l.b16 %v158
    %v191 = vunpack.c.l.b16 %v159
    %v192 = vunpack.c.l.b16 %v160
    %v193 = vunpack.c.l.b16 %v161
    %v194 = vunpack.c.l.b16 %v162
    %v195 = vpack.c.b16 %v180, %v179
    %v196 = vpack.c.b16 %v182, %v181
    %v197 = vpack.c.b16 %v184, %v183
    %v198 = vpack.c.b16 %v186, %v185
    %v199 = vpack.c.b16 %v188, %v187
    %v200 = vpack.c.b16 %v190, %v189
    %v201 = vpack.c.b16 %v192, %v191
    %v202 = vpack.c.b16 %v194, %v193
    %211 = vmatprep.subr.bf16.mxu0 0
    %212 = vmatpush1.bf16.msra.mxu0 %v195
    %213 = vmatprep.subr.bf16.mxu0 0
    %214 = vmatpush1.bf16.msra.mxu0 %v196
    %215 = vmatprep.subr.bf16.mxu0 0
    %216 = vmatpush1.bf16.msra.mxu0 %v197
    %217 = vmatprep.subr.bf16.mxu0 0
    %218 = vmatpush1.bf16.msra.mxu0 %v198
    %219 = vmatprep.subr.bf16.mxu0 0
    %220 = vmatpush1.bf16.msra.mxu0 %v199
    %221 = vmatprep.subr.bf16.mxu0 0
    %222 = vmatpush1.bf16.msra.mxu0 %v200
    %223 = vmatprep.subr.bf16.mxu0 0
    %224 = vmatpush1.bf16.msra.mxu0 %v201
    %225 = vmatprep.subr.bf16.mxu0 0
    %226 = vmatpush1.bf16.msra.mxu0 %v202
    %227 = vmatprep.subr.bf16.mxu0 0
    %228 = vmatpush1.bf16.msra.mxu0 0
    %229 = vmatprep.subr.bf16.mxu0 0
    %230 = vmatpush1.bf16.msra.mxu0 0
    %231 = vmatprep.subr.bf16.mxu0 0
    %232 = vmatpush1.bf16.msra.mxu0 0
    %233 = vmatprep.subr.bf16.mxu0 0
    %234 = vmatpush1.bf16.msra.mxu0 0
    %235 = vmatprep.subr.bf16.mxu0 0
    %236 = vmatpush1.bf16.msra.mxu0 0
    %237 = vmatprep.subr.bf16.mxu0 0
    %238 = vmatpush1.bf16.msra.mxu0 0
    %239 = vmatprep.subr.bf16.mxu0 0
    %240 = vmatpush1.bf16.msra.mxu0 0
    %241 = vmatprep.subr.bf16.mxu0 0
    %242 = vmatpush1.bf16.msra.mxu0 0
    %243 = vmatprep.mubr.bf16.mxu0 0
    %244 = vmatmul.mubr.bf16.gmra.mrb[0].mxu0 %v115
    %v245 = vpop.f32.mrb[0].mxu0
    %v246 = vadd.f32 0.0, %v245
    %v247 = vpop.f32.mrb[0].mxu0
    %v248 = vpop.f32.mrb[0].mxu0
    %v249 = vadd.f32 0.0, %v248
    %v250 = vpop.f32.mrb[0].mxu0
    %251 = vmatprep.mubr.bf16.mxu0 0
    %252 = vmatmul.mubr.bf16.gmra.mrb[0].mxu0 %v116
    %v253 = vpop.f32.mrb[0].mxu0
    %v254 = vadd.f32 0.0, %v253
    %v255 = vpop.f32.mrb[0].mxu0
    %v256 = vpop.f32.mrb[0].mxu0
    %v257 = vadd.f32 0.0, %v256
    %v258 = vpop.f32.mrb[0].mxu0
    %259 = vmatprep.mubr.bf16.mxu0 0
    %260 = vmatmul.mubr.bf16.gmra.mrb[0].mxu0 %v117
    %v261 = vpop.f32.mrb[0].mxu0
    %v262 = vadd.f32 0.0, %v261
    %v263 = vpop.f32.mrb[0].mxu0
    %v264 = vpop.f32.mrb[0].mxu0
    %v265 = vadd.f32 0.0, %v264
    %v266 = vpop.f32.mrb[0].mxu0
    %267 = vmatprep.mubr.bf16.mxu0 0
    %268 = vmatmul.mubr.bf16.gmra.mrb[0].mxu0 %v118
    %v269 = vpop.f32.mrb[0].mxu0
    %v270 = vadd.f32 0.0, %v269
    %v271 = vpop.f32.mrb[0].mxu0
    %v272 = vpop.f32.mrb[0].mxu0
    %v273 = vadd.f32 0.0, %v272
    %v274 = vpop.f32.mrb[0].mxu0
    %275 = vmatprep.mubr.bf16.mxu0 0
    %276 = vmatmul.mubr.bf16.gmra.mrb[0].mxu0 %v119
    %v277 = vpop.f32.mrb[0].mxu0
    %v278 = vadd.f32 0.0, %v277
    %v279 = vpop.f32.mrb[0].mxu0
    %v280 = vpop.f32.mrb[0].mxu0
    %v281 = vadd.f32 0.0, %v280
    %v282 = vpop.f32.mrb[0].mxu0
    %283 = vmatprep.mubr.bf16.mxu0 0
    %284 = vmatmul.mubr.bf16.gmra.mrb[0].mxu0 %v120
    %v285 = vpop.f32.mrb[0].mxu0
    %v286 = vadd.f32 0.0, %v285
    %v287 = vpop.f32.mrb[0].mxu0
    %v288 = vpop.f32.mrb[0].mxu0
    %v289 = vadd.f32 0.0, %v288
    %v290 = vpop.f32.mrb[0].mxu0
    %291 = vmatprep.mubr.bf16.mxu0 0
    %292 = vmatmul.mubr.bf16.gmra.mrb[0].mxu0 %v121
    %v293 = vpop.f32.mrb[0].mxu0
    %v294 = vadd.f32 0.0, %v293
    %v295 = vpop.f32.mrb[0].mxu0
    %v296 = vpop.f32.mrb[0].mxu0
    %v297 = vadd.f32 0.0, %v296
    %v298 = vpop.f32.mrb[0].mxu0
    %299 = vmatprep.mubr.bf16.mxu0 0
    %300 = vmatmul.mubr.bf16.gmra.mrb[0].mxu0 %v122
    %v301 = vpop.f32.mrb[0].mxu0
    %v302 = vadd.f32 0.0, %v301
    %v303 = vpop.f32.mrb[0].mxu0
    %v304 = vpop.f32.mrb[0].mxu0
    %v305 = vadd.f32 0.0, %v304
    %v306 = vpop.f32.mrb[0].mxu0
    %307 = vmatprep.mubr.bf16.mxu0 0
    %308 = vmatmul.mubr.bf16.gmra.mrb[0].mxu0 %v123
    %v309 = vpop.f32.mrb[0].mxu0
    %v310 = vadd.f32 0.0, %v309
    %v311 = vpop.f32.mrb[0].mxu0
    %v312 = vpop.f32.mrb[0].mxu0
    %v313 = vadd.f32 0.0, %v312
    %v314 = vpop.f32.mrb[0].mxu0
    %315 = vmatprep.mubr.bf16.mxu0 0
    %316 = vmatmul.mubr.bf16.gmra.mrb[0].mxu0 %v124
    %v317 = vpop.f32.mrb[0].mxu0
    %v318 = vadd.f32 0.0, %v317
    %v319 = vpop.f32.mrb[0].mxu0
    %v320 = vpop.f32.mrb[0].mxu0
    %v321 = vadd.f32 0.0, %v320
    %v322 = vpop.f32.mrb[0].mxu0
    %323 = vmatprep.mubr.bf16.mxu0 0
    %324 = vmatmul.mubr.bf16.gmra.mrb[0].mxu0 %v125
    %v325 = vpop.f32.mrb[0].mxu0
    %v326 = vadd.f32 0.0, %v325
    %v327 = vpop.f32.mrb[0].mxu0
    %v328 = vpop.f32.mrb[0].mxu0
    %v329 = vadd.f32 0.0, %v328
    %v330 = vpop.f32.mrb[0].mxu0
    %331 = vmatprep.mubr.bf16.mxu0 0
    %332 = vmatmul.mubr.bf16.gmra.mrb[0].mxu0 %v126
    %v333 = vpop.f32.mrb[0].mxu0
    %v334 = vadd.f32 0.0, %v333
    %v335 = vpop.f32.mrb[0].mxu0
    %v336 = vpop.f32.mrb[0].mxu0
    %v337 = vadd.f32 0.0, %v336
    %v338 = vpop.f32.mrb[0].mxu0
    %339 = vmatprep.mubr.bf16.mxu0 0
    %340 = vmatmul.mubr.bf16.gmra.mrb[0].mxu0 %v127
    %v341 = vpop.f32.mrb[0].mxu0
    %v342 = vadd.f32 0.0, %v341
    %v343 = vpop.f32.mrb[0].mxu0
    %v344 = vpop.f32.mrb[0].mxu0
    %v345 = vadd.f32 0.0, %v344
    %v346 = vpop.f32.mrb[0].mxu0
    %347 = vmatprep.mubr.bf16.mxu0 0
    %348 = vmatmul.mubr.bf16.gmra.mrb[0].mxu0 %v128
    %v349 = vpop.f32.mrb[0].mxu0
    %v350 = vadd.f32 0.0, %v349
    %v351 = vpop.f32.mrb[0].mxu0
    %v352 = vpop.f32.mrb[0].mxu0
    %v353 = vadd.f32 0.0, %v352
    %v354 = vpop.f32.mrb[0].mxu0
    %355 = vmatprep.mubr.bf16.mxu0 0
    %356 = vmatmul.mubr.bf16.gmra.mrb[0].mxu0 %v129
    %v357 = vpop.f32.mrb[0].mxu0
    %v358 = vadd.f32 0.0, %v357
    %v359 = vpop.f32.mrb[0].mxu0
    %v360 = vpop.f32.mrb[0].mxu0
    %v361 = vadd.f32 0.0, %v360
    %v362 = vpop.f32.mrb[0].mxu0
    %363 = vmatprep.mubr.bf16.mxu0 0
    %364 = vmatmul.mubr.bf16.gmra.mrb[0].mxu0 %v130
    %v365 = vpop.f32.mrb[0].mxu0
    %v366 = vadd.f32 0.0, %v365
    %v367 = vpop.f32.mrb[0].mxu0
    %v368 = vpop.f32.mrb[0].mxu0
    %v369 = vadd.f32 0.0, %v368
    %v370 = vpop.f32.mrb[0].mxu0
    %371 = vmatprep.mubr.bf16.mxu0 0
    %372 = vmatmul.mubr.bf16.gmra.mrb[0].mxu0 %v131
    %v373 = vpop.f32.mrb[0].mxu0
    %v374 = vadd.f32 0.0, %v373
    %v375 = vpop.f32.mrb[0].mxu0
    %v376 = vpop.f32.mrb[0].mxu0
    %v377 = vadd.f32 0.0, %v376
    %v378 = vpop.f32.mrb[0].mxu0
    %379 = vmatprep.mubr.bf16.mxu0 0
    %380 = vmatmul.mubr.bf16.gmra.mrb[0].mxu0 %v132
    %v381 = vpop.f32.mrb[0].mxu0
    %v382 = vadd.f32 0.0, %v381
    %v383 = vpop.f32.mrb[0].mxu0
    %v384 = vpop.f32.mrb[0].mxu0
    %v385 = vadd.f32 0.0, %v384
    %v386 = vpop.f32.mrb[0].mxu0
    %387 = vmatprep.mubr.bf16.mxu0 0
    %388 = vmatmul.mubr.bf16.gmra.mrb[0].mxu0 %v133
    %v389 = vpop.f32.mrb[0].mxu0
    %v390 = vadd.f32 0.0, %v389
    %v391 = vpop.f32.mrb[0].mxu0
    %v392 = vpop.f32.mrb[0].mxu0
    %v393 = vadd.f32 0.0, %v392
    %v394 = vpop.f32.mrb[0].mxu0
    %395 = vmatprep.mubr.bf16.mxu0 0
    %396 = vmatmul.mubr.bf16.gmra.mrb[0].mxu0 %v134
    %v397 = vpop.f32.mrb[0].mxu0
    %v398 = vadd.f32 0.0, %v397
    %v399 = vpop.f32.mrb[0].mxu0
    %v400 = vpop.f32.mrb[0].mxu0
    %v401 = vadd.f32 0.0, %v400
    %v402 = vpop.f32.mrb[0].mxu0
    %403 = vmatprep.mubr.bf16.mxu0 0
    %404 = vmatmul.mubr.bf16.gmra.mrb[0].mxu0 %v135
    %v405 = vpop.f32.mrb[0].mxu0
    %v406 = vadd.f32 0.0, %v405
    %v407 = vpop.f32.mrb[0].mxu0
    %v408 = vpop.f32.mrb[0].mxu0
    %v409 = vadd.f32 0.0, %v408
    %v410 = vpop.f32.mrb[0].mxu0
    %411 = vmatprep.mubr.bf16.mxu0 0
    %412 = vmatmul.mubr.bf16.gmra.mrb[0].mxu0 %v136
    %v413 = vpop.f32.mrb[0].mxu0
    %v414 = vadd.f32 0.0, %v413
    %v415 = vpop.f32.mrb[0].mxu0
    %v416 = vpop.f32.mrb[0].mxu0
    %v417 = vadd.f32 0.0, %v416
    %v418 = vpop.f32.mrb[0].mxu0
    %419 = vmatprep.mubr.bf16.mxu0 0
    %420 = vmatmul.mubr.bf16.gmra.mrb[0].mxu0 %v137
    %v421 = vpop.f32.mrb[0].mxu0
    %v422 = vadd.f32 0.0, %v421
    %v423 = vpop.f32.mrb[0].mxu0
    %v424 = vpop.f32.mrb[0].mxu0
    %v425 = vadd.f32 0.0, %v424
    %v426 = vpop.f32.mrb[0].mxu0
    %427 = vmatprep.mubr.bf16.mxu0 0
    %428 = vmatmul.mubr.bf16.gmra.mrb[0].mxu0 %v138
    %v429 = vpop.f32.mrb[0].mxu0
    %v430 = vadd.f32 0.0, %v429
    %v431 = vpop.f32.mrb[0].mxu0
    %v432 = vpop.f32.mrb[0].mxu0
    %v433 = vadd.f32 0.0, %v432
    %v434 = vpop.f32.mrb[0].mxu0
    %435 = vmatprep.mubr.bf16.mxu0 0
    %436 = vmatmul.mubr.bf16.gmra.mrb[0].mxu0 %v139
    %v437 = vpop.f32.mrb[0].mxu0
    %v438 = vadd.f32 0.0, %v437
    %v439 = vpop.f32.mrb[0].mxu0
    %v440 = vpop.f32.mrb[0].mxu0
    %v441 = vadd.f32 0.0, %v440
    %v442 = vpop.f32.mrb[0].mxu0
    %443 = vmatprep.mubr.bf16.mxu0 0
    %444 = vmatmul.mubr.bf16.gmra.mrb[0].mxu0 %v140
    %v445 = vpop.f32.mrb[0].mxu0
    %v446 = vadd.f32 0.0, %v445
    %v447 = vpop.f32.mrb[0].mxu0
    %v448 = vpop.f32.mrb[0].mxu0
    %v449 = vadd.f32 0.0, %v448
    %v450 = vpop.f32.mrb[0].mxu0
    %451 = vmatprep.mubr.bf16.mxu0 0
    %452 = vmatmul.mubr.bf16.gmra.mrb[0].mxu0 %v141
    %v453 = vpop.f32.mrb[0].mxu0
    %v454 = vadd.f32 0.0, %v453
    %v455 = vpop.f32.mrb[0].mxu0
    %v456 = vpop.f32.mrb[0].mxu0
    %v457 = vadd.f32 0.0, %v456
    %v458 = vpop.f32.mrb[0].mxu0
    %459 = vmatprep.mubr.bf16.mxu0 0
    %460 = vmatmul.mubr.bf16.gmra.mrb[0].mxu0 %v142
    %v461 = vpop.f32.mrb[0].mxu0
    %v462 = vadd.f32 0.0, %v461
    %v463 = vpop.f32.mrb[0].mxu0
    %v464 = vpop.f32.mrb[0].mxu0
    %v465 = vadd.f32 0.0, %v464
    %v466 = vpop.f32.mrb[0].mxu0
    %467 = vmatprep.mubr.bf16.mxu0 0
    %468 = vmatmul.mubr.bf16.gmra.mrb[0].mxu0 %v143
    %v469 = vpop.f32.mrb[0].mxu0
    %v470 = vadd.f32 0.0, %v469
    %v471 = vpop.f32.mrb[0].mxu0
    %v472 = vpop.f32.mrb[0].mxu0
    %v473 = vadd.f32 0.0, %v472
    %v474 = vpop.f32.mrb[0].mxu0
    %475 = vmatprep.mubr.bf16.mxu0 0
    %476 = vmatmul.mubr.bf16.gmra.mrb[0].mxu0 %v144
    %v477 = vpop.f32.mrb[0].mxu0
    %v478 = vadd.f32 0.0, %v477
    %v479 = vpop.f32.mrb[0].mxu0
    %v480 = vpop.f32.mrb[0].mxu0
    %v481 = vadd.f32 0.0, %v480
    %v482 = vpop.f32.mrb[0].mxu0
    %483 = vmatprep.mubr.bf16.mxu0 0
    %484 = vmatmul.mubr.bf16.gmra.mrb[0].mxu0 %v145
    %v485 = vpop.f32.mrb[0].mxu0
    %v486 = vadd.f32 0.0, %v485
    %v487 = vpop.f32.mrb[0].mxu0
    %v488 = vpop.f32.mrb[0].mxu0
    %v489 = vadd.f32 0.0, %v488
    %v490 = vpop.f32.mrb[0].mxu0
    %491 = vmatprep.mubr.bf16.mxu0 0
    %492 = vmatmul.mubr.bf16.gmra.mrb[0].mxu0 %v146
    %v493 = vpop.f32.mrb[0].mxu0
    %v494 = vadd.f32 0.0, %v493
    %v495 = vpop.f32.mrb[0].mxu0
    %v496 = vpop.f32.mrb[0].mxu0
    %v497 = vadd.f32 0.0, %v496
    %v498 = vpop.f32.mrb[0].mxu0
    %499 = vdwg.mxu0
    %v500 = vld [vmem:[%s2] sm:$0x1]
    %v501 = vld [vmem:[%s3] sm:$0x1]
    %vm502 = vcmask 261120
    %v503 = vsel %vm502, %v246, 0.0
    %v504 = vsel %vm502, %v249, 0.0
    %v505 = vadd.f32 %v503, %v504
    %v506 = vsel %vm502, %v254, 0.0
    %v507 = vadd.f32 %v505, %v506
    %v508 = vsel %vm502, %v257, 0.0
    %v509 = vadd.f32 %v507, %v508
    %v510 = vsel %vm502, %v262, 0.0
    %v511 = vadd.f32 %v509, %v510
    %v512 = vsel %vm502, %v265, 0.0
    %v513 = vadd.f32 %v511, %v512
    %v514 = vsel %vm502, %v270, 0.0
    %v515 = vadd.f32 %v513, %v514
    %v516 = vsel %vm502, %v273, 0.0
    %v517 = vadd.f32 %v515, %v516
    %v518 = vsel %vm502, %v278, 0.0
    %v519 = vadd.f32 %v517, %v518
    %v520 = vsel %vm502, %v281, 0.0
    %v521 = vadd.f32 %v519, %v520
    %v522 = vsel %vm502, %v286, 0.0
    %v523 = vadd.f32 %v521, %v522
    %v524 = vsel %vm502, %v289, 0.0
    %v525 = vadd.f32 %v523, %v524
    %v526 = vsel %vm502, %v294, 0.0
    %v527 = vadd.f32 %v525, %v526
    %v528 = vsel %vm502, %v297, 0.0
    %v529 = vadd.f32 %v527, %v528
    %v530 = vsel %vm502, %v302, 0.0
    %v531 = vadd.f32 %v529, %v530
    %v532 = vsel %vm502, %v305, 0.0
    %v533 = vadd.f32 %v531, %v532
    %v534 = vsel %vm502, %v310, 0.0
    %v535 = vadd.f32 %v533, %v534
    %v536 = vsel %vm502, %v313, 0.0
    %v537 = vadd.f32 %v535, %v536
    %v538 = vsel %vm502, %v318, 0.0
    %v539 = vadd.f32 %v537, %v538
    %v540 = vsel %vm502, %v321, 0.0
    %v541 = vadd.f32 %v539, %v540
    %v542 = vsel %vm502, %v326, 0.0
    %v543 = vadd.f32 %v541, %v542
    %v544 = vsel %vm502, %v329, 0.0
    %v545 = vadd.f32 %v543, %v544
    %v546 = vsel %vm502, %v334, 0.0
    %v547 = vadd.f32 %v545, %v546
    %v548 = vsel %vm502, %v337, 0.0
    %v549 = vadd.f32 %v547, %v548
    %v550 = vsel %vm502, %v342, 0.0
    %v551 = vadd.f32 %v549, %v550
    %v552 = vsel %vm502, %v345, 0.0
    %v553 = vadd.f32 %v551, %v552
    %v554 = vsel %vm502, %v350, 0.0
    %v555 = vadd.f32 %v553, %v554
    %v556 = vsel %vm502, %v353, 0.0
    %v557 = vadd.f32 %v555, %v556
    %v558 = vsel %vm502, %v358, 0.0
    %v559 = vadd.f32 %v557, %v558
    %v560 = vsel %vm502, %v361, 0.0
    %v561 = vadd.f32 %v559, %v560
    %v562 = vsel %vm502, %v366, 0.0
    %v563 = vadd.f32 %v561, %v562
    %v564 = vsel %vm502, %v369, 0.0
    %v565 = vadd.f32 %v563, %v564
    %v566 = vsel %vm502, %v374, 0.0
    %v567 = vadd.f32 %v565, %v566
    %v568 = vsel %vm502, %v377, 0.0
    %v569 = vadd.f32 %v567, %v568
    %v570 = vsel %vm502, %v382, 0.0
    %v571 = vadd.f32 %v569, %v570
    %v572 = vsel %vm502, %v385, 0.0
    %v573 = vadd.f32 %v571, %v572
    %v574 = vsel %vm502, %v390, 0.0
    %v575 = vadd.f32 %v573, %v574
    %v576 = vsel %vm502, %v393, 0.0
    %v577 = vadd.f32 %v575, %v576
    %v578 = vsel %vm502, %v398, 0.0
    %v579 = vadd.f32 %v577, %v578
    %v580 = vsel %vm502, %v401, 0.0
    %v581 = vadd.f32 %v579, %v580
    %v582 = vsel %vm502, %v406, 0.0
    %v583 = vadd.f32 %v581, %v582
    %v584 = vsel %vm502, %v409, 0.0
    %v585 = vadd.f32 %v583, %v584
    %v586 = vsel %vm502, %v414, 0.0
    %v587 = vadd.f32 %v585, %v586
    %v588 = vsel %vm502, %v417, 0.0
    %v589 = vadd.f32 %v587, %v588
    %v590 = vsel %vm502, %v422, 0.0
    %v591 = vadd.f32 %v589, %v590
    %v592 = vsel %vm502, %v425, 0.0
    %v593 = vadd.f32 %v591, %v592
    %v594 = vsel %vm502, %v430, 0.0
    %v595 = vadd.f32 %v593, %v594
    %v596 = vsel %vm502, %v433, 0.0
    %v597 = vadd.f32 %v595, %v596
    %v598 = vsel %vm502, %v438, 0.0
    %v599 = vadd.f32 %v597, %v598
    %v600 = vsel %vm502, %v441, 0.0
    %v601 = vadd.f32 %v599, %v600
    %v602 = vsel %vm502, %v446, 0.0
    %v603 = vadd.f32 %v601, %v602
    %v604 = vsel %vm502, %v449, 0.0
    %v605 = vadd.f32 %v603, %v604
    %v606 = vsel %vm502, %v454, 0.0
    %v607 = vadd.f32 %v605, %v606
    %v608 = vsel %vm502, %v457, 0.0
    %v609 = vadd.f32 %v607, %v608
    %v610 = vsel %vm502, %v462, 0.0
    %v611 = vadd.f32 %v609, %v610
    %v612 = vsel %vm502, %v465, 0.0
    %v613 = vadd.f32 %v611, %v612
    %v614 = vsel %vm502, %v470, 0.0
    %v615 = vadd.f32 %v613, %v614
    %v616 = vsel %vm502, %v473, 0.0
    %v617 = vadd.f32 %v615, %v616
    %v618 = vsel %vm502, %v478, 0.0
    %v619 = vadd.f32 %v617, %v618
    %v620 = vsel %vm502, %v481, 0.0
    %v621 = vadd.f32 %v619, %v620
    %v622 = vsel %vm502, %v486, 0.0
    %v623 = vadd.f32 %v621, %v622
    %v624 = vsel %vm502, %v489, 0.0
    %v625 = vadd.f32 %v623, %v624
    %v626 = vsel %vm502, %v494, 0.0
    %v627 = vadd.f32 %v625, %v626
    %v628 = vsel %vm502, %v497, 0.0
    %v629 = vadd.f32 %v627, %v628
    %v630 = vrot.slane %v629, 4
    %v631 = vadd.f32 %v629, %v630
    %v632 = vrot.slane %v631, 2
    %v633 = vadd.f32 %v631, %v632
    %v634 = vrot.slane %v633, 1
    %v635 = vadd.f32 %v633, %v634
    %v636 = vmul.f32 %v246, %v246
    %v637 = vmul.f32 %v249, %v249
    %v638 = vmul.f32 %v254, %v254
    %v639 = vmul.f32 %v257, %v257
    %v640 = vmul.f32 %v262, %v262
    %v641 = vmul.f32 %v265, %v265
    %v642 = vmul.f32 %v270, %v270
    %v643 = vmul.f32 %v273, %v273
    %v644 = vmul.f32 %v278, %v278
    %v645 = vmul.f32 %v281, %v281
    %v646 = vmul.f32 %v286, %v286
    %v647 = vmul.f32 %v289, %v289
    %v648 = vmul.f32 %v294, %v294
    %v649 = vmul.f32 %v297, %v297
    %v650 = vmul.f32 %v302, %v302
    %v651 = vmul.f32 %v305, %v305
    %v652 = vmul.f32 %v310, %v310
    %v653 = vmul.f32 %v313, %v313
    %v654 = vmul.f32 %v318, %v318
    %v655 = vmul.f32 %v321, %v321
    %v656 = vmul.f32 %v326, %v326
    %v657 = vmul.f32 %v329, %v329
    %v658 = vmul.f32 %v334, %v334
    %v659 = vmul.f32 %v337, %v337
    %v660 = vmul.f32 %v342, %v342
    %v661 = vmul.f32 %v345, %v345
    %v662 = vmul.f32 %v350, %v350
    %v663 = vmul.f32 %v353, %v353
    %v664 = vmul.f32 %v358, %v358
    %v665 = vmul.f32 %v361, %v361
    %v666 = vmul.f32 %v366, %v366
    %v667 = vmul.f32 %v369, %v369
    %v668 = vmul.f32 %v374, %v374
    %v669 = vmul.f32 %v377, %v377
    %v670 = vmul.f32 %v382, %v382
    %v671 = vmul.f32 %v385, %v385
    %v672 = vmul.f32 %v390, %v390
    %v673 = vmul.f32 %v393, %v393
    %v674 = vmul.f32 %v398, %v398
    %v675 = vmul.f32 %v401, %v401
    %v676 = vmul.f32 %v406, %v406
    %v677 = vmul.f32 %v409, %v409
    %v678 = vmul.f32 %v414, %v414
    %v679 = vmul.f32 %v417, %v417
    %v680 = vmul.f32 %v422, %v422
    %v681 = vmul.f32 %v425, %v425
    %v682 = vmul.f32 %v430, %v430
    %v683 = vmul.f32 %v433, %v433
    %v684 = vmul.f32 %v438, %v438
    %v685 = vmul.f32 %v441, %v441
    %v686 = vmul.f32 %v446, %v446
    %v687 = vmul.f32 %v449, %v449
    %v688 = vmul.f32 %v454, %v454
    %v689 = vmul.f32 %v457, %v457
    %v690 = vmul.f32 %v462, %v462
    %v691 = vmul.f32 %v465, %v465
    %v692 = vmul.f32 %v470, %v470
    %v693 = vmul.f32 %v473, %v473
    %v694 = vmul.f32 %v478, %v478
    %v695 = vmul.f32 %v481, %v481
    %v696 = vmul.f32 %v486, %v486
    %v697 = vmul.f32 %v489, %v489
    %v698 = vmul.f32 %v494, %v494
    %v699 = vmul.f32 %v497, %v497
    %v700 = vsel %vm502, %v636, 0.0
    %v701 = vsel %vm502, %v637, 0.0
    %v702 = vadd.f32 %v700, %v701
    %v703 = vsel %vm502, %v638, 0.0
    %v704 = vadd.f32 %v702, %v703
    %v705 = vsel %vm502, %v639, 0.0
    %v706 = vadd.f32 %v704, %v705
    %v707 = vsel %vm502, %v640, 0.0
    %v708 = vadd.f32 %v706, %v707
    %v709 = vsel %vm502, %v641, 0.0
    %v710 = vadd.f32 %v708, %v709
    %v711 = vsel %vm502, %v642, 0.0
    %v712 = vadd.f32 %v710, %v711
    %v713 = vsel %vm502, %v643, 0.0
    %v714 = vadd.f32 %v712, %v713
    %v715 = vsel %vm502, %v644, 0.0
    %v716 = vadd.f32 %v714, %v715
    %v717 = vsel %vm502, %v645, 0.0
    %v718 = vadd.f32 %v716, %v717
    %v719 = vsel %vm502, %v646, 0.0
    %v720 = vadd.f32 %v718, %v719
    %v721 = vsel %vm502, %v647, 0.0
    %v722 = vadd.f32 %v720, %v721
    %v723 = vsel %vm502, %v648, 0.0
    %v724 = vadd.f32 %v722, %v723
    %v725 = vsel %vm502, %v649, 0.0
    %v726 = vadd.f32 %v724, %v725
    %v727 = vsel %vm502, %v650, 0.0
    %v728 = vadd.f32 %v726, %v727
    %v729 = vsel %vm502, %v651, 0.0
    %v730 = vadd.f32 %v728, %v729
    %v731 = vsel %vm502, %v652, 0.0
    %v732 = vadd.f32 %v730, %v731
    %v733 = vsel %vm502, %v653, 0.0
    %v734 = vadd.f32 %v732, %v733
    %v735 = vsel %vm502, %v654, 0.0
    %v736 = vadd.f32 %v734, %v735
    %v737 = vsel %vm502, %v655, 0.0
    %v738 = vadd.f32 %v736, %v737
    %v739 = vsel %vm502, %v656, 0.0
    %v740 = vadd.f32 %v738, %v739
    %v741 = vsel %vm502, %v657, 0.0
    %v742 = vadd.f32 %v740, %v741
    %v743 = vsel %vm502, %v658, 0.0
    %v744 = vadd.f32 %v742, %v743
    %v745 = vsel %vm502, %v659, 0.0
    %v746 = vadd.f32 %v744, %v745
    %v747 = vsel %vm502, %v660, 0.0
    %v748 = vadd.f32 %v746, %v747
    %v749 = vsel %vm502, %v661, 0.0
    %v750 = vadd.f32 %v748, %v749
    %v751 = vsel %vm502, %v662, 0.0
    %v752 = vadd.f32 %v750, %v751
    %v753 = vsel %vm502, %v663, 0.0
    %v754 = vadd.f32 %v752, %v753
    %v755 = vsel %vm502, %v664, 0.0
    %v756 = vadd.f32 %v754, %v755
    %v757 = vsel %vm502, %v665, 0.0
    %v758 = vadd.f32 %v756, %v757
    %v759 = vsel %vm502, %v666, 0.0
    %v760 = vadd.f32 %v758, %v759
    %v761 = vsel %vm502, %v667, 0.0
    %v762 = vadd.f32 %v760, %v761
    %v763 = vsel %vm502, %v668, 0.0
    %v764 = vadd.f32 %v762, %v763
    %v765 = vsel %vm502, %v669, 0.0
    %v766 = vadd.f32 %v764, %v765
    %v767 = vsel %vm502, %v670, 0.0
    %v768 = vadd.f32 %v766, %v767
    %v769 = vsel %vm502, %v671, 0.0
    %v770 = vadd.f32 %v768, %v769
    %v771 = vsel %vm502, %v672, 0.0
    %v772 = vadd.f32 %v770, %v771
    %v773 = vsel %vm502, %v673, 0.0
    %v774 = vadd.f32 %v772, %v773
    %v775 = vsel %vm502, %v674, 0.0
    %v776 = vadd.f32 %v774, %v775
    %v777 = vsel %vm502, %v675, 0.0
    %v778 = vadd.f32 %v776, %v777
    %v779 = vsel %vm502, %v676, 0.0
    %v780 = vadd.f32 %v778, %v779
    %v781 = vsel %vm502, %v677, 0.0
    %v782 = vadd.f32 %v780, %v781
    %v783 = vsel %vm502, %v678, 0.0
    %v784 = vadd.f32 %v782, %v783
    %v785 = vsel %vm502, %v679, 0.0
    %v786 = vadd.f32 %v784, %v785
    %v787 = vsel %vm502, %v680, 0.0
    %v788 = vadd.f32 %v786, %v787
    %v789 = vsel %vm502, %v681, 0.0
    %v790 = vadd.f32 %v788, %v789
    %v791 = vsel %vm502, %v682, 0.0
    %v792 = vadd.f32 %v790, %v791
    %v793 = vsel %vm502, %v683, 0.0
    %v794 = vadd.f32 %v792, %v793
    %v795 = vsel %vm502, %v684, 0.0
    %v796 = vadd.f32 %v794, %v795
    %v797 = vsel %vm502, %v685, 0.0
    %v798 = vadd.f32 %v796, %v797
    %v799 = vsel %vm502, %v686, 0.0
    %v800 = vadd.f32 %v798, %v799
    %v801 = vsel %vm502, %v687, 0.0
    %v802 = vadd.f32 %v800, %v801
    %v803 = vsel %vm502, %v688, 0.0
    %v804 = vadd.f32 %v802, %v803
    %v805 = vsel %vm502, %v689, 0.0
    %v806 = vadd.f32 %v804, %v805
    %v807 = vsel %vm502, %v690, 0.0
    %v808 = vadd.f32 %v806, %v807
    %v809 = vsel %vm502, %v691, 0.0
    %v810 = vadd.f32 %v808, %v809
    %v811 = vsel %vm502, %v692, 0.0
    %v812 = vadd.f32 %v810, %v811
    %v813 = vsel %vm502, %v693, 0.0
    %v814 = vadd.f32 %v812, %v813
    %v815 = vsel %vm502, %v694, 0.0
    %v816 = vadd.f32 %v814, %v815
    %v817 = vsel %vm502, %v695, 0.0
    %v818 = vadd.f32 %v816, %v817
    %v819 = vsel %vm502, %v696, 0.0
    %v820 = vadd.f32 %v818, %v819
    %v821 = vsel %vm502, %v697, 0.0
    %v822 = vadd.f32 %v820, %v821
    %v823 = vsel %vm502, %v698, 0.0
    %v824 = vadd.f32 %v822, %v823
    %v825 = vsel %vm502, %v699, 0.0
    %v826 = vadd.f32 %v824, %v825
    %v827 = vrot.slane %v826, 4
    %v828 = vadd.f32 %v826, %v827
    %v829 = vrot.slane %v828, 2
    %v830 = vadd.f32 %v828, %v829
    %v831 = vrot.slane %v830, 1
    %v832 = vadd.f32 %v830, %v831
    %v833 = vmul.f32 %v635, 0.001953125
    %v834 = vmul.f32 %v832, 0.001953125
    %v835 = vmul.f32 %v833, %v833
    %v836 = vsub.f32 %v834, %v835
    %v837 = vadd.f32 %v836, 1e-05
    %v838 = vrsqrt.pop %v837
    %v839 = vmul.f32 %v500, %v838
    %v840 = vsub.f32 %v246, %v833
    %v841 = vsub.f32 %v249, %v833
    %v842 = vsub.f32 %v254, %v833
    %v843 = vsub.f32 %v257, %v833
    %v844 = vsub.f32 %v262, %v833
    %v845 = vsub.f32 %v265, %v833
    %v846 = vsub.f32 %v270, %v833
    %v847 = vsub.f32 %v273, %v833
    %v848 = vsub.f32 %v278, %v833
    %v849 = vsub.f32 %v281, %v833
    %v850 = vsub.f32 %v286, %v833
    %v851 = vsub.f32 %v289, %v833
    %v852 = vsub.f32 %v294, %v833
    %v853 = vsub.f32 %v297, %v833
    %v854 = vsub.f32 %v302, %v833
    %v855 = vsub.f32 %v305, %v833
    %v856 = vsub.f32 %v310, %v833
    %v857 = vsub.f32 %v313, %v833
    %v858 = vsub.f32 %v318, %v833
    %v859 = vsub.f32 %v321, %v833
    %v860 = vsub.f32 %v326, %v833
    %v861 = vsub.f32 %v329, %v833
    %v862 = vsub.f32 %v334, %v833
    %v863 = vsub.f32 %v337, %v833
    %v864 = vsub.f32 %v342, %v833
    %v865 = vsub.f32 %v345, %v833
    %v866 = vsub.f32 %v350, %v833
    %v867 = vsub.f32 %v353, %v833
    %v868 = vsub.f32 %v358, %v833
    %v869 = vsub.f32 %v361, %v833
    %v870 = vsub.f32 %v366, %v833
    %v871 = vsub.f32 %v369, %v833
    %v872 = vsub.f32 %v374, %v833
    %v873 = vsub.f32 %v377, %v833
    %v874 = vsub.f32 %v382, %v833
    %v875 = vsub.f32 %v385, %v833
    %v876 = vsub.f32 %v390, %v833
    %v877 = vsub.f32 %v393, %v833
    %v878 = vsub.f32 %v398, %v833
    %v879 = vsub.f32 %v401, %v833
    %v880 = vsub.f32 %v406, %v833
    %v881 = vsub.f32 %v409, %v833
    %v882 = vsub.f32 %v414, %v833
    %v883 = vsub.f32 %v417, %v833
    %v884 = vsub.f32 %v422, %v833
    %v885 = vsub.f32 %v425, %v833
    %v886 = vsub.f32 %v430, %v833
    %v887 = vsub.f32 %v433, %v833
    %v888 = vsub.f32 %v438, %v833
    %v889 = vsub.f32 %v441, %v833
    %v890 = vsub.f32 %v446, %v833
    %v891 = vsub.f32 %v449, %v833
    %v892 = vsub.f32 %v454, %v833
    %v893 = vsub.f32 %v457, %v833
    %v894 = vsub.f32 %v462, %v833
    %v895 = vsub.f32 %v465, %v833
    %v896 = vsub.f32 %v470, %v833
    %v897 = vsub.f32 %v473, %v833
    %v898 = vsub.f32 %v478, %v833
    %v899 = vsub.f32 %v481, %v833
    %v900 = vsub.f32 %v486, %v833
    %v901 = vsub.f32 %v489, %v833
    %v902 = vsub.f32 %v494, %v833
    %v903 = vsub.f32 %v497, %v833
    %v905 = vlaneseq
    %v906 = vshrl.u32 %v905, 7
    %v907 = vsub.s32 0, %v906
    %v908 = vrot.slane %v839, %v907
    %v910 = vmul.f32 %v840, %v908
    %v911 = vmul.f32 %v841, %v908
    %v912 = vmul.f32 %v842, %v908
    %v913 = vmul.f32 %v843, %v908
    %v914 = vmul.f32 %v844, %v908
    %v915 = vmul.f32 %v845, %v908
    %v916 = vmul.f32 %v846, %v908
    %v917 = vmul.f32 %v847, %v908
    %v918 = vmul.f32 %v848, %v908
    %v919 = vmul.f32 %v849, %v908
    %v920 = vmul.f32 %v850, %v908
    %v921 = vmul.f32 %v851, %v908
    %v922 = vmul.f32 %v852, %v908
    %v923 = vmul.f32 %v853, %v908
    %v924 = vmul.f32 %v854, %v908
    %v925 = vmul.f32 %v855, %v908
    %v926 = vmul.f32 %v856, %v908
    %v927 = vmul.f32 %v857, %v908
    %v928 = vmul.f32 %v858, %v908
    %v929 = vmul.f32 %v859, %v908
    %v930 = vmul.f32 %v860, %v908
    %v931 = vmul.f32 %v861, %v908
    %v932 = vmul.f32 %v862, %v908
    %v933 = vmul.f32 %v863, %v908
    %v934 = vmul.f32 %v864, %v908
    %v935 = vmul.f32 %v865, %v908
    %v936 = vmul.f32 %v866, %v908
    %v937 = vmul.f32 %v867, %v908
    %v938 = vmul.f32 %v868, %v908
    %v939 = vmul.f32 %v869, %v908
    %v940 = vmul.f32 %v870, %v908
    %v941 = vmul.f32 %v871, %v908
    %v942 = vmul.f32 %v872, %v908
    %v943 = vmul.f32 %v873, %v908
    %v944 = vmul.f32 %v874, %v908
    %v945 = vmul.f32 %v875, %v908
    %v946 = vmul.f32 %v876, %v908
    %v947 = vmul.f32 %v877, %v908
    %v948 = vmul.f32 %v878, %v908
    %v949 = vmul.f32 %v879, %v908
    %v950 = vmul.f32 %v880, %v908
    %v951 = vmul.f32 %v881, %v908
    %v952 = vmul.f32 %v882, %v908
    %v953 = vmul.f32 %v883, %v908
    %v954 = vmul.f32 %v884, %v908
    %v955 = vmul.f32 %v885, %v908
    %v956 = vmul.f32 %v886, %v908
    %v957 = vmul.f32 %v887, %v908
    %v958 = vmul.f32 %v888, %v908
    %v959 = vmul.f32 %v889, %v908
    %v960 = vmul.f32 %v890, %v908
    %v961 = vmul.f32 %v891, %v908
    %v962 = vmul.f32 %v892, %v908
    %v963 = vmul.f32 %v893, %v908
    %v964 = vmul.f32 %v894, %v908
    %v965 = vmul.f32 %v895, %v908
    %v966 = vmul.f32 %v896, %v908
    %v967 = vmul.f32 %v897, %v908
    %v968 = vmul.f32 %v898, %v908
    %v969 = vmul.f32 %v899, %v908
    %v970 = vmul.f32 %v900, %v908
    %v971 = vmul.f32 %v901, %v908
    %v972 = vmul.f32 %v902, %v908
    %v973 = vmul.f32 %v903, %v908
    %v975 = vlaneseq
    %v976 = vshrl.u32 %v975, 7
    %v977 = vsub.s32 0, %v976
    %v978 = vrot.slane %v501, %v977
    %v980 = vadd.f32 %v910, %v978
    %v981 = vadd.f32 %v911, %v978
    %v982 = vadd.f32 %v912, %v978
    %v983 = vadd.f32 %v913, %v978
    %v984 = vadd.f32 %v914, %v978
    %v985 = vadd.f32 %v915, %v978
    %v986 = vadd.f32 %v916, %v978
    %v987 = vadd.f32 %v917, %v978
    %v988 = vadd.f32 %v918, %v978
    %v989 = vadd.f32 %v919, %v978
    %v990 = vadd.f32 %v920, %v978
    %v991 = vadd.f32 %v921, %v978
    %v992 = vadd.f32 %v922, %v978
    %v993 = vadd.f32 %v923, %v978
    %v994 = vadd.f32 %v924, %v978
    %v995 = vadd.f32 %v925, %v978
    %v996 = vadd.f32 %v926, %v978
    %v997 = vadd.f32 %v927, %v978
    %v998 = vadd.f32 %v928, %v978
    %v999 = vadd.f32 %v929, %v978
    %v1000 = vadd.f32 %v930, %v978
    %v1001 = vadd.f32 %v931, %v978
    %v1002 = vadd.f32 %v932, %v978
    %v1003 = vadd.f32 %v933, %v978
    %v1004 = vadd.f32 %v934, %v978
    %v1005 = vadd.f32 %v935, %v978
    %v1006 = vadd.f32 %v936, %v978
    %v1007 = vadd.f32 %v937, %v978
    %v1008 = vadd.f32 %v938, %v978
    %v1009 = vadd.f32 %v939, %v978
    %v1010 = vadd.f32 %v940, %v978
    %v1011 = vadd.f32 %v941, %v978
    %v1012 = vadd.f32 %v942, %v978
    %v1013 = vadd.f32 %v943, %v978
    %v1014 = vadd.f32 %v944, %v978
    %v1015 = vadd.f32 %v945, %v978
    %v1016 = vadd.f32 %v946, %v978
    %v1017 = vadd.f32 %v947, %v978
    %v1018 = vadd.f32 %v948, %v978
    %v1019 = vadd.f32 %v949, %v978
    %v1020 = vadd.f32 %v950, %v978
    %v1021 = vadd.f32 %v951, %v978
    %v1022 = vadd.f32 %v952, %v978
    %v1023 = vadd.f32 %v953, %v978
    %v1024 = vadd.f32 %v954, %v978
    %v1025 = vadd.f32 %v955, %v978
    %v1026 = vadd.f32 %v956, %v978
    %v1027 = vadd.f32 %v957, %v978
    %v1028 = vadd.f32 %v958, %v978
    %v1029 = vadd.f32 %v959, %v978
    %v1030 = vadd.f32 %v960, %v978
    %v1031 = vadd.f32 %v961, %v978
    %v1032 = vadd.f32 %v962, %v978
    %v1033 = vadd.f32 %v963, %v978
    %v1034 = vadd.f32 %v964, %v978
    %v1035 = vadd.f32 %v965, %v978
    %v1036 = vadd.f32 %v966, %v978
    %v1037 = vadd.f32 %v967, %v978
    %v1038 = vadd.f32 %v968, %v978
    %v1039 = vadd.f32 %v969, %v978
    %v1040 = vadd.f32 %v970, %v978
    %v1041 = vadd.f32 %v971, %v978
    %v1042 = vadd.f32 %v972, %v978
    %v1043 = vadd.f32 %v973, %v978
    %v1044 = vmax.f32 %v980, 0.0
    %v1045 = vmax.f32 %v981, 0.0
    %v1046 = vmax.f32 %v982, 0.0
    %v1047 = vmax.f32 %v983, 0.0
    %v1048 = vmax.f32 %v984, 0.0
    %v1049 = vmax.f32 %v985, 0.0
    %v1050 = vmax.f32 %v986, 0.0
    %v1051 = vmax.f32 %v987, 0.0
    %v1052 = vmax.f32 %v988, 0.0
    %v1053 = vmax.f32 %v989, 0.0
    %v1054 = vmax.f32 %v990, 0.0
    %v1055 = vmax.f32 %v991, 0.0
    %v1056 = vmax.f32 %v992, 0.0
    %v1057 = vmax.f32 %v993, 0.0
    %v1058 = vmax.f32 %v994, 0.0
    %v1059 = vmax.f32 %v995, 0.0
    %v1060 = vmax.f32 %v996, 0.0
    %v1061 = vmax.f32 %v997, 0.0
    %v1062 = vmax.f32 %v998, 0.0
    %v1063 = vmax.f32 %v999, 0.0
    %v1064 = vmax.f32 %v1000, 0.0
    %v1065 = vmax.f32 %v1001, 0.0
    %v1066 = vmax.f32 %v1002, 0.0
    %v1067 = vmax.f32 %v1003, 0.0
    %v1068 = vmax.f32 %v1004, 0.0
    %v1069 = vmax.f32 %v1005, 0.0
    %v1070 = vmax.f32 %v1006, 0.0
    %v1071 = vmax.f32 %v1007, 0.0
    %v1072 = vmax.f32 %v1008, 0.0
    %v1073 = vmax.f32 %v1009, 0.0
    %v1074 = vmax.f32 %v1010, 0.0
    %v1075 = vmax.f32 %v1011, 0.0
    %v1076 = vmax.f32 %v1012, 0.0
    %v1077 = vmax.f32 %v1013, 0.0
    %v1078 = vmax.f32 %v1014, 0.0
    %v1079 = vmax.f32 %v1015, 0.0
    %v1080 = vmax.f32 %v1016, 0.0
    %v1081 = vmax.f32 %v1017, 0.0
    %v1082 = vmax.f32 %v1018, 0.0
    %v1083 = vmax.f32 %v1019, 0.0
    %v1084 = vmax.f32 %v1020, 0.0
    %v1085 = vmax.f32 %v1021, 0.0
    %v1086 = vmax.f32 %v1022, 0.0
    %v1087 = vmax.f32 %v1023, 0.0
    %v1088 = vmax.f32 %v1024, 0.0
    %v1089 = vmax.f32 %v1025, 0.0
    %v1090 = vmax.f32 %v1026, 0.0
    %v1091 = vmax.f32 %v1027, 0.0
    %v1092 = vmax.f32 %v1028, 0.0
    %v1093 = vmax.f32 %v1029, 0.0
    %v1094 = vmax.f32 %v1030, 0.0
    %v1095 = vmax.f32 %v1031, 0.0
    %v1096 = vmax.f32 %v1032, 0.0
    %v1097 = vmax.f32 %v1033, 0.0
    %v1098 = vmax.f32 %v1034, 0.0
    %v1099 = vmax.f32 %v1035, 0.0
    %v1100 = vmax.f32 %v1036, 0.0
    %v1101 = vmax.f32 %v1037, 0.0
    %v1102 = vmax.f32 %v1038, 0.0
    %v1103 = vmax.f32 %v1039, 0.0
    %v1104 = vmax.f32 %v1040, 0.0
    %v1105 = vmax.f32 %v1041, 0.0
    %v1106 = vmax.f32 %v1042, 0.0
    %v1107 = vmax.f32 %v1043, 0.0
    %1108 = vst.msk [vmem:[#allocation2] sm:$0xff] %vm502, 0.0
    %1109 = vst.msk [vmem:[#allocation2 + $0x8] sm:$0xff] %vm502, 0.0
    %vm1110 = vcmask 254976
    %1111 = vst.msk [vmem:[#allocation2 + $0x10] sm:$0x3] %vm1110, 0.0
    %1112 = vst.msk [vmem:[#allocation2 + $0x18] sm:$0xff] %vm502, 0.0
    %1113 = vst.msk [vmem:[#allocation2 + $0x20] sm:$0xff] %vm502, 0.0
    %1114 = vst.msk [vmem:[#allocation2 + $0x28] sm:$0x3] %vm1110, 0.0
    %1115 = vst.msk [vmem:[#allocation2 + $0x30] sm:$0xff] %vm502, 0.0
    %1116 = vst.msk [vmem:[#allocation2 + $0x38] sm:$0xff] %vm502, 0.0
    %1117 = vst.msk [vmem:[#allocation2 + $0x40] sm:$0x3] %vm1110, 0.0
    %1118 = vst.msk [vmem:[#allocation2 + $0x48] sm:$0xff] %vm502, 0.0
    %1119 = vst.msk [vmem:[#allocation2 + $0x50] sm:$0xff] %vm502, 0.0
    %1120 = vst.msk [vmem:[#allocation2 + $0x58] sm:$0x3] %vm1110, 0.0
    %1121 = vst.msk [vmem:[#allocation2 + $0x60] sm:$0xff] %vm502, 0.0
    %1122 = vst.msk [vmem:[#allocation2 + $0x68] sm:$0xff] %vm502, 0.0
    %1123 = vst.msk [vmem:[#allocation2 + $0x70] sm:$0x3] %vm1110, 0.0
    %1124 = vst.msk [vmem:[#allocation2 + $0x78] sm:$0xff] %vm502, 0.0
    %1125 = vst.msk [vmem:[#allocation2 + $0x80] sm:$0xff] %vm502, 0.0
    %1126 = vst.msk [vmem:[#allocation2 + $0x88] sm:$0x3] %vm1110, 0.0
    %1127 = vst.msk [vmem:[#allocation2 + $0x90] sm:$0xff] %vm502, 0.0
    %1128 = vst.msk [vmem:[#allocation2 + $0x98] sm:$0xff] %vm502, 0.0
    %1129 = vst.msk [vmem:[#allocation2 + $0xa0] sm:$0x3] %vm1110, 0.0
    %1130 = vst.msk [vmem:[#allocation2 + $0xa8] sm:$0xff] %vm502, 0.0
    %1131 = vst.msk [vmem:[#allocation2 + $0xb0] sm:$0xff] %vm502, 0.0
    %1132 = vst.msk [vmem:[#allocation2 + $0xb8] sm:$0x3] %vm1110, 0.0
    %1133 = vst.msk [vmem:[#allocation2 + $0xc0] sm:$0xff] %vm502, 0.0
    %1134 = vst.msk [vmem:[#allocation2 + $0xc8] sm:$0xff] %vm502, 0.0
    %1135 = vst.msk [vmem:[#allocation2 + $0xd0] sm:$0x3] %vm1110, 0.0
    %1136 = vst.msk [vmem:[#allocation2 + $0xd8] sm:$0xff] %vm502, 0.0
    %1137 = vst.msk [vmem:[#allocation2 + $0xe0] sm:$0xff] %vm502, 0.0
    %1138 = vst.msk [vmem:[#allocation2 + $0xe8] sm:$0x3] %vm1110, 0.0
    %1139 = vst.msk [vmem:[#allocation2 + $0xf0] sm:$0xff] %vm502, 0.0
    %1140 = vst.msk [vmem:[#allocation2 + $0xf8] sm:$0xff] %vm502, 0.0
    %1141 = vst.msk [vmem:[#allocation2 + $0x100] sm:$0x3] %vm1110, 0.0
    %1142 = vst.msk [vmem:[#allocation2 + $0x108] sm:$0xff] %vm502, 0.0
    %1143 = vst.msk [vmem:[#allocation2 + $0x110] sm:$0xff] %vm502, 0.0
    %1144 = vst.msk [vmem:[#allocation2 + $0x118] sm:$0x3] %vm1110, 0.0
    %1145 = vst.msk [vmem:[#allocation2 + $0x120] sm:$0xff] %vm502, 0.0
    %1146 = vst.msk [vmem:[#allocation2 + $0x128] sm:$0xff] %vm502, 0.0
    %1147 = vst.msk [vmem:[#allocation2 + $0x130] sm:$0x3] %vm1110, 0.0
    %1148 = vst.msk [vmem:[#allocation2 + $0x138] sm:$0xff] %vm502, 0.0
    %1149 = vst.msk [vmem:[#allocation2 + $0x140] sm:$0xff] %vm502, 0.0
    %1150 = vst.msk [vmem:[#allocation2 + $0x148] sm:$0x3] %vm1110, 0.0
    %1151 = vst.msk [vmem:[#allocation2 + $0x150] sm:$0xff] %vm502, 0.0
    %1152 = vst.msk [vmem:[#allocation2 + $0x158] sm:$0xff] %vm502, 0.0
    %1153 = vst.msk [vmem:[#allocation2 + $0x160] sm:$0x3] %vm1110, 0.0
    %1154 = vst.msk [vmem:[#allocation2 + $0x168] sm:$0xff] %vm502, 0.0
    %1155 = vst.msk [vmem:[#allocation2 + $0x170] sm:$0xff] %vm502, 0.0
    %1156 = vst.msk [vmem:[#allocation2 + $0x178] sm:$0x3] %vm1110, 0.0
    %1157 = vst.msk [vmem:[#allocation2 + $0x180] sm:$0xff] %vm502, 0.0
    %1158 = vst.msk [vmem:[#allocation2 + $0x188] sm:$0xff] %vm502, 0.0
    %1159 = vst.msk [vmem:[#allocation2 + $0x190] sm:$0x3] %vm1110, 0.0
    %1160 = vst.msk [vmem:[#allocation2 + $0x198] sm:$0xff] %vm502, 0.0
    %1161 = vst.msk [vmem:[#allocation2 + $0x1a0] sm:$0xff] %vm502, 0.0
    %1162 = vst.msk [vmem:[#allocation2 + $0x1a8] sm:$0x3] %vm1110, 0.0
    %1163 = vst.msk [vmem:[#allocation2 + $0x1b0] sm:$0xff] %vm502, 0.0
    %1164 = vst.msk [vmem:[#allocation2 + $0x1b8] sm:$0xff] %vm502, 0.0
    %1165 = vst.msk [vmem:[#allocation2 + $0x1c0] sm:$0x3] %vm1110, 0.0
    %1166 = vst.msk [vmem:[#allocation2 + $0x1c8] sm:$0xff] %vm502, 0.0
    %1167 = vst.msk [vmem:[#allocation2 + $0x1d0] sm:$0xff] %vm502, 0.0
    %1168 = vst.msk [vmem:[#allocation2 + $0x1d8] sm:$0x3] %vm1110, 0.0
    %1169 = vst.msk [vmem:[#allocation2 + $0x1e0] sm:$0xff] %vm502, 0.0
    %1170 = vst.msk [vmem:[#allocation2 + $0x1e8] sm:$0xff] %vm502, 0.0
    %1171 = vst.msk [vmem:[#allocation2 + $0x1f0] sm:$0x3] %vm1110, 0.0
    %1172 = vst.msk [vmem:[#allocation2 + $0x1f8] sm:$0xff] %vm502, 0.0
    %1173 = vst.msk [vmem:[#allocation2 + $0x200] sm:$0xff] %vm502, 0.0
    %1174 = vst.msk [vmem:[#allocation2 + $0x208] sm:$0x3] %vm1110, 0.0
    %1175 = vst.msk [vmem:[#allocation2 + $0x210] sm:$0xff] %vm502, 0.0
    %1176 = vst.msk [vmem:[#allocation2 + $0x218] sm:$0xff] %vm502, 0.0
    %1177 = vst.msk [vmem:[#allocation2 + $0x220] sm:$0x3] %vm1110, 0.0
    %1178 = vst.msk [vmem:[#allocation2 + $0x228] sm:$0xff] %vm502, 0.0
    %1179 = vst.msk [vmem:[#allocation2 + $0x230] sm:$0xff] %vm502, 0.0
    %1180 = vst.msk [vmem:[#allocation2 + $0x238] sm:$0x3] %vm1110, 0.0
    %1181 = vst.msk [vmem:[#allocation2 + $0x240] sm:$0xff] %vm502, 0.0
    %1182 = vst.msk [vmem:[#allocation2 + $0x248] sm:$0xff] %vm502, 0.0
    %1183 = vst.msk [vmem:[#allocation2 + $0x250] sm:$0x3] %vm1110, 0.0
    %1184 = vst.msk [vmem:[#allocation2 + $0x258] sm:$0xff] %vm502, 0.0
    %1185 = vst.msk [vmem:[#allocation2 + $0x260] sm:$0xff] %vm502, 0.0
    %1186 = vst.msk [vmem:[#allocation2 + $0x268] sm:$0x3] %vm1110, 0.0
    %1187 = vst.msk [vmem:[#allocation2 + $0x270] sm:$0xff] %vm502, 0.0
    %1188 = vst.msk [vmem:[#allocation2 + $0x278] sm:$0xff] %vm502, 0.0
    %1189 = vst.msk [vmem:[#allocation2 + $0x280] sm:$0x3] %vm1110, 0.0
    %1190 = vst.msk [vmem:[#allocation2 + $0x288] sm:$0xff] %vm502, 0.0
    %1191 = vst.msk [vmem:[#allocation2 + $0x290] sm:$0xff] %vm502, 0.0
    %1192 = vst.msk [vmem:[#allocation2 + $0x298] sm:$0x3] %vm1110, 0.0
    %1193 = vst.msk [vmem:[#allocation2 + $0x2a0] sm:$0xff] %vm502, 0.0
    %1194 = vst.msk [vmem:[#allocation2 + $0x2a8] sm:$0xff] %vm502, 0.0
    %1195 = vst.msk [vmem:[#allocation2 + $0x2b0] sm:$0x3] %vm1110, 0.0
    %1196 = vst.msk [vmem:[#allocation2 + $0x2b8] sm:$0xff] %vm502, 0.0
    %1197 = vst.msk [vmem:[#allocation2 + $0x2c0] sm:$0xff] %vm502, 0.0
    %1198 = vst.msk [vmem:[#allocation2 + $0x2c8] sm:$0x3] %vm1110, 0.0
    %1199 = vst.msk [vmem:[#allocation2 + $0x2d0] sm:$0xff] %vm502, 0.0
    %1200 = vst.msk [vmem:[#allocation2 + $0x2d8] sm:$0xff] %vm502, 0.0
    %1201 = vst.msk [vmem:[#allocation2 + $0x2e0] sm:$0x3] %vm1110, 0.0
    %1202 = vst.msk [vmem:[#allocation2 + $0x2e8] sm:$0xff] %vm502, 0.0
    %1203 = vst.msk [vmem:[#allocation2 + $0x2f0] sm:$0xff] %vm502, 0.0
    %1204 = vst.msk [vmem:[#allocation2 + $0x2f8] sm:$0x3] %vm1110, 0.0
    %1205 = vst.msk [vmem:[#allocation2 + $0x300] sm:$0xff] %vm502, 0.0
    %1206 = vst.msk [vmem:[#allocation2 + $0x308] sm:$0xff] %vm502, 0.0
    %1207 = vst.msk [vmem:[#allocation2 + $0x310] sm:$0x3] %vm1110, 0.0
    %1208 = vst.msk [vmem:[#allocation2 + $0x318] sm:$0xff] %vm502, 0.0
    %1209 = vst.msk [vmem:[#allocation2 + $0x320] sm:$0xff] %vm502, 0.0
    %1210 = vst.msk [vmem:[#allocation2 + $0x328] sm:$0x3] %vm1110, 0.0
    %1211 = vst.msk [vmem:[#allocation2 + $0x330] sm:$0xff] %vm502, 0.0
    %1212 = vst.msk [vmem:[#allocation2 + $0x338] sm:$0xff] %vm502, 0.0
    %1213 = vst.msk [vmem:[#allocation2 + $0x340] sm:$0x3] %vm1110, 0.0
    %1214 = vst.msk [vmem:[#allocation2 + $0x348] sm:$0xff] %vm502, 0.0
    %1215 = vst.msk [vmem:[#allocation2 + $0x350] sm:$0xff] %vm502, 0.0
    %1216 = vst.msk [vmem:[#allocation2 + $0x358] sm:$0x3] %vm1110, 0.0
    %s1217 = scalar_lea.vmem [#allocation2], 24
    %1218 = vst.msk [vmem:[%s1217 + $0x1] sm:$0xff] %vm502, %v1044
    %1219 = vst.msk [vmem:[%s1217 + $0x9] sm:$0xff] %vm502, %v1045
    %1220 = vst.msk [vmem:[%s1217 + $0x19] sm:$0xff] %vm502, %v1046
    %1221 = vst.msk [vmem:[%s1217 + $0x21] sm:$0xff] %vm502, %v1047
    %1222 = vst.msk [vmem:[%s1217 + $0x31] sm:$0xff] %vm502, %v1048
    %1223 = vst.msk [vmem:[%s1217 + $0x39] sm:$0xff] %vm502, %v1049
    %1224 = vst.msk [vmem:[%s1217 + $0x49] sm:$0xff] %vm502, %v1050
    %1225 = vst.msk [vmem:[%s1217 + $0x51] sm:$0xff] %vm502, %v1051
    %1226 = vst.msk [vmem:[%s1217 + $0x61] sm:$0xff] %vm502, %v1052
    %1227 = vst.msk [vmem:[%s1217 + $0x69] sm:$0xff] %vm502, %v1053
    %1228 = vst.msk [vmem:[%s1217 + $0x79] sm:$0xff] %vm502, %v1054
    %1229 = vst.msk [vmem:[%s1217 + $0x81] sm:$0xff] %vm502, %v1055
    %1230 = vst.msk [vmem:[%s1217 + $0x91] sm:$0xff] %vm502, %v1056
    %1231 = vst.msk [vmem:[%s1217 + $0x99] sm:$0xff] %vm502, %v1057
    %1232 = vst.msk [vmem:[%s1217 + $0xa9] sm:$0xff] %vm502, %v1058
    %1233 = vst.msk [vmem:[%s1217 + $0xb1] sm:$0xff] %vm502, %v1059
    %1234 = vst.msk [vmem:[%s1217 + $0xc1] sm:$0xff] %vm502, %v1060
    %1235 = vst.msk [vmem:[%s1217 + $0xc9] sm:$0xff] %vm502, %v1061
    %1236 = vst.msk [vmem:[%s1217 + $0xd9] sm:$0xff] %vm502, %v1062
    %1237 = vst.msk [vmem:[%s1217 + $0xe1] sm:$0xff] %vm502, %v1063
    %1238 = vst.msk [vmem:[%s1217 + $0xf1] sm:$0xff] %vm502, %v1064
    %1239 = vst.msk [vmem:[%s1217 + $0xf9] sm:$0xff] %vm502, %v1065
    %1240 = vst.msk [vmem:[%s1217 + $0x109] sm:$0xff] %vm502, %v1066
    %1241 = vst.msk [vmem:[%s1217 + $0x111] sm:$0xff] %vm502, %v1067
    %1242 = vst.msk [vmem:[%s1217 + $0x121] sm:$0xff] %vm502, %v1068
    %1243 = vst.msk [vmem:[%s1217 + $0x129] sm:$0xff] %vm502, %v1069
    %1244 = vst.msk [vmem:[%s1217 + $0x139] sm:$0xff] %vm502, %v1070
    %1245 = vst.msk [vmem:[%s1217 + $0x141] sm:$0xff] %vm502, %v1071
    %1246 = vst.msk [vmem:[%s1217 + $0x151] sm:$0xff] %vm502, %v1072
    %1247 = vst.msk [vmem:[%s1217 + $0x159] sm:$0xff] %vm502, %v1073
    %1248 = vst.msk [vmem:[%s1217 + $0x169] sm:$0xff] %vm502, %v1074
    %1249 = vst.msk [vmem:[%s1217 + $0x171] sm:$0xff] %vm502, %v1075
    %1250 = vst.msk [vmem:[%s1217 + $0x1b1] sm:$0xff] %vm502, %v1076
    %1251 = vst.msk [vmem:[%s1217 + $0x1b9] sm:$0xff] %vm502, %v1077
    %1252 = vst.msk [vmem:[%s1217 + $0x1c9] sm:$0xff] %vm502, %v1078
    %1253 = vst.msk [vmem:[%s1217 + $0x1d1] sm:$0xff] %vm502, %v1079
    %1254 = vst.msk [vmem:[%s1217 + $0x1e1] sm:$0xff] %vm502, %v1080
    %1255 = vst.msk [vmem:[%s1217 + $0x1e9] sm:$0xff] %vm502, %v1081
    %1256 = vst.msk [vmem:[%s1217 + $0x1f9] sm:$0xff] %vm502, %v1082
    %1257 = vst.msk [vmem:[%s1217 + $0x201] sm:$0xff] %vm502, %v1083
    %1258 = vst.msk [vmem:[%s1217 + $0x211] sm:$0xff] %vm502, %v1084
    %1259 = vst.msk [vmem:[%s1217 + $0x219] sm:$0xff] %vm502, %v1085
    %1260 = vst.msk [vmem:[%s1217 + $0x229] sm:$0xff] %vm502, %v1086
    %1261 = vst.msk [vmem:[%s1217 + $0x231] sm:$0xff] %vm502, %v1087
    %1262 = vst.msk [vmem:[%s1217 + $0x241] sm:$0xff] %vm502, %v1088
    %1263 = vst.msk [vmem:[%s1217 + $0x249] sm:$0xff] %vm502, %v1089
    %1264 = vst.msk [vmem:[%s1217 + $0x259] sm:$0xff] %vm502, %v1090
    %1265 = vst.msk [vmem:[%s1217 + $0x261] sm:$0xff] %vm502, %v1091
    %1266 = vst.msk [vmem:[%s1217 + $0x271] sm:$0xff] %vm502, %v1092
    %1267 = vst.msk [vmem:[%s1217 + $0x279] sm:$0xff] %vm502, %v1093
    %1268 = vst.msk [vmem:[%s1217 + $0x289] sm:$0xff] %vm502, %v1094
    %1269 = vst.msk [vmem:[%s1217 + $0x291] sm:$0xff] %vm502, %v1095
    %1270 = vst.msk [vmem:[%s1217 + $0x2a1] sm:$0xff] %vm502, %v1096
    %1271 = vst.msk [vmem:[%s1217 + $0x2a9] sm:$0xff] %vm502, %v1097
    %1272 = vst.msk [vmem:[%s1217 + $0x2b9] sm:$0xff] %vm502, %v1098
    %1273 = vst.msk [vmem:[%s1217 + $0x2c1] sm:$0xff] %vm502, %v1099
    %1274 = vst.msk [vmem:[%s1217 + $0x2d1] sm:$0xff] %vm502, %v1100
    %1275 = vst.msk [vmem:[%s1217 + $0x2d9] sm:$0xff] %vm502, %v1101
    %1276 = vst.msk [vmem:[%s1217 + $0x2e9] sm:$0xff] %vm502, %v1102
    %1277 = vst.msk [vmem:[%s1217 + $0x2f1] sm:$0xff] %vm502, %v1103
    %1278 = vst.msk [vmem:[%s1217 + $0x301] sm:$0xff] %vm502, %v1104
    %1279 = vst.msk [vmem:[%s1217 + $0x309] sm:$0xff] %vm502, %v1105
    %1280 = vst.msk [vmem:[%s1217 + $0x319] sm:$0xff] %vm502, %v1106
    %1281 = vst.msk [vmem:[%s1217 + $0x321] sm:$0xff] %vm502, %v1107
    %v1282 = vld [vmem:[#allocation2] sm:$0xff]
    %v1283 = vld [vmem:[#allocation2 + $0x8] sm:$0xff]
    %v1284 = vld [vmem:[#allocation2 + $0x18] sm:$0xff]
    %v1285 = vld [vmem:[#allocation2 + $0x20] sm:$0xff]
    %v1286 = vld [vmem:[#allocation2 + $0x30] sm:$0xff]
    %v1287 = vld [vmem:[#allocation2 + $0x38] sm:$0xff]
    %v1288 = vld [vmem:[#allocation2 + $0x48] sm:$0xff]
    %v1289 = vld [vmem:[#allocation2 + $0x50] sm:$0xff]
    %v1290 = vld [vmem:[#allocation2 + $0x60] sm:$0xff]
    %v1291 = vld [vmem:[#allocation2 + $0x68] sm:$0xff]
    %v1292 = vld [vmem:[#allocation2 + $0x78] sm:$0xff]
    %v1293 = vld [vmem:[#allocation2 + $0x80] sm:$0xff]
    %v1294 = vld [vmem:[#allocation2 + $0x90] sm:$0xff]
    %v1295 = vld [vmem:[#allocation2 + $0x98] sm:$0xff]
    %v1296 = vld [vmem:[#allocation2 + $0xa8] sm:$0xff]
    %v1297 = vld [vmem:[#allocation2 + $0xb0] sm:$0xff]
    %v1298 = vld [vmem:[#allocation2 + $0xc0] sm:$0xff]
    %v1299 = vld [vmem:[#allocation2 + $0xc8] sm:$0xff]
    %v1300 = vld [vmem:[#allocation2 + $0xd8] sm:$0xff]
    %v1301 = vld [vmem:[#allocation2 + $0xe0] sm:$0xff]
    %v1302 = vld [vmem:[#allocation2 + $0xf0] sm:$0xff]
    %v1303 = vld [vmem:[#allocation2 + $0xf8] sm:$0xff]
    %v1304 = vld [vmem:[#allocation2 + $0x108] sm:$0xff]
    %v1305 = vld [vmem:[#allocation2 + $0x110] sm:$0xff]
    %v1306 = vld [vmem:[#allocation2 + $0x120] sm:$0xff]
    %v1307 = vld [vmem:[#allocation2 + $0x128] sm:$0xff]
    %v1308 = vld [vmem:[#allocation2 + $0x138] sm:$0xff]
    %v1309 = vld [vmem:[#allocation2 + $0x140] sm:$0xff]
    %v1310 = vld [vmem:[#allocation2 + $0x150] sm:$0xff]
    %v1311 = vld [vmem:[#allocation2 + $0x158] sm:$0xff]
    %v1312 = vld [vmem:[#allocation2 + $0x168] sm:$0xff]
    %v1313 = vld [vmem:[#allocation2 + $0x170] sm:$0xff]
    %v1314 = vld [vmem:[#allocation2 + $0x1b0] sm:$0xff]
    %v1315 = vld [vmem:[#allocation2 + $0x1b8] sm:$0xff]
    %v1316 = vld [vmem:[#allocation2 + $0x1c8] sm:$0xff]
    %v1317 = vld [vmem:[#allocation2 + $0x1d0] sm:$0xff]
    %v1318 = vld [vmem:[#allocation2 + $0x1e0] sm:$0xff]
    %v1319 = vld [vmem:[#allocation2 + $0x1e8] sm:$0xff]
    %v1320 = vld [vmem:[#allocation2 + $0x1f8] sm:$0xff]
    %v1321 = vld [vmem:[#allocation2 + $0x200] sm:$0xff]
    %v1322 = vld [vmem:[#allocation2 + $0x210] sm:$0xff]
    %v1323 = vld [vmem:[#allocation2 + $0x218] sm:$0xff]
    %v1324 = vld [vmem:[#allocation2 + $0x228] sm:$0xff]
    %v1325 = vld [vmem:[#allocation2 + $0x230] sm:$0xff]
    %v1326 = vld [vmem:[#allocation2 + $0x240] sm:$0xff]
    %v1327 = vld [vmem:[#allocation2 + $0x248] sm:$0xff]
    %v1328 = vld [vmem:[#allocation2 + $0x258] sm:$0xff]
    %v1329 = vld [vmem:[#allocation2 + $0x260] sm:$0xff]
    %v1330 = vld [vmem:[#allocation2 + $0x270] sm:$0xff]
    %v1331 = vld [vmem:[#allocation2 + $0x278] sm:$0xff]
    %v1332 = vld [vmem:[#allocation2 + $0x288] sm:$0xff]
    %v1333 = vld [vmem:[#allocation2 + $0x290] sm:$0xff]
    %v1334 = vld [vmem:[#allocation2 + $0x2a0] sm:$0xff]
    %v1335 = vld [vmem:[#allocation2 + $0x2a8] sm:$0xff]
    %v1336 = vld [vmem:[#allocation2 + $0x2b8] sm:$0xff]
    %v1337 = vld [vmem:[#allocation2 + $0x2c0] sm:$0xff]
    %v1338 = vld [vmem:[#allocation2 + $0x2d0] sm:$0xff]
    %v1339 = vld [vmem:[#allocation2 + $0x2d8] sm:$0xff]
    %v1340 = vld [vmem:[#allocation2 + $0x2e8] sm:$0xff]
    %v1341 = vld [vmem:[#allocation2 + $0x2f0] sm:$0xff]
    %v1342 = vld [vmem:[#allocation2 + $0x300] sm:$0xff]
    %v1343 = vld [vmem:[#allocation2 + $0x308] sm:$0xff]
    %v1344 = vld [vmem:[#allocation2 + $0x318] sm:$0xff]
    %v1345 = vld [vmem:[#allocation2 + $0x320] sm:$0xff]
    %v1346 = vpack.c.bf16 %v1283, %v1282
    %v1347 = vpack.c.bf16 %v1285, %v1284
    %v1348 = vpack.c.bf16 %v1287, %v1286
    %v1349 = vpack.c.bf16 %v1289, %v1288
    %v1350 = vpack.c.bf16 %v1291, %v1290
    %v1351 = vpack.c.bf16 %v1293, %v1292
    %v1352 = vpack.c.bf16 %v1295, %v1294
    %v1353 = vpack.c.bf16 %v1297, %v1296
    %v1354 = vpack.c.bf16 %v1299, %v1298
    %v1355 = vpack.c.bf16 %v1301, %v1300
    %v1356 = vpack.c.bf16 %v1303, %v1302
    %v1357 = vpack.c.bf16 %v1305, %v1304
    %v1358 = vpack.c.bf16 %v1307, %v1306
    %v1359 = vpack.c.bf16 %v1309, %v1308
    %v1360 = vpack.c.bf16 %v1311, %v1310
    %v1361 = vpack.c.bf16 %v1313, %v1312
    %v1362 = vpack.c.bf16 %v1315, %v1314
    %v1363 = vpack.c.bf16 %v1317, %v1316
    %v1364 = vpack.c.bf16 %v1319, %v1318
    %v1365 = vpack.c.bf16 %v1321, %v1320
    %v1366 = vpack.c.bf16 %v1323, %v1322
    %v1367 = vpack.c.bf16 %v1325, %v1324
    %v1368 = vpack.c.bf16 %v1327, %v1326
    %v1369 = vpack.c.bf16 %v1329, %v1328
    %v1370 = vpack.c.bf16 %v1331, %v1330
    %v1371 = vpack.c.bf16 %v1333, %v1332
    %v1372 = vpack.c.bf16 %v1335, %v1334
    %v1373 = vpack.c.bf16 %v1337, %v1336
    %v1374 = vpack.c.bf16 %v1339, %v1338
    %v1375 = vpack.c.bf16 %v1341, %v1340
    %v1376 = vpack.c.bf16 %v1343, %v1342
    %v1377 = vpack.c.bf16 %v1345, %v1344
    %v1378 = vld [vmem:[#allocation2 + $0x1] sm:$0xff]
    %v1379 = vld [vmem:[#allocation2 + $0x9] sm:$0xff]
    %v1380 = vld [vmem:[#allocation2 + $0x19] sm:$0xff]
    %v1381 = vld [vmem:[#allocation2 + $0x21] sm:$0xff]
    %v1382 = vld [vmem:[#allocation2 + $0x31] sm:$0xff]
    %v1383 = vld [vmem:[#allocation2 + $0x39] sm:$0xff]
    %v1384 = vld [vmem:[#allocation2 + $0x49] sm:$0xff]
    %v1385 = vld [vmem:[#allocation2 + $0x51] sm:$0xff]
    %v1386 = vld [vmem:[#allocation2 + $0x61] sm:$0xff]
    %v1387 = vld [vmem:[#allocation2 + $0x69] sm:$0xff]
    %v1388 = vld [vmem:[#allocation2 + $0x79] sm:$0xff]
    %v1389 = vld [vmem:[#allocation2 + $0x81] sm:$0xff]
    %v1390 = vld [vmem:[#allocation2 + $0x91] sm:$0xff]
    %v1391 = vld [vmem:[#allocation2 + $0x99] sm:$0xff]
    %v1392 = vld [vmem:[#allocation2 + $0xa9] sm:$0xff]
    %v1393 = vld [vmem:[#allocation2 + $0xb1] sm:$0xff]
    %v1394 = vld [vmem:[#allocation2 + $0xc1] sm:$0xff]
    %v1395 = vld [vmem:[#allocation2 + $0xc9] sm:$0xff]
    %v1396 = vld [vmem:[#allocation2 + $0xd9] sm:$0xff]
    %v1397 = vld [vmem:[#allocation2 + $0xe1] sm:$0xff]
    %v1398 = vld [vmem:[#allocation2 + $0xf1] sm:$0xff]
    %v1399 = vld [vmem:[#allocation2 + $0xf9] sm:$0xff]
    %v1400 = vld [vmem:[#allocation2 + $0x109] sm:$0xff]
    %v1401 = vld [vmem:[#allocation2 + $0x111] sm:$0xff]
    %v1402 = vld [vmem:[#allocation2 + $0x121] sm:$0xff]
    %v1403 = vld [vmem:[#allocation2 + $0x129] sm:$0xff]
    %v1404 = vld [vmem:[#allocation2 + $0x139] sm:$0xff]
    %v1405 = vld [vmem:[#allocation2 + $0x141] sm:$0xff]
    %v1406 = vld [vmem:[#allocation2 + $0x151] sm:$0xff]
    %v1407 = vld [vmem:[#allocation2 + $0x159] sm:$0xff]
    %v1408 = vld [vmem:[#allocation2 + $0x169] sm:$0xff]
    %v1409 = vld [vmem:[#allocation2 + $0x171] sm:$0xff]
    %v1410 = vld [vmem:[#allocation2 + $0x1b1] sm:$0xff]
    %v1411 = vld [vmem:[#allocation2 + $0x1b9] sm:$0xff]
    %v1412 = vld [vmem:[#allocation2 + $0x1c9] sm:$0xff]
    %v1413 = vld [vmem:[#allocation2 + $0x1d1] sm:$0xff]
    %v1414 = vld [vmem:[#allocation2 + $0x1e1] sm:$0xff]
    %v1415 = vld [vmem:[#allocation2 + $0x1e9] sm:$0xff]
    %v1416 = vld [vmem:[#allocation2 + $0x1f9] sm:$0xff]
    %v1417 = vld [vmem:[#allocation2 + $0x201] sm:$0xff]
    %v1418 = vld [vmem:[#allocation2 + $0x211] sm:$0xff]
    %v1419 = vld [vmem:[#allocation2 + $0x219] sm:$0xff]
    %v1420 = vld [vmem:[#allocation2 + $0x229] sm:$0xff]
    %v1421 = vld [vmem:[#allocation2 + $0x231] sm:$0xff]
    %v1422 = vld [vmem:[#allocation2 + $0x241] sm:$0xff]
    %v1423 = vld [vmem:[#allocation2 + $0x249] sm:$0xff]
    %v1424 = vld [vmem:[#allocation2 + $0x259] sm:$0xff]
    %v1425 = vld [vmem:[#allocation2 + $0x261] sm:$0xff]
    %v1426 = vld [vmem:[#allocation2 + $0x271] sm:$0xff]
    %v1427 = vld [vmem:[#allocation2 + $0x279] sm:$0xff]
    %v1428 = vld [vmem:[#allocation2 + $0x289] sm:$0xff]
    %v1429 = vld [vmem:[#allocation2 + $0x291] sm:$0xff]
    %v1430 = vld [vmem:[#allocation2 + $0x2a1] sm:$0xff]
    %v1431 = vld [vmem:[#allocation2 + $0x2a9] sm:$0xff]
    %v1432 = vld [vmem:[#allocation2 + $0x2b9] sm:$0xff]
    %v1433 = vld [vmem:[#allocation2 + $0x2c1] sm:$0xff]
    %v1434 = vld [vmem:[#allocation2 + $0x2d1] sm:$0xff]
    %v1435 = vld [vmem:[#allocation2 + $0x2d9] sm:$0xff]
    %v1436 = vld [vmem:[#allocation2 + $0x2e9] sm:$0xff]
    %v1437 = vld [vmem:[#allocation2 + $0x2f1] sm:$0xff]
    %v1438 = vld [vmem:[#allocation2 + $0x301] sm:$0xff]
    %v1439 = vld [vmem:[#allocation2 + $0x309] sm:$0xff]
    %v1440 = vld [vmem:[#allocation2 + $0x319] sm:$0xff]
    %v1441 = vld [vmem:[#allocation2 + $0x321] sm:$0xff]
    %v1442 = vpack.c.bf16 %v1379, %v1378
    %v1443 = vpack.c.bf16 %v1381, %v1380
    %v1444 = vpack.c.bf16 %v1383, %v1382
    %v1445 = vpack.c.bf16 %v1385, %v1384
    %v1446 = vpack.c.bf16 %v1387, %v1386
    %v1447 = vpack.c.bf16 %v1389, %v1388
    %v1448 = vpack.c.bf16 %v1391, %v1390
    %v1449 = vpack.c.bf16 %v1393, %v1392
    %v1450 = vpack.c.bf16 %v1395, %v1394
    %v1451 = vpack.c.bf16 %v1397, %v1396
    %v1452 = vpack.c.bf16 %v1399, %v1398
    %v1453 = vpack.c.bf16 %v1401, %v1400
    %v1454 = vpack.c.bf16 %v1403, %v1402
    %v1455 = vpack.c.bf16 %v1405, %v1404
    %v1456 = vpack.c.bf16 %v1407, %v1406
    %v1457 = vpack.c.bf16 %v1409, %v1408
    %v1458 = vpack.c.bf16 %v1411, %v1410
    %v1459 = vpack.c.bf16 %v1413, %v1412
    %v1460 = vpack.c.bf16 %v1415, %v1414
    %v1461 = vpack.c.bf16 %v1417, %v1416
    %v1462 = vpack.c.bf16 %v1419, %v1418
    %v1463 = vpack.c.bf16 %v1421, %v1420
    %v1464 = vpack.c.bf16 %v1423, %v1422
    %v1465 = vpack.c.bf16 %v1425, %v1424
    %v1466 = vpack.c.bf16 %v1427, %v1426
    %v1467 = vpack.c.bf16 %v1429, %v1428
    %v1468 = vpack.c.bf16 %v1431, %v1430
    %v1469 = vpack.c.bf16 %v1433, %v1432
    %v1470 = vpack.c.bf16 %v1435, %v1434
    %v1471 = vpack.c.bf16 %v1437, %v1436
    %v1472 = vpack.c.bf16 %v1439, %v1438
    %v1473 = vpack.c.bf16 %v1441, %v1440
    %v1474 = vld [vmem:[#allocation2 + $0x2] sm:$0xff]
    %v1475 = vld [vmem:[#allocation2 + $0xa] sm:$0xff]
    %v1476 = vld [vmem:[#allocation2 + $0x1a] sm:$0xff]
    %v1477 = vld [vmem:[#allocation2 + $0x22] sm:$0xff]
    %v1478 = vld [vmem:[#allocation2 + $0x32] sm:$0xff]
    %v1479 = vld [vmem:[#allocation2 + $0x3a] sm:$0xff]
    %v1480 = vld [vmem:[#allocation2 + $0x4a] sm:$0xff]
    %v1481 = vld [vmem:[#allocation2 + $0x52] sm:$0xff]
    %v1482 = vld [vmem:[#allocation2 + $0x62] sm:$0xff]
    %v1483 = vld [vmem:[#allocation2 + $0x6a] sm:$0xff]
    %v1484 = vld [vmem:[#allocation2 + $0x7a] sm:$0xff]
    %v1485 = vld [vmem:[#allocation2 + $0x82] sm:$0xff]
    %v1486 = vld [vmem:[#allocation2 + $0x92] sm:$0xff]
    %v1487 = vld [vmem:[#allocation2 + $0x9a] sm:$0xff]
    %v1488 = vld [vmem:[#allocation2 + $0xaa] sm:$0xff]
    %v1489 = vld [vmem:[#allocation2 + $0xb2] sm:$0xff]
    %v1490 = vld [vmem:[#allocation2 + $0xc2] sm:$0xff]
    %v1491 = vld [vmem:[#allocation2 + $0xca] sm:$0xff]
    %v1492 = vld [vmem:[#allocation2 + $0xda] sm:$0xff]
    %v1493 = vld [vmem:[#allocation2 + $0xe2] sm:$0xff]
    %v1494 = vld [vmem:[#allocation2 + $0xf2] sm:$0xff]
    %v1495 = vld [vmem:[#allocation2 + $0xfa] sm:$0xff]
    %v1496 = vld [vmem:[#allocation2 + $0x10a] sm:$0xff]
    %v1497 = vld [vmem:[#allocation2 + $0x112] sm:$0xff]
    %v1498 = vld [vmem:[#allocation2 + $0x122] sm:$0xff]
    %v1499 = vld [vmem:[#allocation2 + $0x12a] sm:$0xff]
    %v1500 = vld [vmem:[#allocation2 + $0x13a] sm:$0xff]
    %v1501 = vld [vmem:[#allocation2 + $0x142] sm:$0xff]
    %v1502 = vld [vmem:[#allocation2 + $0x152] sm:$0xff]
    %v1503 = vld [vmem:[#allocation2 + $0x15a] sm:$0xff]
    %v1504 = vld [vmem:[#allocation2 + $0x16a] sm:$0xff]
    %v1505 = vld [vmem:[#allocation2 + $0x172] sm:$0xff]
    %v1506 = vld [vmem:[#allocation2 + $0x1b2] sm:$0xff]
    %v1507 = vld [vmem:[#allocation2 + $0x1ba] sm:$0xff]
    %v1508 = vld [vmem:[#allocation2 + $0x1ca] sm:$0xff]
    %v1509 = vld [vmem:[#allocation2 + $0x1d2] sm:$0xff]
    %v1510 = vld [vmem:[#allocation2 + $0x1e2] sm:$0xff]
    %v1511 = vld [vmem:[#allocation2 + $0x1ea] sm:$0xff]
    %v1512 = vld [vmem:[#allocation2 + $0x1fa] sm:$0xff]
    %v1513 = vld [vmem:[#allocation2 + $0x202] sm:$0xff]
    %v1514 = vld [vmem:[#allocation2 + $0x212] sm:$0xff]
    %v1515 = vld [vmem:[#allocation2 + $0x21a] sm:$0xff]
    %v1516 = vld [vmem:[#allocation2 + $0x22a] sm:$0xff]
    %v1517 = vld [vmem:[#allocation2 + $0x232] sm:$0xff]
    %v1518 = vld [vmem:[#allocation2 + $0x242] sm:$0xff]
    %v1519 = vld [vmem:[#allocation2 + $0x24a] sm:$0xff]
    %v1520 = vld [vmem:[#allocation2 + $0x25a] sm:$0xff]
    %v1521 = vld [vmem:[#allocation2 + $0x262] sm:$0xff]
    %v1522 = vld [vmem:[#allocation2 + $0x272] sm:$0xff]
    %v1523 = vld [vmem:[#allocation2 + $0x27a] sm:$0xff]
    %v1524 = vld [vmem:[#allocation2 + $0x28a] sm:$0xff]
    %v1525 = vld [vmem:[#allocation2 + $0x292] sm:$0xff]
    %v1526 = vld [vmem:[#allocation2 + $0x2a2] sm:$0xff]
    %v1527 = vld [vmem:[#allocation2 + $0x2aa] sm:$0xff]
    %v1528 = vld [vmem:[#allocation2 + $0x2ba] sm:$0xff]
    %v1529 = vld [vmem:[#allocation2 + $0x2c2] sm:$0xff]
    %v1530 = vld [vmem:[#allocation2 + $0x2d2] sm:$0xff]
    %v1531 = vld [vmem:[#allocation2 + $0x2da] sm:$0xff]
    %v1532 = vld [vmem:[#allocation2 + $0x2ea] sm:$0xff]
    %v1533 = vld [vmem:[#allocation2 + $0x2f2] sm:$0xff]
    %v1534 = vld [vmem:[#allocation2 + $0x302] sm:$0xff]
    %v1535 = vld [vmem:[#allocation2 + $0x30a] sm:$0xff]
    %v1536 = vld [vmem:[#allocation2 + $0x31a] sm:$0xff]
    %v1537 = vld [vmem:[#allocation2 + $0x322] sm:$0xff]
    %v1538 = vpack.c.bf16 %v1475, %v1474
    %v1539 = vpack.c.bf16 %v1477, %v1476
    %v1540 = vpack.c.bf16 %v1479, %v1478
    %v1541 = vpack.c.bf16 %v1481, %v1480
    %v1542 = vpack.c.bf16 %v1483, %v1482
    %v1543 = vpack.c.bf16 %v1485, %v1484
    %v1544 = vpack.c.bf16 %v1487, %v1486
    %v1545 = vpack.c.bf16 %v1489, %v1488
    %v1546 = vpack.c.bf16 %v1491, %v1490
    %v1547 = vpack.c.bf16 %v1493, %v1492
    %v1548 = vpack.c.bf16 %v1495, %v1494
    %v1549 = vpack.c.bf16 %v1497, %v1496
    %v1550 = vpack.c.bf16 %v1499, %v1498
    %v1551 = vpack.c.bf16 %v1501, %v1500
    %v1552 = vpack.c.bf16 %v1503, %v1502
    %v1553 = vpack.c.bf16 %v1505, %v1504
    %v1554 = vpack.c.bf16 %v1507, %v1506
    %v1555 = vpack.c.bf16 %v1509, %v1508
    %v1556 = vpack.c.bf16 %v1511, %v1510
    %v1557 = vpack.c.bf16 %v1513, %v1512
    %v1558 = vpack.c.bf16 %v1515, %v1514
    %v1559 = vpack.c.bf16 %v1517, %v1516
    %v1560 = vpack.c.bf16 %v1519, %v1518
    %v1561 = vpack.c.bf16 %v1521, %v1520
    %v1562 = vpack.c.bf16 %v1523, %v1522
    %v1563 = vpack.c.bf16 %v1525, %v1524
    %v1564 = vpack.c.bf16 %v1527, %v1526
    %v1565 = vpack.c.bf16 %v1529, %v1528
    %v1566 = vpack.c.bf16 %v1531, %v1530
    %v1567 = vpack.c.bf16 %v1533, %v1532
    %v1568 = vpack.c.bf16 %v1535, %v1534
    %v1569 = vpack.c.bf16 %v1537, %v1536
    %v1570 = vld [vmem:[%s1217] sm:$0xff]
    %v1571 = vld [vmem:[%s1217 + $0x8] sm:$0xff]
    %v1572 = vld [vmem:[%s1217 + $0x18] sm:$0xff]
    %v1573 = vld [vmem:[%s1217 + $0x20] sm:$0xff]
    %v1574 = vld [vmem:[%s1217 + $0x30] sm:$0xff]
    %v1575 = vld [vmem:[%s1217 + $0x38] sm:$0xff]
    %v1576 = vld [vmem:[%s1217 + $0x48] sm:$0xff]
    %v1577 = vld [vmem:[%s1217 + $0x50] sm:$0xff]
    %v1578 = vld [vmem:[%s1217 + $0x60] sm:$0xff]
    %v1579 = vld [vmem:[%s1217 + $0x68] sm:$0xff]
    %v1580 = vld [vmem:[%s1217 + $0x78] sm:$0xff]
    %v1581 = vld [vmem:[%s1217 + $0x80] sm:$0xff]
    %v1582 = vld [vmem:[%s1217 + $0x90] sm:$0xff]
    %v1583 = vld [vmem:[%s1217 + $0x98] sm:$0xff]
    %v1584 = vld [vmem:[%s1217 + $0xa8] sm:$0xff]
    %v1585 = vld [vmem:[%s1217 + $0xb0] sm:$0xff]
    %v1586 = vld [vmem:[%s1217 + $0xc0] sm:$0xff]
    %v1587 = vld [vmem:[%s1217 + $0xc8] sm:$0xff]
    %v1588 = vld [vmem:[%s1217 + $0xd8] sm:$0xff]
    %v1589 = vld [vmem:[%s1217 + $0xe0] sm:$0xff]
    %v1590 = vld [vmem:[%s1217 + $0xf0] sm:$0xff]
    %v1591 = vld [vmem:[%s1217 + $0xf8] sm:$0xff]
    %v1592 = vld [vmem:[%s1217 + $0x108] sm:$0xff]
    %v1593 = vld [vmem:[%s1217 + $0x110] sm:$0xff]
    %v1594 = vld [vmem:[%s1217 + $0x120] sm:$0xff]
    %v1595 = vld [vmem:[%s1217 + $0x128] sm:$0xff]
    %v1596 = vld [vmem:[%s1217 + $0x138] sm:$0xff]
    %v1597 = vld [vmem:[%s1217 + $0x140] sm:$0xff]
    %v1598 = vld [vmem:[%s1217 + $0x150] sm:$0xff]
    %v1599 = vld [vmem:[%s1217 + $0x158] sm:$0xff]
    %v1600 = vld [vmem:[%s1217 + $0x168] sm:$0xff]
    %v1601 = vld [vmem:[%s1217 + $0x170] sm:$0xff]
    %v1602 = vld [vmem:[%s1217 + $0x1b0] sm:$0xff]
    %v1603 = vld [vmem:[%s1217 + $0x1b8] sm:$0xff]
    %v1604 = vld [vmem:[%s1217 + $0x1c8] sm:$0xff]
    %v1605 = vld [vmem:[%s1217 + $0x1d0] sm:$0xff]
    %v1606 = vld [vmem:[%s1217 + $0x1e0] sm:$0xff]
    %v1607 = vld [vmem:[%s1217 + $0x1e8] sm:$0xff]
    %v1608 = vld [vmem:[%s1217 + $0x1f8] sm:$0xff]
    %v1609 = vld [vmem:[%s1217 + $0x200] sm:$0xff]
    %v1610 = vld [vmem:[%s1217 + $0x210] sm:$0xff]
    %v1611 = vld [vmem:[%s1217 + $0x218] sm:$0xff]
    %v1612 = vld [vmem:[%s1217 + $0x228] sm:$0xff]
    %v1613 = vld [vmem:[%s1217 + $0x230] sm:$0xff]
    %v1614 = vld [vmem:[%s1217 + $0x240] sm:$0xff]
    %v1615 = vld [vmem:[%s1217 + $0x248] sm:$0xff]
    %v1616 = vld [vmem:[%s1217 + $0x258] sm:$0xff]
    %v1617 = vld [vmem:[%s1217 + $0x260] sm:$0xff]
    %v1618 = vld [vmem:[%s1217 + $0x270] sm:$0xff]
    %v1619 = vld [vmem:[%s1217 + $0x278] sm:$0xff]
    %v1620 = vld [vmem:[%s1217 + $0x288] sm:$0xff]
    %v1621 = vld [vmem:[%s1217 + $0x290] sm:$0xff]
    %v1622 = vld [vmem:[%s1217 + $0x2a0] sm:$0xff]
    %v1623 = vld [vmem:[%s1217 + $0x2a8] sm:$0xff]
    %v1624 = vld [vmem:[%s1217 + $0x2b8] sm:$0xff]
    %v1625 = vld [vmem:[%s1217 + $0x2c0] sm:$0xff]
    %v1626 = vld [vmem:[%s1217 + $0x2d0] sm:$0xff]
    %v1627 = vld [vmem:[%s1217 + $0x2d8] sm:$0xff]
    %v1628 = vld [vmem:[%s1217 + $0x2e8] sm:$0xff]
    %v1629 = vld [vmem:[%s1217 + $0x2f0] sm:$0xff]
    %v1630 = vld [vmem:[%s1217 + $0x300] sm:$0xff]
    %v1631 = vld [vmem:[%s1217 + $0x308] sm:$0xff]
    %v1632 = vld [vmem:[%s1217 + $0x318] sm:$0xff]
    %v1633 = vld [vmem:[%s1217 + $0x320] sm:$0xff]
    %v1634 = vpack.c.bf16 %v1571, %v1570
    %v1635 = vpack.c.bf16 %v1573, %v1572
    %v1636 = vpack.c.bf16 %v1575, %v1574
    %v1637 = vpack.c.bf16 %v1577, %v1576
    %v1638 = vpack.c.bf16 %v1579, %v1578
    %v1639 = vpack.c.bf16 %v1581, %v1580
    %v1640 = vpack.c.bf16 %v1583, %v1582
    %v1641 = vpack.c.bf16 %v1585, %v1584
    %v1642 = vpack.c.bf16 %v1587, %v1586
    %v1643 = vpack.c.bf16 %v1589, %v1588
    %v1644 = vpack.c.bf16 %v1591, %v1590
    %v1645 = vpack.c.bf16 %v1593, %v1592
    %v1646 = vpack.c.bf16 %v1595, %v1594
    %v1647 = vpack.c.bf16 %v1597, %v1596
    %v1648 = vpack.c.bf16 %v1599, %v1598
    %v1649 = vpack.c.bf16 %v1601, %v1600
    %v1650 = vpack.c.bf16 %v1603, %v1602
    %v1651 = vpack.c.bf16 %v1605, %v1604
    %v1652 = vpack.c.bf16 %v1607, %v1606
    %v1653 = vpack.c.bf16 %v1609, %v1608
    %v1654 = vpack.c.bf16 %v1611, %v1610
    %v1655 = vpack.c.bf16 %v1613, %v1612
    %v1656 = vpack.c.bf16 %v1615, %v1614
    %v1657 = vpack.c.bf16 %v1617, %v1616
    %v1658 = vpack.c.bf16 %v1619, %v1618
    %v1659 = vpack.c.bf16 %v1621, %v1620
    %v1660 = vpack.c.bf16 %v1623, %v1622
    %v1661 = vpack.c.bf16 %v1625, %v1624
    %v1662 = vpack.c.bf16 %v1627, %v1626
    %v1663 = vpack.c.bf16 %v1629, %v1628
    %v1664 = vpack.c.bf16 %v1631, %v1630
    %v1665 = vpack.c.bf16 %v1633, %v1632
    %v1666 = vld [vmem:[%s1217 + $0x1] sm:$0xff]
    %v1667 = vld [vmem:[%s1217 + $0x9] sm:$0xff]
    %v1668 = vld [vmem:[%s1217 + $0x19] sm:$0xff]
    %v1669 = vld [vmem:[%s1217 + $0x21] sm:$0xff]
    %v1670 = vld [vmem:[%s1217 + $0x31] sm:$0xff]
    %v1671 = vld [vmem:[%s1217 + $0x39] sm:$0xff]
    %v1672 = vld [vmem:[%s1217 + $0x49] sm:$0xff]
    %v1673 = vld [vmem:[%s1217 + $0x51] sm:$0xff]
    %v1674 = vld [vmem:[%s1217 + $0x61] sm:$0xff]
    %v1675 = vld [vmem:[%s1217 + $0x69] sm:$0xff]
    %v1676 = vld [vmem:[%s1217 + $0x79] sm:$0xff]
    %v1677 = vld [vmem:[%s1217 + $0x81] sm:$0xff]
    %v1678 = vld [vmem:[%s1217 + $0x91] sm:$0xff]
    %v1679 = vld [vmem:[%s1217 + $0x99] sm:$0xff]
    %v1680 = vld [vmem:[%s1217 + $0xa9] sm:$0xff]
    %v1681 = vld [vmem:[%s1217 + $0xb1] sm:$0xff]
    %v1682 = vld [vmem:[%s1217 + $0xc1] sm:$0xff]
    %v1683 = vld [vmem:[%s1217 + $0xc9] sm:$0xff]
    %v1684 = vld [vmem:[%s1217 + $0xd9] sm:$0xff]
    %v1685 = vld [vmem:[%s1217 + $0xe1] sm:$0xff]
    %v1686 = vld [vmem:[%s1217 + $0xf1] sm:$0xff]
    %v1687 = vld [vmem:[%s1217 + $0xf9] sm:$0xff]
    %v1688 = vld [vmem:[%s1217 + $0x109] sm:$0xff]
    %v1689 = vld [vmem:[%s1217 + $0x111] sm:$0xff]
    %v1690 = vld [vmem:[%s1217 + $0x121] sm:$0xff]
    %v1691 = vld [vmem:[%s1217 + $0x129] sm:$0xff]
    %v1692 = vld [vmem:[%s1217 + $0x139] sm:$0xff]
    %v1693 = vld [vmem:[%s1217 + $0x141] sm:$0xff]
    %v1694 = vld [vmem:[%s1217 + $0x151] sm:$0xff]
    %v1695 = vld [vmem:[%s1217 + $0x159] sm:$0xff]
    %v1696 = vld [vmem:[%s1217 + $0x169] sm:$0xff]
    %v1697 = vld [vmem:[%s1217 + $0x171] sm:$0xff]
    %v1698 = vld [vmem:[%s1217 + $0x1b1] sm:$0xff]
    %v1699 = vld [vmem:[%s1217 + $0x1b9] sm:$0xff]
    %v1700 = vld [vmem:[%s1217 + $0x1c9] sm:$0xff]
    %v1701 = vld [vmem:[%s1217 + $0x1d1] sm:$0xff]
    %v1702 = vld [vmem:[%s1217 + $0x1e1] sm:$0xff]
    %v1703 = vld [vmem:[%s1217 + $0x1e9] sm:$0xff]
    %v1704 = vld [vmem:[%s1217 + $0x1f9] sm:$0xff]
    %v1705 = vld [vmem:[%s1217 + $0x201] sm:$0xff]
    %v1706 = vld [vmem:[%s1217 + $0x211] sm:$0xff]
    %v1707 = vld [vmem:[%s1217 + $0x219] sm:$0xff]
    %v1708 = vld [vmem:[%s1217 + $0x229] sm:$0xff]
    %v1709 = vld [vmem:[%s1217 + $0x231] sm:$0xff]
    %v1710 = vld [vmem:[%s1217 + $0x241] sm:$0xff]
    %v1711 = vld [vmem:[%s1217 + $0x249] sm:$0xff]
    %v1712 = vld [vmem:[%s1217 + $0x259] sm:$0xff]
    %v1713 = vld [vmem:[%s1217 + $0x261] sm:$0xff]
    %v1714 = vld [vmem:[%s1217 + $0x271] sm:$0xff]
    %v1715 = vld [vmem:[%s1217 + $0x279] sm:$0xff]
    %v1716 = vld [vmem:[%s1217 + $0x289] sm:$0xff]
    %v1717 = vld [vmem:[%s1217 + $0x291] sm:$0xff]
    %v1718 = vld [vmem:[%s1217 + $0x2a1] sm:$0xff]
    %v1719 = vld [vmem:[%s1217 + $0x2a9] sm:$0xff]
    %v1720 = vld [vmem:[%s1217 + $0x2b9] sm:$0xff]
    %v1721 = vld [vmem:[%s1217 + $0x2c1] sm:$0xff]
    %v1722 = vld [vmem:[%s1217 + $0x2d1] sm:$0xff]
    %v1723 = vld [vmem:[%s1217 + $0x2d9] sm:$0xff]
    %v1724 = vld [vmem:[%s1217 + $0x2e9] sm:$0xff]
    %v1725 = vld [vmem:[%s1217 + $0x2f1] sm:$0xff]
    %v1726 = vld [vmem:[%s1217 + $0x301] sm:$0xff]
    %v1727 = vld [vmem:[%s1217 + $0x309] sm:$0xff]
    %v1728 = vld [vmem:[%s1217 + $0x319] sm:$0xff]
    %v1729 = vld [vmem:[%s1217 + $0x321] sm:$0xff]
    %v1730 = vpack.c.bf16 %v1667, %v1666
    %v1731 = vpack.c.bf16 %v1669, %v1668
    %v1732 = vpack.c.bf16 %v1671, %v1670
    %v1733 = vpack.c.bf16 %v1673, %v1672
    %v1734 = vpack.c.bf16 %v1675, %v1674
    %v1735 = vpack.c.bf16 %v1677, %v1676
    %v1736 = vpack.c.bf16 %v1679, %v1678
    %v1737 = vpack.c.bf16 %v1681, %v1680
    %v1738 = vpack.c.bf16 %v1683, %v1682
    %v1739 = vpack.c.bf16 %v1685, %v1684
    %v1740 = vpack.c.bf16 %v1687, %v1686
    %v1741 = vpack.c.bf16 %v1689, %v1688
    %v1742 = vpack.c.bf16 %v1691, %v1690
    %v1743 = vpack.c.bf16 %v1693, %v1692
    %v1744 = vpack.c.bf16 %v1695, %v1694
    %v1745 = vpack.c.bf16 %v1697, %v1696
    %v1746 = vpack.c.bf16 %v1699, %v1698
    %v1747 = vpack.c.bf16 %v1701, %v1700
    %v1748 = vpack.c.bf16 %v1703, %v1702
    %v1749 = vpack.c.bf16 %v1705, %v1704
    %v1750 = vpack.c.bf16 %v1707, %v1706
    %v1751 = vpack.c.bf16 %v1709, %v1708
    %v1752 = vpack.c.bf16 %v1711, %v1710
    %v1753 = vpack.c.bf16 %v1713, %v1712
    %v1754 = vpack.c.bf16 %v1715, %v1714
    %v1755 = vpack.c.bf16 %v1717, %v1716
    %v1756 = vpack.c.bf16 %v1719, %v1718
    %v1757 = vpack.c.bf16 %v1721, %v1720
    %v1758 = vpack.c.bf16 %v1723, %v1722
    %v1759 = vpack.c.bf16 %v1725, %v1724
    %v1760 = vpack.c.bf16 %v1727, %v1726
    %v1761 = vpack.c.bf16 %v1729, %v1728
    %v1762 = vld [vmem:[%s1217 + $0x2] sm:$0xff]
    %v1763 = vld [vmem:[%s1217 + $0xa] sm:$0xff]
    %v1764 = vld [vmem:[%s1217 + $0x1a] sm:$0xff]
    %v1765 = vld [vmem:[%s1217 + $0x22] sm:$0xff]
    %v1766 = vld [vmem:[%s1217 + $0x32] sm:$0xff]
    %v1767 = vld [vmem:[%s1217 + $0x3a] sm:$0xff]
    %v1768 = vld [vmem:[%s1217 + $0x4a] sm:$0xff]
    %v1769 = vld [vmem:[%s1217 + $0x52] sm:$0xff]
    %v1770 = vld [vmem:[%s1217 + $0x62] sm:$0xff]
    %v1771 = vld [vmem:[%s1217 + $0x6a] sm:$0xff]
    %v1772 = vld [vmem:[%s1217 + $0x7a] sm:$0xff]
    %v1773 = vld [vmem:[%s1217 + $0x82] sm:$0xff]
    %v1774 = vld [vmem:[%s1217 + $0x92] sm:$0xff]
    %v1775 = vld [vmem:[%s1217 + $0x9a] sm:$0xff]
    %v1776 = vld [vmem:[%s1217 + $0xaa] sm:$0xff]
    %v1777 = vld [vmem:[%s1217 + $0xb2] sm:$0xff]
    %v1778 = vld [vmem:[%s1217 + $0xc2] sm:$0xff]
    %v1779 = vld [vmem:[%s1217 + $0xca] sm:$0xff]
    %v1780 = vld [vmem:[%s1217 + $0xda] sm:$0xff]
    %v1781 = vld [vmem:[%s1217 + $0xe2] sm:$0xff]
    %v1782 = vld [vmem:[%s1217 + $0xf2] sm:$0xff]
    %v1783 = vld [vmem:[%s1217 + $0xfa] sm:$0xff]
    %v1784 = vld [vmem:[%s1217 + $0x10a] sm:$0xff]
    %v1785 = vld [vmem:[%s1217 + $0x112] sm:$0xff]
    %v1786 = vld [vmem:[%s1217 + $0x122] sm:$0xff]
    %v1787 = vld [vmem:[%s1217 + $0x12a] sm:$0xff]
    %v1788 = vld [vmem:[%s1217 + $0x13a] sm:$0xff]
    %v1789 = vld [vmem:[%s1217 + $0x142] sm:$0xff]
    %v1790 = vld [vmem:[%s1217 + $0x152] sm:$0xff]
    %v1791 = vld [vmem:[%s1217 + $0x15a] sm:$0xff]
    %v1792 = vld [vmem:[%s1217 + $0x16a] sm:$0xff]
    %v1793 = vld [vmem:[%s1217 + $0x172] sm:$0xff]
    %v1794 = vld [vmem:[%s1217 + $0x1b2] sm:$0xff]
    %v1795 = vld [vmem:[%s1217 + $0x1ba] sm:$0xff]
    %v1796 = vld [vmem:[%s1217 + $0x1ca] sm:$0xff]
    %v1797 = vld [vmem:[%s1217 + $0x1d2] sm:$0xff]
    %v1798 = vld [vmem:[%s1217 + $0x1e2] sm:$0xff]
    %v1799 = vld [vmem:[%s1217 + $0x1ea] sm:$0xff]
    %v1800 = vld [vmem:[%s1217 + $0x1fa] sm:$0xff]
    %v1801 = vld [vmem:[%s1217 + $0x202] sm:$0xff]
    %v1802 = vld [vmem:[%s1217 + $0x212] sm:$0xff]
    %v1803 = vld [vmem:[%s1217 + $0x21a] sm:$0xff]
    %v1804 = vld [vmem:[%s1217 + $0x22a] sm:$0xff]
    %v1805 = vld [vmem:[%s1217 + $0x232] sm:$0xff]
    %v1806 = vld [vmem:[%s1217 + $0x242] sm:$0xff]
    %v1807 = vld [vmem:[%s1217 + $0x24a] sm:$0xff]
    %v1808 = vld [vmem:[%s1217 + $0x25a] sm:$0xff]
    %v1809 = vld [vmem:[%s1217 + $0x262] sm:$0xff]
    %v1810 = vld [vmem:[%s1217 + $0x272] sm:$0xff]
    %v1811 = vld [vmem:[%s1217 + $0x27a] sm:$0xff]
    %v1812 = vld [vmem:[%s1217 + $0x28a] sm:$0xff]
    %v1813 = vld [vmem:[%s1217 + $0x292] sm:$0xff]
    %v1814 = vld [vmem:[%s1217 + $0x2a2] sm:$0xff]
    %v1815 = vld [vmem:[%s1217 + $0x2aa] sm:$0xff]
    %v1816 = vld [vmem:[%s1217 + $0x2ba] sm:$0xff]
    %v1817 = vld [vmem:[%s1217 + $0x2c2] sm:$0xff]
    %v1818 = vld [vmem:[%s1217 + $0x2d2] sm:$0xff]
    %v1819 = vld [vmem:[%s1217 + $0x2da] sm:$0xff]
    %v1820 = vld [vmem:[%s1217 + $0x2ea] sm:$0xff]
    %v1821 = vld [vmem:[%s1217 + $0x2f2] sm:$0xff]
    %v1822 = vld [vmem:[%s1217 + $0x302] sm:$0xff]
    %v1823 = vld [vmem:[%s1217 + $0x30a] sm:$0xff]
    %v1824 = vld [vmem:[%s1217 + $0x31a] sm:$0xff]
    %v1825 = vld [vmem:[%s1217 + $0x322] sm:$0xff]
    %v1826 = vpack.c.bf16 %v1763, %v1762
    %v1827 = vpack.c.bf16 %v1765, %v1764
    %v1828 = vpack.c.bf16 %v1767, %v1766
    %v1829 = vpack.c.bf16 %v1769, %v1768
    %v1830 = vpack.c.bf16 %v1771, %v1770
    %v1831 = vpack.c.bf16 %v1773, %v1772
    %v1832 = vpack.c.bf16 %v1775, %v1774
    %v1833 = vpack.c.bf16 %v1777, %v1776
    %v1834 = vpack.c.bf16 %v1779, %v1778
    %v1835 = vpack.c.bf16 %v1781, %v1780
    %v1836 = vpack.c.bf16 %v1783, %v1782
    %v1837 = vpack.c.bf16 %v1785, %v1784
    %v1838 = vpack.c.bf16 %v1787, %v1786
    %v1839 = vpack.c.bf16 %v1789, %v1788
    %v1840 = vpack.c.bf16 %v1791, %v1790
    %v1841 = vpack.c.bf16 %v1793, %v1792
    %v1842 = vpack.c.bf16 %v1795, %v1794
    %v1843 = vpack.c.bf16 %v1797, %v1796
    %v1844 = vpack.c.bf16 %v1799, %v1798
    %v1845 = vpack.c.bf16 %v1801, %v1800
    %v1846 = vpack.c.bf16 %v1803, %v1802
    %v1847 = vpack.c.bf16 %v1805, %v1804
    %v1848 = vpack.c.bf16 %v1807, %v1806
    %v1849 = vpack.c.bf16 %v1809, %v1808
    %v1850 = vpack.c.bf16 %v1811, %v1810
    %v1851 = vpack.c.bf16 %v1813, %v1812
    %v1852 = vpack.c.bf16 %v1815, %v1814
    %v1853 = vpack.c.bf16 %v1817, %v1816
    %v1854 = vpack.c.bf16 %v1819, %v1818
    %v1855 = vpack.c.bf16 %v1821, %v1820
    %v1856 = vpack.c.bf16 %v1823, %v1822
    %v1857 = vpack.c.bf16 %v1825, %v1824
    %s1858 = scalar_lea.vmem [#allocation2], 48
    %v1859 = vld [vmem:[%s1858] sm:$0xff]
    %v1860 = vld [vmem:[%s1858 + $0x8] sm:$0xff]
    %v1861 = vld [vmem:[%s1858 + $0x18] sm:$0xff]
    %v1862 = vld [vmem:[%s1858 + $0x20] sm:$0xff]
    %v1863 = vld [vmem:[%s1858 + $0x30] sm:$0xff]
    %v1864 = vld [vmem:[%s1858 + $0x38] sm:$0xff]
    %v1865 = vld [vmem:[%s1858 + $0x48] sm:$0xff]
    %v1866 = vld [vmem:[%s1858 + $0x50] sm:$0xff]
    %v1867 = vld [vmem:[%s1858 + $0x60] sm:$0xff]
    %v1868 = vld [vmem:[%s1858 + $0x68] sm:$0xff]
    %v1869 = vld [vmem:[%s1858 + $0x78] sm:$0xff]
    %v1870 = vld [vmem:[%s1858 + $0x80] sm:$0xff]
    %v1871 = vld [vmem:[%s1858 + $0x90] sm:$0xff]
    %v1872 = vld [vmem:[%s1858 + $0x98] sm:$0xff]
    %v1873 = vld [vmem:[%s1858 + $0xa8] sm:$0xff]
    %v1874 = vld [vmem:[%s1858 + $0xb0] sm:$0xff]
    %v1875 = vld [vmem:[%s1858 + $0xc0] sm:$0xff]
    %v1876 = vld [vmem:[%s1858 + $0xc8] sm:$0xff]
    %v1877 = vld [vmem:[%s1858 + $0xd8] sm:$0xff]
    %v1878 = vld [vmem:[%s1858 + $0xe0] sm:$0xff]
    %v1879 = vld [vmem:[%s1858 + $0xf0] sm:$0xff]
    %v1880 = vld [vmem:[%s1858 + $0xf8] sm:$0xff]
    %v1881 = vld [vmem:[%s1858 + $0x108] sm:$0xff]
    %v1882 = vld [vmem:[%s1858 + $0x110] sm:$0xff]
    %v1883 = vld [vmem:[%s1858 + $0x120] sm:$0xff]
    %v1884 = vld [vmem:[%s1858 + $0x128] sm:$0xff]
    %v1885 = vld [vmem:[%s1858 + $0x138] sm:$0xff]
    %v1886 = vld [vmem:[%s1858 + $0x140] sm:$0xff]
    %v1887 = vld [vmem:[%s1858 + $0x150] sm:$0xff]
    %v1888 = vld [vmem:[%s1858 + $0x158] sm:$0xff]
    %v1889 = vld [vmem:[%s1858 + $0x168] sm:$0xff]
    %v1890 = vld [vmem:[%s1858 + $0x170] sm:$0xff]
    %v1891 = vld [vmem:[%s1858 + $0x1b0] sm:$0xff]
    %v1892 = vld [vmem:[%s1858 + $0x1b8] sm:$0xff]
    %v1893 = vld [vmem:[%s1858 + $0x1c8] sm:$0xff]
    %v1894 = vld [vmem:[%s1858 + $0x1d0] sm:$0xff]
    %v1895 = vld [vmem:[%s1858 + $0x1e0] sm:$0xff]
    %v1896 = vld [vmem:[%s1858 + $0x1e8] sm:$0xff]
    %v1897 = vld [vmem:[%s1858 + $0x1f8] sm:$0xff]
    %v1898 = vld [vmem:[%s1858 + $0x200] sm:$0xff]
    %v1899 = vld [vmem:[%s1858 + $0x210] sm:$0xff]
    %v1900 = vld [vmem:[%s1858 + $0x218] sm:$0xff]
    %v1901 = vld [vmem:[%s1858 + $0x228] sm:$0xff]
    %v1902 = vld [vmem:[%s1858 + $0x230] sm:$0xff]
    %v1903 = vld [vmem:[%s1858 + $0x240] sm:$0xff]
    %v1904 = vld [vmem:[%s1858 + $0x248] sm:$0xff]
    %v1905 = vld [vmem:[%s1858 + $0x258] sm:$0xff]
    %v1906 = vld [vmem:[%s1858 + $0x260] sm:$0xff]
    %v1907 = vld [vmem:[%s1858 + $0x270] sm:$0xff]
    %v1908 = vld [vmem:[%s1858 + $0x278] sm:$0xff]
    %v1909 = vld [vmem:[%s1858 + $0x288] sm:$0xff]
    %v1910 = vld [vmem:[%s1858 + $0x290] sm:$0xff]
    %v1911 = vld [vmem:[%s1858 + $0x2a0] sm:$0xff]
    %v1912 = vld [vmem:[%s1858 + $0x2a8] sm:$0xff]
    %v1913 = vld [vmem:[%s1858 + $0x2b8] sm:$0xff]
    %v1914 = vld [vmem:[%s1858 + $0x2c0] sm:$0xff]
    %v1915 = vld [vmem:[%s1858 + $0x2d0] sm:$0xff]
    %v1916 = vld [vmem:[%s1858 + $0x2d8] sm:$0xff]
    %v1917 = vld [vmem:[%s1858 + $0x2e8] sm:$0xff]
    %v1918 = vld [vmem:[%s1858 + $0x2f0] sm:$0xff]
    %v1919 = vld [vmem:[%s1858 + $0x300] sm:$0xff]
    %v1920 = vld [vmem:[%s1858 + $0x308] sm:$0xff]
    %v1921 = vld [vmem:[%s1858 + $0x318] sm:$0xff]
    %v1922 = vld [vmem:[%s1858 + $0x320] sm:$0xff]
    %v1923 = vpack.c.bf16 %v1860, %v1859
    %v1924 = vpack.c.bf16 %v1862, %v1861
    %v1925 = vpack.c.bf16 %v1864, %v1863
    %v1926 = vpack.c.bf16 %v1866, %v1865
    %v1927 = vpack.c.bf16 %v1868, %v1867
    %v1928 = vpack.c.bf16 %v1870, %v1869
    %v1929 = vpack.c.bf16 %v1872, %v1871
    %v1930 = vpack.c.bf16 %v1874, %v1873
    %v1931 = vpack.c.bf16 %v1876, %v1875
    %v1932 = vpack.c.bf16 %v1878, %v1877
    %v1933 = vpack.c.bf16 %v1880, %v1879
    %v1934 = vpack.c.bf16 %v1882, %v1881
    %v1935 = vpack.c.bf16 %v1884, %v1883
    %v1936 = vpack.c.bf16 %v1886, %v1885
    %v1937 = vpack.c.bf16 %v1888, %v1887
    %v1938 = vpack.c.bf16 %v1890, %v1889
    %v1939 = vpack.c.bf16 %v1892, %v1891
    %v1940 = vpack.c.bf16 %v1894, %v1893
    %v1941 = vpack.c.bf16 %v1896, %v1895
    %v1942 = vpack.c.bf16 %v1898, %v1897
    %v1943 = vpack.c.bf16 %v1900, %v1899
    %v1944 = vpack.c.bf16 %v1902, %v1901
    %v1945 = vpack.c.bf16 %v1904, %v1903
    %v1946 = vpack.c.bf16 %v1906, %v1905
    %v1947 = vpack.c.bf16 %v1908, %v1907
    %v1948 = vpack.c.bf16 %v1910, %v1909
    %v1949 = vpack.c.bf16 %v1912, %v1911
    %v1950 = vpack.c.bf16 %v1914, %v1913
    %v1951 = vpack.c.bf16 %v1916, %v1915
    %v1952 = vpack.c.bf16 %v1918, %v1917
    %v1953 = vpack.c.bf16 %v1920, %v1919
    %v1954 = vpack.c.bf16 %v1922, %v1921
    %v1955 = vld [vmem:[%s1858 + $0x1] sm:$0xff]
    %v1956 = vld [vmem:[%s1858 + $0x9] sm:$0xff]
    %v1957 = vld [vmem:[%s1858 + $0x19] sm:$0xff]
    %v1958 = vld [vmem:[%s1858 + $0x21] sm:$0xff]
    %v1959 = vld [vmem:[%s1858 + $0x31] sm:$0xff]
    %v1960 = vld [vmem:[%s1858 + $0x39] sm:$0xff]
    %v1961 = vld [vmem:[%s1858 + $0x49] sm:$0xff]
    %v1962 = vld [vmem:[%s1858 + $0x51] sm:$0xff]
    %v1963 = vld [vmem:[%s1858 + $0x61] sm:$0xff]
    %v1964 = vld [vmem:[%s1858 + $0x69] sm:$0xff]
    %v1965 = vld [vmem:[%s1858 + $0x79] sm:$0xff]
    %v1966 = vld [vmem:[%s1858 + $0x81] sm:$0xff]
    %v1967 = vld [vmem:[%s1858 + $0x91] sm:$0xff]
    %v1968 = vld [vmem:[%s1858 + $0x99] sm:$0xff]
    %v1969 = vld [vmem:[%s1858 + $0xa9] sm:$0xff]
    %v1970 = vld [vmem:[%s1858 + $0xb1] sm:$0xff]
    %v1971 = vld [vmem:[%s1858 + $0xc1] sm:$0xff]
    %v1972 = vld [vmem:[%s1858 + $0xc9] sm:$0xff]
    %v1973 = vld [vmem:[%s1858 + $0xd9] sm:$0xff]
    %v1974 = vld [vmem:[%s1858 + $0xe1] sm:$0xff]
    %v1975 = vld [vmem:[%s1858 + $0xf1] sm:$0xff]
    %v1976 = vld [vmem:[%s1858 + $0xf9] sm:$0xff]
    %v1977 = vld [vmem:[%s1858 + $0x109] sm:$0xff]
    %v1978 = vld [vmem:[%s1858 + $0x111] sm:$0xff]
    %v1979 = vld [vmem:[%s1858 + $0x121] sm:$0xff]
    %v1980 = vld [vmem:[%s1858 + $0x129] sm:$0xff]
    %v1981 = vld [vmem:[%s1858 + $0x139] sm:$0xff]
    %v1982 = vld [vmem:[%s1858 + $0x141] sm:$0xff]
    %v1983 = vld [vmem:[%s1858 + $0x151] sm:$0xff]
    %v1984 = vld [vmem:[%s1858 + $0x159] sm:$0xff]
    %v1985 = vld [vmem:[%s1858 + $0x169] sm:$0xff]
    %v1986 = vld [vmem:[%s1858 + $0x171] sm:$0xff]
    %v1987 = vld [vmem:[%s1858 + $0x1b1] sm:$0xff]
    %v1988 = vld [vmem:[%s1858 + $0x1b9] sm:$0xff]
    %v1989 = vld [vmem:[%s1858 + $0x1c9] sm:$0xff]
    %v1990 = vld [vmem:[%s1858 + $0x1d1] sm:$0xff]
    %v1991 = vld [vmem:[%s1858 + $0x1e1] sm:$0xff]
    %v1992 = vld [vmem:[%s1858 + $0x1e9] sm:$0xff]
    %v1993 = vld [vmem:[%s1858 + $0x1f9] sm:$0xff]
    %v1994 = vld [vmem:[%s1858 + $0x201] sm:$0xff]
    %v1995 = vld [vmem:[%s1858 + $0x211] sm:$0xff]
    %v1996 = vld [vmem:[%s1858 + $0x219] sm:$0xff]
    %v1997 = vld [vmem:[%s1858 + $0x229] sm:$0xff]
    %v1998 = vld [vmem:[%s1858 + $0x231] sm:$0xff]
    %v1999 = vld [vmem:[%s1858 + $0x241] sm:$0xff]
    %v2000 = vld [vmem:[%s1858 + $0x249] sm:$0xff]
    %v2001 = vld [vmem:[%s1858 + $0x259] sm:$0xff]
    %v2002 = vld [vmem:[%s1858 + $0x261] sm:$0xff]
    %v2003 = vld [vmem:[%s1858 + $0x271] sm:$0xff]
    %v2004 = vld [vmem:[%s1858 + $0x279] sm:$0xff]
    %v2005 = vld [vmem:[%s1858 + $0x289] sm:$0xff]
    %v2006 = vld [vmem:[%s1858 + $0x291] sm:$0xff]
    %v2007 = vld [vmem:[%s1858 + $0x2a1] sm:$0xff]
    %v2008 = vld [vmem:[%s1858 + $0x2a9] sm:$0xff]
    %v2009 = vld [vmem:[%s1858 + $0x2b9] sm:$0xff]
    %v2010 = vld [vmem:[%s1858 + $0x2c1] sm:$0xff]
    %v2011 = vld [vmem:[%s1858 + $0x2d1] sm:$0xff]
    %v2012 = vld [vmem:[%s1858 + $0x2d9] sm:$0xff]
    %v2013 = vld [vmem:[%s1858 + $0x2e9] sm:$0xff]
    %v2014 = vld [vmem:[%s1858 + $0x2f1] sm:$0xff]
    %v2015 = vld [vmem:[%s1858 + $0x301] sm:$0xff]
    %v2016 = vld [vmem:[%s1858 + $0x309] sm:$0xff]
    %v2017 = vld [vmem:[%s1858 + $0x319] sm:$0xff]
    %v2018 = vld [vmem:[%s1858 + $0x321] sm:$0xff]
    %v2019 = vpack.c.bf16 %v1956, %v1955
    %v2020 = vpack.c.bf16 %v1958, %v1957
    %v2021 = vpack.c.bf16 %v1960, %v1959
    %v2022 = vpack.c.bf16 %v1962, %v1961
    %v2023 = vpack.c.bf16 %v1964, %v1963
    %v2024 = vpack.c.bf16 %v1966, %v1965
    %v2025 = vpack.c.bf16 %v1968, %v1967
    %v2026 = vpack.c.bf16 %v1970, %v1969
    %v2027 = vpack.c.bf16 %v1972, %v1971
    %v2028 = vpack.c.bf16 %v1974, %v1973
    %v2029 = vpack.c.bf16 %v1976, %v1975
    %v2030 = vpack.c.bf16 %v1978, %v1977
    %v2031 = vpack.c.bf16 %v1980, %v1979
    %v2032 = vpack.c.bf16 %v1982, %v1981
    %v2033 = vpack.c.bf16 %v1984, %v1983
    %v2034 = vpack.c.bf16 %v1986, %v1985
    %v2035 = vpack.c.bf16 %v1988, %v1987
    %v2036 = vpack.c.bf16 %v1990, %v1989
    %v2037 = vpack.c.bf16 %v1992, %v1991
    %v2038 = vpack.c.bf16 %v1994, %v1993
    %v2039 = vpack.c.bf16 %v1996, %v1995
    %v2040 = vpack.c.bf16 %v1998, %v1997
    %v2041 = vpack.c.bf16 %v2000, %v1999
    %v2042 = vpack.c.bf16 %v2002, %v2001
    %v2043 = vpack.c.bf16 %v2004, %v2003
    %v2044 = vpack.c.bf16 %v2006, %v2005
    %v2045 = vpack.c.bf16 %v2008, %v2007
    %v2046 = vpack.c.bf16 %v2010, %v2009
    %v2047 = vpack.c.bf16 %v2012, %v2011
    %v2048 = vpack.c.bf16 %v2014, %v2013
    %v2049 = vpack.c.bf16 %v2016, %v2015
    %v2050 = vpack.c.bf16 %v2018, %v2017
    %v2051 = vld [vmem:[%s1858 + $0x2] sm:$0xff]
    %v2052 = vld [vmem:[%s1858 + $0xa] sm:$0xff]
    %v2053 = vld [vmem:[%s1858 + $0x1a] sm:$0xff]
    %v2054 = vld [vmem:[%s1858 + $0x22] sm:$0xff]
    %v2055 = vld [vmem:[%s1858 + $0x32] sm:$0xff]
    %v2056 = vld [vmem:[%s1858 + $0x3a] sm:$0xff]
    %v2057 = vld [vmem:[%s1858 + $0x4a] sm:$0xff]
    %v2058 = vld [vmem:[%s1858 + $0x52] sm:$0xff]
    %v2059 = vld [vmem:[%s1858 + $0x62] sm:$0xff]
    %v2060 = vld [vmem:[%s1858 + $0x6a] sm:$0xff]
    %v2061 = vld [vmem:[%s1858 + $0x7a] sm:$0xff]
    %v2062 = vld [vmem:[%s1858 + $0x82] sm:$0xff]
    %v2063 = vld [vmem:[%s1858 + $0x92] sm:$0xff]
    %v2064 = vld [vmem:[%s1858 + $0x9a] sm:$0xff]
    %v2065 = vld [vmem:[%s1858 + $0xaa] sm:$0xff]
    %v2066 = vld [vmem:[%s1858 + $0xb2] sm:$0xff]
    %v2067 = vld [vmem:[%s1858 + $0xc2] sm:$0xff]
    %v2068 = vld [vmem:[%s1858 + $0xca] sm:$0xff]
    %v2069 = vld [vmem:[%s1858 + $0xda] sm:$0xff]
    %v2070 = vld [vmem:[%s1858 + $0xe2] sm:$0xff]
    %v2071 = vld [vmem:[%s1858 + $0xf2] sm:$0xff]
    %v2072 = vld [vmem:[%s1858 + $0xfa] sm:$0xff]
    %v2073 = vld [vmem:[%s1858 + $0x10a] sm:$0xff]
    %v2074 = vld [vmem:[%s1858 + $0x112] sm:$0xff]
    %v2075 = vld [vmem:[%s1858 + $0x122] sm:$0xff]
    %v2076 = vld [vmem:[%s1858 + $0x12a] sm:$0xff]
    %v2077 = vld [vmem:[%s1858 + $0x13a] sm:$0xff]
    %v2078 = vld [vmem:[%s1858 + $0x142] sm:$0xff]
    %v2079 = vld [vmem:[%s1858 + $0x152] sm:$0xff]
    %v2080 = vld [vmem:[%s1858 + $0x15a] sm:$0xff]
    %v2081 = vld [vmem:[%s1858 + $0x16a] sm:$0xff]
    %v2082 = vld [vmem:[%s1858 + $0x172] sm:$0xff]
    %v2083 = vld [vmem:[%s1858 + $0x1b2] sm:$0xff]
    %v2084 = vld [vmem:[%s1858 + $0x1ba] sm:$0xff]
    %v2085 = vld [vmem:[%s1858 + $0x1ca] sm:$0xff]
    %v2086 = vld [vmem:[%s1858 + $0x1d2] sm:$0xff]
    %v2087 = vld [vmem:[%s1858 + $0x1e2] sm:$0xff]
    %v2088 = vld [vmem:[%s1858 + $0x1ea] sm:$0xff]
    %v2089 = vld [vmem:[%s1858 + $0x1fa] sm:$0xff]
    %v2090 = vld [vmem:[%s1858 + $0x202] sm:$0xff]
    %v2091 = vld [vmem:[%s1858 + $0x212] sm:$0xff]
    %v2092 = vld [vmem:[%s1858 + $0x21a] sm:$0xff]
    %v2093 = vld [vmem:[%s1858 + $0x22a] sm:$0xff]
    %v2094 = vld [vmem:[%s1858 + $0x232] sm:$0xff]
    %v2095 = vld [vmem:[%s1858 + $0x242] sm:$0xff]
    %v2096 = vld [vmem:[%s1858 + $0x24a] sm:$0xff]
    %v2097 = vld [vmem:[%s1858 + $0x25a] sm:$0xff]
    %v2098 = vld [vmem:[%s1858 + $0x262] sm:$0xff]
    %v2099 = vld [vmem:[%s1858 + $0x272] sm:$0xff]
    %v2100 = vld [vmem:[%s1858 + $0x27a] sm:$0xff]
    %v2101 = vld [vmem:[%s1858 + $0x28a] sm:$0xff]
    %v2102 = vld [vmem:[%s1858 + $0x292] sm:$0xff]
    %v2103 = vld [vmem:[%s1858 + $0x2a2] sm:$0xff]
    %v2104 = vld [vmem:[%s1858 + $0x2aa] sm:$0xff]
    %v2105 = vld [vmem:[%s1858 + $0x2ba] sm:$0xff]
    %v2106 = vld [vmem:[%s1858 + $0x2c2] sm:$0xff]
    %v2107 = vld [vmem:[%s1858 + $0x2d2] sm:$0xff]
    %v2108 = vld [vmem:[%s1858 + $0x2da] sm:$0xff]
    %v2109 = vld [vmem:[%s1858 + $0x2ea] sm:$0xff]
    %v2110 = vld [vmem:[%s1858 + $0x2f2] sm:$0xff]
    %v2111 = vld [vmem:[%s1858 + $0x302] sm:$0xff]
    %v2112 = vld [vmem:[%s1858 + $0x30a] sm:$0xff]
    %v2113 = vld [vmem:[%s1858 + $0x31a] sm:$0xff]
    %v2114 = vld [vmem:[%s1858 + $0x322] sm:$0xff]
    %v2115 = vpack.c.bf16 %v2052, %v2051
    %v2116 = vpack.c.bf16 %v2054, %v2053
    %v2117 = vpack.c.bf16 %v2056, %v2055
    %v2118 = vpack.c.bf16 %v2058, %v2057
    %v2119 = vpack.c.bf16 %v2060, %v2059
    %v2120 = vpack.c.bf16 %v2062, %v2061
    %v2121 = vpack.c.bf16 %v2064, %v2063
    %v2122 = vpack.c.bf16 %v2066, %v2065
    %v2123 = vpack.c.bf16 %v2068, %v2067
    %v2124 = vpack.c.bf16 %v2070, %v2069
    %v2125 = vpack.c.bf16 %v2072, %v2071
    %v2126 = vpack.c.bf16 %v2074, %v2073
    %v2127 = vpack.c.bf16 %v2076, %v2075
    %v2128 = vpack.c.bf16 %v2078, %v2077
    %v2129 = vpack.c.bf16 %v2080, %v2079
    %v2130 = vpack.c.bf16 %v2082, %v2081
    %v2131 = vpack.c.bf16 %v2084, %v2083
    %v2132 = vpack.c.bf16 %v2086, %v2085
    %v2133 = vpack.c.bf16 %v2088, %v2087
    %v2134 = vpack.c.bf16 %v2090, %v2089
    %v2135 = vpack.c.bf16 %v2092, %v2091
    %v2136 = vpack.c.bf16 %v2094, %v2093
    %v2137 = vpack.c.bf16 %v2096, %v2095
    %v2138 = vpack.c.bf16 %v2098, %v2097
    %v2139 = vpack.c.bf16 %v2100, %v2099
    %v2140 = vpack.c.bf16 %v2102, %v2101
    %v2141 = vpack.c.bf16 %v2104, %v2103
    %v2142 = vpack.c.bf16 %v2106, %v2105
    %v2143 = vpack.c.bf16 %v2108, %v2107
    %v2144 = vpack.c.bf16 %v2110, %v2109
    %v2145 = vpack.c.bf16 %v2112, %v2111
    %v2146 = vpack.c.bf16 %v2114, %v2113
    %2179 = vrot.lane.b32.xlu0 %v1442, 32
    %v2180 = vpop.permute.xlu0 %2179
    %2181 = vrot.lane.b32.xlu0 %v1443, 32
    %v2182 = vpop.permute.xlu0 %2181
    %2183 = vrot.lane.b32.xlu0 %v1444, 32
    %v2184 = vpop.permute.xlu0 %2183
    %2185 = vrot.lane.b32.xlu0 %v1445, 32
    %v2186 = vpop.permute.xlu0 %2185
    %2187 = vrot.lane.b32.xlu0 %v1446, 32
    %v2188 = vpop.permute.xlu0 %2187
    %2189 = vrot.lane.b32.xlu0 %v1447, 32
    %v2190 = vpop.permute.xlu0 %2189
    %2191 = vrot.lane.b32.xlu0 %v1448, 32
    %v2192 = vpop.permute.xlu0 %2191
    %2193 = vrot.lane.b32.xlu0 %v1449, 32
    %v2194 = vpop.permute.xlu0 %2193
    %2195 = vrot.lane.b32.xlu0 %v1450, 32
    %v2196 = vpop.permute.xlu0 %2195
    %2197 = vrot.lane.b32.xlu0 %v1451, 32
    %v2198 = vpop.permute.xlu0 %2197
    %2199 = vrot.lane.b32.xlu0 %v1452, 32
    %v2200 = vpop.permute.xlu0 %2199
    %2201 = vrot.lane.b32.xlu0 %v1453, 32
    %v2202 = vpop.permute.xlu0 %2201
    %2203 = vrot.lane.b32.xlu0 %v1454, 32
    %v2204 = vpop.permute.xlu0 %2203
    %2205 = vrot.lane.b32.xlu0 %v1455, 32
    %v2206 = vpop.permute.xlu0 %2205
    %2207 = vrot.lane.b32.xlu0 %v1456, 32
    %v2208 = vpop.permute.xlu0 %2207
    %2209 = vrot.lane.b32.xlu0 %v1457, 32
    %v2210 = vpop.permute.xlu0 %2209
    %2211 = vrot.lane.b32.xlu0 %v1458, 32
    %v2212 = vpop.permute.xlu0 %2211
    %2213 = vrot.lane.b32.xlu0 %v1459, 32
    %v2214 = vpop.permute.xlu0 %2213
    %2215 = vrot.lane.b32.xlu0 %v1460, 32
    %v2216 = vpop.permute.xlu0 %2215
    %2217 = vrot.lane.b32.xlu0 %v1461, 32
    %v2218 = vpop.permute.xlu0 %2217
    %2219 = vrot.lane.b32.xlu0 %v1462, 32
    %v2220 = vpop.permute.xlu0 %2219
    %2221 = vrot.lane.b32.xlu0 %v1463, 32
    %v2222 = vpop.permute.xlu0 %2221
    %2223 = vrot.lane.b32.xlu0 %v1464, 32
    %v2224 = vpop.permute.xlu0 %2223
    %2225 = vrot.lane.b32.xlu0 %v1465, 32
    %v2226 = vpop.permute.xlu0 %2225
    %2227 = vrot.lane.b32.xlu0 %v1466, 32
    %v2228 = vpop.permute.xlu0 %2227
    %2229 = vrot.lane.b32.xlu0 %v1467, 32
    %v2230 = vpop.permute.xlu0 %2229
    %2231 = vrot.lane.b32.xlu0 %v1468, 32
    %v2232 = vpop.permute.xlu0 %2231
    %2233 = vrot.lane.b32.xlu0 %v1469, 32
    %v2234 = vpop.permute.xlu0 %2233
    %2235 = vrot.lane.b32.xlu0 %v1470, 32
    %v2236 = vpop.permute.xlu0 %2235
    %2237 = vrot.lane.b32.xlu0 %v1471, 32
    %v2238 = vpop.permute.xlu0 %2237
    %2239 = vrot.lane.b32.xlu0 %v1472, 32
    %v2240 = vpop.permute.xlu0 %2239
    %2241 = vrot.lane.b32.xlu0 %v1473, 32
    %v2242 = vpop.permute.xlu0 %2241
    %2275 = vrot.lane.b32.xlu0 %v1538, 64
    %v2276 = vpop.permute.xlu0 %2275
    %2277 = vrot.lane.b32.xlu0 %v1539, 64
    %v2278 = vpop.permute.xlu0 %2277
    %2279 = vrot.lane.b32.xlu0 %v1540, 64
    %v2280 = vpop.permute.xlu0 %2279
    %2281 = vrot.lane.b32.xlu0 %v1541, 64
    %v2282 = vpop.permute.xlu0 %2281
    %2283 = vrot.lane.b32.xlu0 %v1542, 64
    %v2284 = vpop.permute.xlu0 %2283
    %2285 = vrot.lane.b32.xlu0 %v1543, 64
    %v2286 = vpop.permute.xlu0 %2285
    %2287 = vrot.lane.b32.xlu0 %v1544, 64
    %v2288 = vpop.permute.xlu0 %2287
    %2289 = vrot.lane.b32.xlu0 %v1545, 64
    %v2290 = vpop.permute.xlu0 %2289
    %2291 = vrot.lane.b32.xlu0 %v1546, 64
    %v2292 = vpop.permute.xlu0 %2291
    %2293 = vrot.lane.b32.xlu0 %v1547, 64
    %v2294 = vpop.permute.xlu0 %2293
    %2295 = vrot.lane.b32.xlu0 %v1548, 64
    %v2296 = vpop.permute.xlu0 %2295
    %2297 = vrot.lane.b32.xlu0 %v1549, 64
    %v2298 = vpop.permute.xlu0 %2297
    %2299 = vrot.lane.b32.xlu0 %v1550, 64
    %v2300 = vpop.permute.xlu0 %2299
    %2301 = vrot.lane.b32.xlu0 %v1551, 64
    %v2302 = vpop.permute.xlu0 %2301
    %2303 = vrot.lane.b32.xlu0 %v1552, 64
    %v2304 = vpop.permute.xlu0 %2303
    %2305 = vrot.lane.b32.xlu0 %v1553, 64
    %v2306 = vpop.permute.xlu0 %2305
    %2307 = vrot.lane.b32.xlu0 %v1554, 64
    %v2308 = vpop.permute.xlu0 %2307
    %2309 = vrot.lane.b32.xlu0 %v1555, 64
    %v2310 = vpop.permute.xlu0 %2309
    %2311 = vrot.lane.b32.xlu0 %v1556, 64
    %v2312 = vpop.permute.xlu0 %2311
    %2313 = vrot.lane.b32.xlu0 %v1557, 64
    %v2314 = vpop.permute.xlu0 %2313
    %2315 = vrot.lane.b32.xlu0 %v1558, 64
    %v2316 = vpop.permute.xlu0 %2315
    %2317 = vrot.lane.b32.xlu0 %v1559, 64
    %v2318 = vpop.permute.xlu0 %2317
    %2319 = vrot.lane.b32.xlu0 %v1560, 64
    %v2320 = vpop.permute.xlu0 %2319
    %2321 = vrot.lane.b32.xlu0 %v1561, 64
    %v2322 = vpop.permute.xlu0 %2321
    %2323 = vrot.lane.b32.xlu0 %v1562, 64
    %v2324 = vpop.permute.xlu0 %2323
    %2325 = vrot.lane.b32.xlu0 %v1563, 64
    %v2326 = vpop.permute.xlu0 %2325
    %2327 = vrot.lane.b32.xlu0 %v1564, 64
    %v2328 = vpop.permute.xlu0 %2327
    %2329 = vrot.lane.b32.xlu0 %v1565, 64
    %v2330 = vpop.permute.xlu0 %2329
    %2331 = vrot.lane.b32.xlu0 %v1566, 64
    %v2332 = vpop.permute.xlu0 %2331
    %2333 = vrot.lane.b32.xlu0 %v1567, 64
    %v2334 = vpop.permute.xlu0 %2333
    %2335 = vrot.lane.b32.xlu0 %v1568, 64
    %v2336 = vpop.permute.xlu0 %2335
    %2337 = vrot.lane.b32.xlu0 %v1569, 64
    %v2338 = vpop.permute.xlu0 %2337
    %2371 = vrot.lane.b32.xlu0 %v1634, 96
    %v2372 = vpop.permute.xlu0 %2371
    %2373 = vrot.lane.b32.xlu0 %v1635, 96
    %v2374 = vpop.permute.xlu0 %2373
    %2375 = vrot.lane.b32.xlu0 %v1636, 96
    %v2376 = vpop.permute.xlu0 %2375
    %2377 = vrot.lane.b32.xlu0 %v1637, 96
    %v2378 = vpop.permute.xlu0 %2377
    %2379 = vrot.lane.b32.xlu0 %v1638, 96
    %v2380 = vpop.permute.xlu0 %2379
    %2381 = vrot.lane.b32.xlu0 %v1639, 96
    %v2382 = vpop.permute.xlu0 %2381
    %2383 = vrot.lane.b32.xlu0 %v1640, 96
    %v2384 = vpop.permute.xlu0 %2383
    %2385 = vrot.lane.b32.xlu0 %v1641, 96
    %v2386 = vpop.permute.xlu0 %2385
    %2387 = vrot.lane.b32.xlu0 %v1642, 96
    %v2388 = vpop.permute.xlu0 %2387
    %2389 = vrot.lane.b32.xlu0 %v1643, 96
    %v2390 = vpop.permute.xlu0 %2389
    %2391 = vrot.lane.b32.xlu0 %v1644, 96
    %v2392 = vpop.permute.xlu0 %2391
    %2393 = vrot.lane.b32.xlu0 %v1645, 96
    %v2394 = vpop.permute.xlu0 %2393
    %2395 = vrot.lane.b32.xlu0 %v1646, 96
    %v2396 = vpop.permute.xlu0 %2395
    %2397 = vrot.lane.b32.xlu0 %v1647, 96
    %v2398 = vpop.permute.xlu0 %2397
    %2399 = vrot.lane.b32.xlu0 %v1648, 96
    %v2400 = vpop.permute.xlu0 %2399
    %2401 = vrot.lane.b32.xlu0 %v1649, 96
    %v2402 = vpop.permute.xlu0 %2401
    %2403 = vrot.lane.b32.xlu0 %v1650, 96
    %v2404 = vpop.permute.xlu0 %2403
    %2405 = vrot.lane.b32.xlu0 %v1651, 96
    %v2406 = vpop.permute.xlu0 %2405
    %2407 = vrot.lane.b32.xlu0 %v1652, 96
    %v2408 = vpop.permute.xlu0 %2407
    %2409 = vrot.lane.b32.xlu0 %v1653, 96
    %v2410 = vpop.permute.xlu0 %2409
    %2411 = vrot.lane.b32.xlu0 %v1654, 96
    %v2412 = vpop.permute.xlu0 %2411
    %2413 = vrot.lane.b32.xlu0 %v1655, 96
    %v2414 = vpop.permute.xlu0 %2413
    %2415 = vrot.lane.b32.xlu0 %v1656, 96
    %v2416 = vpop.permute.xlu0 %2415
    %2417 = vrot.lane.b32.xlu0 %v1657, 96
    %v2418 = vpop.permute.xlu0 %2417
    %2419 = vrot.lane.b32.xlu0 %v1658, 96
    %v2420 = vpop.permute.xlu0 %2419
    %2421 = vrot.lane.b32.xlu0 %v1659, 96
    %v2422 = vpop.permute.xlu0 %2421
    %2423 = vrot.lane.b32.xlu0 %v1660, 96
    %v2424 = vpop.permute.xlu0 %2423
    %2425 = vrot.lane.b32.xlu0 %v1661, 96
    %v2426 = vpop.permute.xlu0 %2425
    %2427 = vrot.lane.b32.xlu0 %v1662, 96
    %v2428 = vpop.permute.xlu0 %2427
    %2429 = vrot.lane.b32.xlu0 %v1663, 96
    %v2430 = vpop.permute.xlu0 %2429
    %2431 = vrot.lane.b32.xlu0 %v1664, 96
    %v2432 = vpop.permute.xlu0 %2431
    %2433 = vrot.lane.b32.xlu0 %v1665, 96
    %v2434 = vpop.permute.xlu0 %2433
    %2467 = vrot.lane.b32.xlu0 %v1826, 32
    %v2468 = vpop.permute.xlu0 %2467
    %2469 = vrot.lane.b32.xlu0 %v1827, 32
    %v2470 = vpop.permute.xlu0 %2469
    %2471 = vrot.lane.b32.xlu0 %v1828, 32
    %v2472 = vpop.permute.xlu0 %2471
    %2473 = vrot.lane.b32.xlu0 %v1829, 32
    %v2474 = vpop.permute.xlu0 %2473
    %2475 = vrot.lane.b32.xlu0 %v1830, 32
    %v2476 = vpop.permute.xlu0 %2475
    %2477 = vrot.lane.b32.xlu0 %v1831, 32
    %v2478 = vpop.permute.xlu0 %2477
    %2479 = vrot.lane.b32.xlu0 %v1832, 32
    %v2480 = vpop.permute.xlu0 %2479
    %2481 = vrot.lane.b32.xlu0 %v1833, 32
    %v2482 = vpop.permute.xlu0 %2481
    %2483 = vrot.lane.b32.xlu0 %v1834, 32
    %v2484 = vpop.permute.xlu0 %2483
    %2485 = vrot.lane.b32.xlu0 %v1835, 32
    %v2486 = vpop.permute.xlu0 %2485
    %2487 = vrot.lane.b32.xlu0 %v1836, 32
    %v2488 = vpop.permute.xlu0 %2487
    %2489 = vrot.lane.b32.xlu0 %v1837, 32
    %v2490 = vpop.permute.xlu0 %2489
    %2491 = vrot.lane.b32.xlu0 %v1838, 32
    %v2492 = vpop.permute.xlu0 %2491
    %2493 = vrot.lane.b32.xlu0 %v1839, 32
    %v2494 = vpop.permute.xlu0 %2493
    %2495 = vrot.lane.b32.xlu0 %v1840, 32
    %v2496 = vpop.permute.xlu0 %2495
    %2497 = vrot.lane.b32.xlu0 %v1841, 32
    %v2498 = vpop.permute.xlu0 %2497
    %2499 = vrot.lane.b32.xlu0 %v1842, 32
    %v2500 = vpop.permute.xlu0 %2499
    %2501 = vrot.lane.b32.xlu0 %v1843, 32
    %v2502 = vpop.permute.xlu0 %2501
    %2503 = vrot.lane.b32.xlu0 %v1844, 32
    %v2504 = vpop.permute.xlu0 %2503
    %2505 = vrot.lane.b32.xlu0 %v1845, 32
    %v2506 = vpop.permute.xlu0 %2505
    %2507 = vrot.lane.b32.xlu0 %v1846, 32
    %v2508 = vpop.permute.xlu0 %2507
    %2509 = vrot.lane.b32.xlu0 %v1847, 32
    %v2510 = vpop.permute.xlu0 %2509
    %2511 = vrot.lane.b32.xlu0 %v1848, 32
    %v2512 = vpop.permute.xlu0 %2511
    %2513 = vrot.lane.b32.xlu0 %v1849, 32
    %v2514 = vpop.permute.xlu0 %2513
    %2515 = vrot.lane.b32.xlu0 %v1850, 32
    %v2516 = vpop.permute.xlu0 %2515
    %2517 = vrot.lane.b32.xlu0 %v1851, 32
    %v2518 = vpop.permute.xlu0 %2517
    %2519 = vrot.lane.b32.xlu0 %v1852, 32
    %v2520 = vpop.permute.xlu0 %2519
    %2521 = vrot.lane.b32.xlu0 %v1853, 32
    %v2522 = vpop.permute.xlu0 %2521
    %2523 = vrot.lane.b32.xlu0 %v1854, 32
    %v2524 = vpop.permute.xlu0 %2523
    %2525 = vrot.lane.b32.xlu0 %v1855, 32
    %v2526 = vpop.permute.xlu0 %2525
    %2527 = vrot.lane.b32.xlu0 %v1856, 32
    %v2528 = vpop.permute.xlu0 %2527
    %2529 = vrot.lane.b32.xlu0 %v1857, 32
    %v2530 = vpop.permute.xlu0 %2529
    %2563 = vrot.lane.b32.xlu0 %v1923, 64
    %v2564 = vpop.permute.xlu0 %2563
    %2565 = vrot.lane.b32.xlu0 %v1924, 64
    %v2566 = vpop.permute.xlu0 %2565
    %2567 = vrot.lane.b32.xlu0 %v1925, 64
    %v2568 = vpop.permute.xlu0 %2567
    %2569 = vrot.lane.b32.xlu0 %v1926, 64
    %v2570 = vpop.permute.xlu0 %2569
    %2571 = vrot.lane.b32.xlu0 %v1927, 64
    %v2572 = vpop.permute.xlu0 %2571
    %2573 = vrot.lane.b32.xlu0 %v1928, 64
    %v2574 = vpop.permute.xlu0 %2573
    %2575 = vrot.lane.b32.xlu0 %v1929, 64
    %v2576 = vpop.permute.xlu0 %2575
    %2577 = vrot.lane.b32.xlu0 %v1930, 64
    %v2578 = vpop.permute.xlu0 %2577
    %2579 = vrot.lane.b32.xlu0 %v1931, 64
    %v2580 = vpop.permute.xlu0 %2579
    %2581 = vrot.lane.b32.xlu0 %v1932, 64
    %v2582 = vpop.permute.xlu0 %2581
    %2583 = vrot.lane.b32.xlu0 %v1933, 64
    %v2584 = vpop.permute.xlu0 %2583
    %2585 = vrot.lane.b32.xlu0 %v1934, 64
    %v2586 = vpop.permute.xlu0 %2585
    %2587 = vrot.lane.b32.xlu0 %v1935, 64
    %v2588 = vpop.permute.xlu0 %2587
    %2589 = vrot.lane.b32.xlu0 %v1936, 64
    %v2590 = vpop.permute.xlu0 %2589
    %2591 = vrot.lane.b32.xlu0 %v1937, 64
    %v2592 = vpop.permute.xlu0 %2591
    %2593 = vrot.lane.b32.xlu0 %v1938, 64
    %v2594 = vpop.permute.xlu0 %2593
    %2595 = vrot.lane.b32.xlu0 %v1939, 64
    %v2596 = vpop.permute.xlu0 %2595
    %2597 = vrot.lane.b32.xlu0 %v1940, 64
    %v2598 = vpop.permute.xlu0 %2597
    %2599 = vrot.lane.b32.xlu0 %v1941, 64
    %v2600 = vpop.permute.xlu0 %2599
    %2601 = vrot.lane.b32.xlu0 %v1942, 64
    %v2602 = vpop.permute.xlu0 %2601
    %2603 = vrot.lane.b32.xlu0 %v1943, 64
    %v2604 = vpop.permute.xlu0 %2603
    %2605 = vrot.lane.b32.xlu0 %v1944, 64
    %v2606 = vpop.permute.xlu0 %2605
    %2607 = vrot.lane.b32.xlu0 %v1945, 64
    %v2608 = vpop.permute.xlu0 %2607
    %2609 = vrot.lane.b32.xlu0 %v1946, 64
    %v2610 = vpop.permute.xlu0 %2609
    %2611 = vrot.lane.b32.xlu0 %v1947, 64
    %v2612 = vpop.permute.xlu0 %2611
    %2613 = vrot.lane.b32.xlu0 %v1948, 64
    %v2614 = vpop.permute.xlu0 %2613
    %2615 = vrot.lane.b32.xlu0 %v1949, 64
    %v2616 = vpop.permute.xlu0 %2615
    %2617 = vrot.lane.b32.xlu0 %v1950, 64
    %v2618 = vpop.permute.xlu0 %2617
    %2619 = vrot.lane.b32.xlu0 %v1951, 64
    %v2620 = vpop.permute.xlu0 %2619
    %2621 = vrot.lane.b32.xlu0 %v1952, 64
    %v2622 = vpop.permute.xlu0 %2621
    %2623 = vrot.lane.b32.xlu0 %v1953, 64
    %v2624 = vpop.permute.xlu0 %2623
    %2625 = vrot.lane.b32.xlu0 %v1954, 64
    %v2626 = vpop.permute.xlu0 %2625
    %2659 = vrot.lane.b32.xlu0 %v2019, 96
    %v2660 = vpop.permute.xlu0 %2659
    %2661 = vrot.lane.b32.xlu0 %v2020, 96
    %v2662 = vpop.permute.xlu0 %2661
    %2663 = vrot.lane.b32.xlu0 %v2021, 96
    %v2664 = vpop.permute.xlu0 %2663
    %2665 = vrot.lane.b32.xlu0 %v2022, 96
    %v2666 = vpop.permute.xlu0 %2665
    %2667 = vrot.lane.b32.xlu0 %v2023, 96
    %v2668 = vpop.permute.xlu0 %2667
    %2669 = vrot.lane.b32.xlu0 %v2024, 96
    %v2670 = vpop.permute.xlu0 %2669
    %2671 = vrot.lane.b32.xlu0 %v2025, 96
    %v2672 = vpop.permute.xlu0 %2671
    %2673 = vrot.lane.b32.xlu0 %v2026, 96
    %v2674 = vpop.permute.xlu0 %2673
    %2675 = vrot.lane.b32.xlu0 %v2027, 96
    %v2676 = vpop.permute.xlu0 %2675
    %2677 = vrot.lane.b32.xlu0 %v2028, 96
    %v2678 = vpop.permute.xlu0 %2677
    %2679 = vrot.lane.b32.xlu0 %v2029, 96
    %v2680 = vpop.permute.xlu0 %2679
    %2681 = vrot.lane.b32.xlu0 %v2030, 96
    %v2682 = vpop.permute.xlu0 %2681
    %2683 = vrot.lane.b32.xlu0 %v2031, 96
    %v2684 = vpop.permute.xlu0 %2683
    %2685 = vrot.lane.b32.xlu0 %v2032, 96
    %v2686 = vpop.permute.xlu0 %2685
    %2687 = vrot.lane.b32.xlu0 %v2033, 96
    %v2688 = vpop.permute.xlu0 %2687
    %2689 = vrot.lane.b32.xlu0 %v2034, 96
    %v2690 = vpop.permute.xlu0 %2689
    %2691 = vrot.lane.b32.xlu0 %v2035, 96
    %v2692 = vpop.permute.xlu0 %2691
    %2693 = vrot.lane.b32.xlu0 %v2036, 96
    %v2694 = vpop.permute.xlu0 %2693
    %2695 = vrot.lane.b32.xlu0 %v2037, 96
    %v2696 = vpop.permute.xlu0 %2695
    %2697 = vrot.lane.b32.xlu0 %v2038, 96
    %v2698 = vpop.permute.xlu0 %2697
    %2699 = vrot.lane.b32.xlu0 %v2039, 96
    %v2700 = vpop.permute.xlu0 %2699
    %2701 = vrot.lane.b32.xlu0 %v2040, 96
    %v2702 = vpop.permute.xlu0 %2701
    %2703 = vrot.lane.b32.xlu0 %v2041, 96
    %v2704 = vpop.permute.xlu0 %2703
    %2705 = vrot.lane.b32.xlu0 %v2042, 96
    %v2706 = vpop.permute.xlu0 %2705
    %2707 = vrot.lane.b32.xlu0 %v2043, 96
    %v2708 = vpop.permute.xlu0 %2707
    %2709 = vrot.lane.b32.xlu0 %v2044, 96
    %v2710 = vpop.permute.xlu0 %2709
    %2711 = vrot.lane.b32.xlu0 %v2045, 96
    %v2712 = vpop.permute.xlu0 %2711
    %2713 = vrot.lane.b32.xlu0 %v2046, 96
    %v2714 = vpop.permute.xlu0 %2713
    %2715 = vrot.lane.b32.xlu0 %v2047, 96
    %v2716 = vpop.permute.xlu0 %2715
    %2717 = vrot.lane.b32.xlu0 %v2048, 96
    %v2718 = vpop.permute.xlu0 %2717
    %2719 = vrot.lane.b32.xlu0 %v2049, 96
    %v2720 = vpop.permute.xlu0 %2719
    %2721 = vrot.lane.b32.xlu0 %v2050, 96
    %v2722 = vpop.permute.xlu0 %2721
    %v2725 = vsel %vm502, %v1346, %v2180
    %v2728 = vsel %vm502, %v1347, %v2182
    %v2731 = vsel %vm502, %v1348, %v2184
    %v2734 = vsel %vm502, %v1349, %v2186
    %v2737 = vsel %vm502, %v1350, %v2188
    %v2740 = vsel %vm502, %v1351, %v2190
    %v2743 = vsel %vm502, %v1352, %v2192
    %v2746 = vsel %vm502, %v1353, %v2194
    %v2749 = vsel %vm502, %v1354, %v2196
    %v2752 = vsel %vm502, %v1355, %v2198
    %v2755 = vsel %vm502, %v1356, %v2200
    %v2758 = vsel %vm502, %v1357, %v2202
    %v2761 = vsel %vm502, %v1358, %v2204
    %v2764 = vsel %vm502, %v1359, %v2206
    %v2767 = vsel %vm502, %v1360, %v2208
    %v2770 = vsel %vm502, %v1361, %v2210
    %v2773 = vsel %vm502, %v1362, %v2212
    %v2776 = vsel %vm502, %v1363, %v2214
    %v2779 = vsel %vm502, %v1364, %v2216
    %v2782 = vsel %vm502, %v1365, %v2218
    %v2785 = vsel %vm502, %v1366, %v2220
    %v2788 = vsel %vm502, %v1367, %v2222
    %v2791 = vsel %vm502, %v1368, %v2224
    %v2794 = vsel %vm502, %v1369, %v2226
    %v2797 = vsel %vm502, %v1370, %v2228
    %v2800 = vsel %vm502, %v1371, %v2230
    %v2803 = vsel %vm502, %v1372, %v2232
    %v2806 = vsel %vm502, %v1373, %v2234
    %v2809 = vsel %vm502, %v1374, %v2236
    %v2812 = vsel %vm502, %v1375, %v2238
    %v2815 = vsel %vm502, %v1376, %v2240
    %v2818 = vsel %vm502, %v1377, %v2242
    %vm2819 = vcmask 523264
    %v2821 = vsel %vm2819, %v2725, %v2276
    %v2823 = vsel %vm2819, %v2728, %v2278
    %v2825 = vsel %vm2819, %v2731, %v2280
    %v2827 = vsel %vm2819, %v2734, %v2282
    %v2829 = vsel %vm2819, %v2737, %v2284
    %v2831 = vsel %vm2819, %v2740, %v2286
    %v2833 = vsel %vm2819, %v2743, %v2288
    %v2835 = vsel %vm2819, %v2746, %v2290
    %v2837 = vsel %vm2819, %v2749, %v2292
    %v2839 = vsel %vm2819, %v2752, %v2294
    %v2841 = vsel %vm2819, %v2755, %v2296
    %v2843 = vsel %vm2819, %v2758, %v2298
    %v2845 = vsel %vm2819, %v2761, %v2300
    %v2847 = vsel %vm2819, %v2764, %v2302
    %v2849 = vsel %vm2819, %v2767, %v2304
    %v2851 = vsel %vm2819, %v2770, %v2306
    %v2853 = vsel %vm2819, %v2773, %v2308
    %v2855 = vsel %vm2819, %v2776, %v2310
    %v2857 = vsel %vm2819, %v2779, %v2312
    %v2859 = vsel %vm2819, %v2782, %v2314
    %v2861 = vsel %vm2819, %v2785, %v2316
    %v2863 = vsel %vm2819, %v2788, %v2318
    %v2865 = vsel %vm2819, %v2791, %v2320
    %v2867 = vsel %vm2819, %v2794, %v2322
    %v2869 = vsel %vm2819, %v2797, %v2324
    %v2871 = vsel %vm2819, %v2800, %v2326
    %v2873 = vsel %vm2819, %v2803, %v2328
    %v2875 = vsel %vm2819, %v2806, %v2330
    %v2877 = vsel %vm2819, %v2809, %v2332
    %v2879 = vsel %vm2819, %v2812, %v2334
    %v2881 = vsel %vm2819, %v2815, %v2336
    %v2883 = vsel %vm2819, %v2818, %v2338
    %vm2884 = vcmask 785408
    %v2886 = vsel %vm2884, %v2821, %v2372
    %v2889 = vsel %vm2884, %v2823, %v2374
    %v2892 = vsel %vm2884, %v2825, %v2376
    %v2895 = vsel %vm2884, %v2827, %v2378
    %v2898 = vsel %vm2884, %v2829, %v2380
    %v2901 = vsel %vm2884, %v2831, %v2382
    %v2904 = vsel %vm2884, %v2833, %v2384
    %v2907 = vsel %vm2884, %v2835, %v2386
    %v2910 = vsel %vm2884, %v2837, %v2388
    %v2913 = vsel %vm2884, %v2839, %v2390
    %v2916 = vsel %vm2884, %v2841, %v2392
    %v2919 = vsel %vm2884, %v2843, %v2394
    %v2922 = vsel %vm2884, %v2845, %v2396
    %v2925 = vsel %vm2884, %v2847, %v2398
    %v2928 = vsel %vm2884, %v2849, %v2400
    %v2931 = vsel %vm2884, %v2851, %v2402
    %v2934 = vsel %vm2884, %v2853, %v2404
    %v2937 = vsel %vm2884, %v2855, %v2406
    %v2940 = vsel %vm2884, %v2857, %v2408
    %v2943 = vsel %vm2884, %v2859, %v2410
    %v2946 = vsel %vm2884, %v2861, %v2412
    %v2949 = vsel %vm2884, %v2863, %v2414
    %v2952 = vsel %vm2884, %v2865, %v2416
    %v2955 = vsel %vm2884, %v2867, %v2418
    %v2958 = vsel %vm2884, %v2869, %v2420
    %v2961 = vsel %vm2884, %v2871, %v2422
    %v2964 = vsel %vm2884, %v2873, %v2424
    %v2967 = vsel %vm2884, %v2875, %v2426
    %v2970 = vsel %vm2884, %v2877, %v2428
    %v2973 = vsel %vm2884, %v2879, %v2430
    %v2976 = vsel %vm2884, %v2881, %v2432
    %v2979 = vsel %vm2884, %v2883, %v2434
    %v2983 = vsel %vm502, %v1730, %v2468
    %v2986 = vsel %vm502, %v1731, %v2470
    %v2989 = vsel %vm502, %v1732, %v2472
    %v2992 = vsel %vm502, %v1733, %v2474
    %v2995 = vsel %vm502, %v1734, %v2476
    %v2998 = vsel %vm502, %v1735, %v2478
    %v3001 = vsel %vm502, %v1736, %v2480
    %v3004 = vsel %vm502, %v1737, %v2482
    %v3007 = vsel %vm502, %v1738, %v2484
    %v3010 = vsel %vm502, %v1739, %v2486
    %v3013 = vsel %vm502, %v1740, %v2488
    %v3016 = vsel %vm502, %v1741, %v2490
    %v3019 = vsel %vm502, %v1742, %v2492
    %v3022 = vsel %vm502, %v1743, %v2494
    %v3025 = vsel %vm502, %v1744, %v2496
    %v3028 = vsel %vm502, %v1745, %v2498
    %v3031 = vsel %vm502, %v1746, %v2500
    %v3034 = vsel %vm502, %v1747, %v2502
    %v3037 = vsel %vm502, %v1748, %v2504
    %v3040 = vsel %vm502, %v1749, %v2506
    %v3043 = vsel %vm502, %v1750, %v2508
    %v3046 = vsel %vm502, %v1751, %v2510
    %v3049 = vsel %vm502, %v1752, %v2512
    %v3052 = vsel %vm502, %v1753, %v2514
    %v3055 = vsel %vm502, %v1754, %v2516
    %v3058 = vsel %vm502, %v1755, %v2518
    %v3061 = vsel %vm502, %v1756, %v2520
    %v3064 = vsel %vm502, %v1757, %v2522
    %v3067 = vsel %vm502, %v1758, %v2524
    %v3070 = vsel %vm502, %v1759, %v2526
    %v3073 = vsel %vm502, %v1760, %v2528
    %v3076 = vsel %vm502, %v1761, %v2530
    %v3078 = vsel %vm2819, %v2983, %v2564
    %v3080 = vsel %vm2819, %v2986, %v2566
    %v3082 = vsel %vm2819, %v2989, %v2568
    %v3084 = vsel %vm2819, %v2992, %v2570
    %v3086 = vsel %vm2819, %v2995, %v2572
    %v3088 = vsel %vm2819, %v2998, %v2574
    %v3090 = vsel %vm2819, %v3001, %v2576
    %v3092 = vsel %vm2819, %v3004, %v2578
    %v3094 = vsel %vm2819, %v3007, %v2580
    %v3096 = vsel %vm2819, %v3010, %v2582
    %v3098 = vsel %vm2819, %v3013, %v2584
    %v3100 = vsel %vm2819, %v3016, %v2586
    %v3102 = vsel %vm2819, %v3019, %v2588
    %v3104 = vsel %vm2819, %v3022, %v2590
    %v3106 = vsel %vm2819, %v3025, %v2592
    %v3108 = vsel %vm2819, %v3028, %v2594
    %v3110 = vsel %vm2819, %v3031, %v2596
    %v3112 = vsel %vm2819, %v3034, %v2598
    %v3114 = vsel %vm2819, %v3037, %v2600
    %v3116 = vsel %vm2819, %v3040, %v2602
    %v3118 = vsel %vm2819, %v3043, %v2604
    %v3120 = vsel %vm2819, %v3046, %v2606
    %v3122 = vsel %vm2819, %v3049, %v2608
    %v3124 = vsel %vm2819, %v3052, %v2610
    %v3126 = vsel %vm2819, %v3055, %v2612
    %v3128 = vsel %vm2819, %v3058, %v2614
    %v3130 = vsel %vm2819, %v3061, %v2616
    %v3132 = vsel %vm2819, %v3064, %v2618
    %v3134 = vsel %vm2819, %v3067, %v2620
    %v3136 = vsel %vm2819, %v3070, %v2622
    %v3138 = vsel %vm2819, %v3073, %v2624
    %v3140 = vsel %vm2819, %v3076, %v2626
    %v3142 = vsel %vm2884, %v3078, %v2660
    %v3145 = vsel %vm2884, %v3080, %v2662
    %v3148 = vsel %vm2884, %v3082, %v2664
    %v3151 = vsel %vm2884, %v3084, %v2666
    %v3154 = vsel %vm2884, %v3086, %v2668
    %v3157 = vsel %vm2884, %v3088, %v2670
    %v3160 = vsel %vm2884, %v3090, %v2672
    %v3163 = vsel %vm2884, %v3092, %v2674
    %v3166 = vsel %vm2884, %v3094, %v2676
    %v3169 = vsel %vm2884, %v3096, %v2678
    %v3172 = vsel %vm2884, %v3098, %v2680
    %v3175 = vsel %vm2884, %v3100, %v2682
    %v3178 = vsel %vm2884, %v3102, %v2684
    %v3181 = vsel %vm2884, %v3104, %v2686
    %v3184 = vsel %vm2884, %v3106, %v2688
    %v3187 = vsel %vm2884, %v3108, %v2690
    %v3190 = vsel %vm2884, %v3110, %v2692
    %v3193 = vsel %vm2884, %v3112, %v2694
    %v3196 = vsel %vm2884, %v3114, %v2696
    %v3199 = vsel %vm2884, %v3116, %v2698
    %v3202 = vsel %vm2884, %v3118, %v2700
    %v3205 = vsel %vm2884, %v3120, %v2702
    %v3208 = vsel %vm2884, %v3122, %v2704
    %v3211 = vsel %vm2884, %v3124, %v2706
    %v3214 = vsel %vm2884, %v3126, %v2708
    %v3217 = vsel %vm2884, %v3128, %v2710
    %v3220 = vsel %vm2884, %v3130, %v2712
    %v3223 = vsel %vm2884, %v3132, %v2714
    %v3226 = vsel %vm2884, %v3134, %v2716
    %v3229 = vsel %vm2884, %v3136, %v2718
    %v3232 = vsel %vm2884, %v3138, %v2720
    %v3235 = vsel %vm2884, %v3140, %v2722
    %v3237 = vld [vmem:[%s4] sm:$0xf]
    %v3238 = vld [vmem:[%s4 + $0x4] sm:$0xf]
    %v3239 = vld [vmem:[%s4 + $0x8] sm:$0xf]
    %v3240 = vld [vmem:[%s4 + $0xc] sm:$0xf]
    %v3241 = vld [vmem:[%s4 + $0x10] sm:$0xf]
    %v3242 = vld [vmem:[%s4 + $0x14] sm:$0xf]
    %v3243 = vld [vmem:[%s4 + $0x18] sm:$0xf]
    %v3244 = vld [vmem:[%s4 + $0x1c] sm:$0xf]
    %v3245 = vld [vmem:[%s4 + $0x20] sm:$0xf]
    %v3246 = vld [vmem:[%s4 + $0x24] sm:$0xf]
    %v3247 = vld [vmem:[%s4 + $0x28] sm:$0xf]
    %v3248 = vld [vmem:[%s4 + $0x2c] sm:$0xf]
    %v3249 = vld [vmem:[%s4 + $0x30] sm:$0xf]
    %v3250 = vld [vmem:[%s4 + $0x34] sm:$0xf]
    %v3251 = vld [vmem:[%s4 + $0x38] sm:$0xf]
    %v3252 = vld [vmem:[%s4 + $0x3c] sm:$0xf]
    %v3253 = vld [vmem:[%s4 + $0x40] sm:$0xf]
    %v3254 = vld [vmem:[%s4 + $0x44] sm:$0xf]
    %v3255 = vld [vmem:[%s4 + $0x48] sm:$0xf]
    %v3256 = vld [vmem:[%s4 + $0x4c] sm:$0xf]
    %v3257 = vld [vmem:[%s4 + $0x50] sm:$0xf]
    %v3258 = vld [vmem:[%s4 + $0x54] sm:$0xf]
    %v3259 = vld [vmem:[%s4 + $0x58] sm:$0xf]
    %v3260 = vld [vmem:[%s4 + $0x5c] sm:$0xf]
    %v3261 = vld [vmem:[%s4 + $0x60] sm:$0xf]
    %v3262 = vld [vmem:[%s4 + $0x64] sm:$0xf]
    %v3263 = vld [vmem:[%s4 + $0x68] sm:$0xf]
    %v3264 = vld [vmem:[%s4 + $0x6c] sm:$0xf]
    %v3265 = vld [vmem:[%s4 + $0x70] sm:$0xf]
    %v3266 = vld [vmem:[%s4 + $0x74] sm:$0xf]
    %v3267 = vld [vmem:[%s4 + $0x78] sm:$0xf]
    %v3268 = vld [vmem:[%s4 + $0x7c] sm:$0xf]
    %v3269 = vld [vmem:[%s4 + $0x80] sm:$0xf]
    %v3270 = vld [vmem:[%s4 + $0x84] sm:$0xf]
    %v3271 = vld [vmem:[%s4 + $0x88] sm:$0xf]
    %v3272 = vld [vmem:[%s4 + $0x8c] sm:$0xf]
    %v3309 = vunpack.c.l.b16 %v3237
    %v3310 = vunpack.c.l.b16 %v3238
    %v3311 = vunpack.c.l.b16 %v3239
    %v3312 = vunpack.c.l.b16 %v3240
    %v3313 = vunpack.c.l.b16 %v3241
    %v3314 = vunpack.c.l.b16 %v3242
    %v3315 = vunpack.c.l.b16 %v3243
    %v3316 = vunpack.c.l.b16 %v3244
    %v3317 = vunpack.c.l.b16 %v3245
    %v3318 = vunpack.c.l.b16 %v3246
    %v3319 = vunpack.c.l.b16 %v3247
    %v3320 = vunpack.c.l.b16 %v3248
    %v3321 = vunpack.c.l.b16 %v3249
    %v3322 = vunpack.c.l.b16 %v3250
    %v3323 = vunpack.c.l.b16 %v3251
    %v3324 = vunpack.c.l.b16 %v3252
    %v3325 = vunpack.c.l.b16 %v3253
    %v3326 = vunpack.c.l.b16 %v3254
    %v3327 = vunpack.c.l.b16 %v3255
    %v3328 = vunpack.c.l.b16 %v3256
    %v3329 = vunpack.c.l.b16 %v3257
    %v3330 = vunpack.c.l.b16 %v3258
    %v3331 = vunpack.c.l.b16 %v3259
    %v3332 = vunpack.c.l.b16 %v3260
    %v3333 = vunpack.c.l.b16 %v3261
    %v3334 = vunpack.c.l.b16 %v3262
    %v3335 = vunpack.c.l.b16 %v3263
    %v3336 = vunpack.c.l.b16 %v3264
    %v3337 = vunpack.c.l.b16 %v3265
    %v3338 = vunpack.c.l.b16 %v3266
    %v3339 = vunpack.c.l.b16 %v3267
    %v3340 = vunpack.c.l.b16 %v3268
    %v3341 = vunpack.c.l.b16 %v3269
    %v3342 = vunpack.c.l.b16 %v3270
    %v3343 = vunpack.c.l.b16 %v3271
    %v3344 = vunpack.c.l.b16 %v3272
    %v3345 = vpack.c.b16 %v3310, %v3309
    %v3346 = vpack.c.b16 %v3312, %v3311
    %v3347 = vpack.c.b16 %v3314, %v3313
    %v3348 = vpack.c.b16 %v3316, %v3315
    %v3349 = vpack.c.b16 %v3318, %v3317
    %v3350 = vpack.c.b16 %v3320, %v3319
    %v3351 = vpack.c.b16 %v3322, %v3321
    %v3352 = vpack.c.b16 %v3324, %v3323
    %v3353 = vpack.c.b16 %v3326, %v3325
    %v3354 = vpack.c.b16 %v3328, %v3327
    %v3355 = vpack.c.b16 %v3330, %v3329
    %v3356 = vpack.c.b16 %v3332, %v3331
    %v3357 = vpack.c.b16 %v3334, %v3333
    %v3358 = vpack.c.b16 %v3336, %v3335
    %v3359 = vpack.c.b16 %v3338, %v3337
    %v3360 = vpack.c.b16 %v3340, %v3339
    %v3361 = vpack.c.b16 %v3342, %v3341
    %v3362 = vpack.c.b16 %v3344, %v3343
    %v3382 = vsel %vm502, %v2115, 0
    %v3385 = vsel %vm502, %v2116, 0
    %v3388 = vsel %vm502, %v2117, 0
    %v3391 = vsel %vm502, %v2118, 0
    %v3394 = vsel %vm502, %v2119, 0
    %v3397 = vsel %vm502, %v2120, 0
    %v3400 = vsel %vm502, %v2121, 0
    %v3403 = vsel %vm502, %v2122, 0
    %v3406 = vsel %vm502, %v2123, 0
    %v3409 = vsel %vm502, %v2124, 0
    %v3412 = vsel %vm502, %v2125, 0
    %v3415 = vsel %vm502, %v2126, 0
    %v3418 = vsel %vm502, %v2127, 0
    %v3421 = vsel %vm502, %v2128, 0
    %v3424 = vsel %vm502, %v2129, 0
    %v3427 = vsel %vm502, %v2130, 0
    %v3430 = vsel %vm502, %v2131, 0
    %v3433 = vsel %vm502, %v2132, 0
    %v3436 = vsel %vm502, %v2133, 0
    %v3439 = vsel %vm502, %v2134, 0
    %v3442 = vsel %vm502, %v2135, 0
    %v3445 = vsel %vm502, %v2136, 0
    %v3448 = vsel %vm502, %v2137, 0
    %v3451 = vsel %vm502, %v2138, 0
    %v3454 = vsel %vm502, %v2139, 0
    %v3457 = vsel %vm502, %v2140, 0
    %v3460 = vsel %vm502, %v2141, 0
    %v3463 = vsel %vm502, %v2142, 0
    %v3466 = vsel %vm502, %v2143, 0
    %v3469 = vsel %vm502, %v2144, 0
    %v3472 = vsel %vm502, %v2145, 0
    %v3475 = vsel %vm502, %v2146, 0
    %3477 = vmatprep.subr.bf16.mxu0 0
    %3478 = vmatpush1.bf16.msra.mxu0 %v3345
    %3479 = vmatprep.subr.bf16.mxu0 0
    %3480 = vmatpush1.bf16.msra.mxu0 %v3346
    %3481 = vmatprep.subr.bf16.mxu0 0
    %3482 = vmatpush1.bf16.msra.mxu0 %v3347
    %3483 = vmatprep.subr.bf16.mxu0 0
    %3484 = vmatpush1.bf16.msra.mxu0 %v3348
    %3485 = vmatprep.subr.bf16.mxu0 0
    %3486 = vmatpush1.bf16.msra.mxu0 %v3349
    %3487 = vmatprep.subr.bf16.mxu0 0
    %3488 = vmatpush1.bf16.msra.mxu0 %v3350
    %3489 = vmatprep.subr.bf16.mxu0 0
    %3490 = vmatpush1.bf16.msra.mxu0 %v3351
    %3491 = vmatprep.subr.bf16.mxu0 0
    %3492 = vmatpush1.bf16.msra.mxu0 %v3352
    %3493 = vmatprep.subr.bf16.mxu0 0
    %3494 = vmatpush1.bf16.msra.mxu0 %v3353
    %3495 = vmatprep.subr.bf16.mxu0 0
    %3496 = vmatpush1.bf16.msra.mxu0 %v3354
    %3497 = vmatprep.subr.bf16.mxu0 0
    %3498 = vmatpush1.bf16.msra.mxu0 %v3355
    %3499 = vmatprep.subr.bf16.mxu0 0
    %3500 = vmatpush1.bf16.msra.mxu0 %v3356
    %3501 = vmatprep.subr.bf16.mxu0 0
    %3502 = vmatpush1.bf16.msra.mxu0 %v3357
    %3503 = vmatprep.subr.bf16.mxu0 0
    %3504 = vmatpush1.bf16.msra.mxu0 %v3358
    %3505 = vmatprep.subr.bf16.mxu0 0
    %3506 = vmatpush1.bf16.msra.mxu0 %v3359
    %3507 = vmatprep.subr.bf16.mxu0 0
    %3508 = vmatpush1.bf16.msra.mxu0 %v3360
    %3509 = vmatprep.mubr.bf16.mxu0 %v3142
    %3510 = vmatmul.mubr.bf16.gmra.mrb[0].mxu0 %v2886
    %v3511 = vpop.f32.mrb[0].mxu0
    %v3512 = vadd.f32 0.0, %v3511
    %v3513 = vpop.f32.mrb[0].mxu0
    %v3514 = vpop.f32.mrb[0].mxu0
    %v3515 = vadd.f32 0.0, %v3514
    %v3516 = vpop.f32.mrb[0].mxu0
    %3517 = vmatprep.mubr.bf16.mxu0 %v3145
    %3518 = vmatmul.mubr.bf16.gmra.mrb[0].mxu0 %v2889
    %v3519 = vpop.f32.mrb[0].mxu0
    %v3520 = vadd.f32 0.0, %v3519
    %v3521 = vpop.f32.mrb[0].mxu0
    %v3522 = vpop.f32.mrb[0].mxu0
    %v3523 = vadd.f32 0.0, %v3522
    %v3524 = vpop.f32.mrb[0].mxu0
    %3525 = vmatprep.mubr.bf16.mxu0 %v3148
    %3526 = vmatmul.mubr.bf16.gmra.mrb[0].mxu0 %v2892
    %v3527 = vpop.f32.mrb[0].mxu0
    %v3528 = vadd.f32 0.0, %v3527
    %v3529 = vpop.f32.mrb[0].mxu0
    %v3530 = vpop.f32.mrb[0].mxu0
    %v3531 = vadd.f32 0.0, %v3530
    %v3532 = vpop.f32.mrb[0].mxu0
    %3533 = vmatprep.mubr.bf16.mxu0 %v3151
    %3534 = vmatmul.mubr.bf16.gmra.mrb[0].mxu0 %v2895
    %v3535 = vpop.f32.mrb[0].mxu0
    %v3536 = vadd.f32 0.0, %v3535
    %v3537 = vpop.f32.mrb[0].mxu0
    %v3538 = vpop.f32.mrb[0].mxu0
    %v3539 = vadd.f32 0.0, %v3538
    %v3540 = vpop.f32.mrb[0].mxu0
    %3541 = vmatprep.mubr.bf16.mxu0 %v3154
    %3542 = vmatmul.mubr.bf16.gmra.mrb[0].mxu0 %v2898
    %v3543 = vpop.f32.mrb[0].mxu0
    %v3544 = vadd.f32 0.0, %v3543
    %v3545 = vpop.f32.mrb[0].mxu0
    %v3546 = vpop.f32.mrb[0].mxu0
    %v3547 = vadd.f32 0.0, %v3546
    %v3548 = vpop.f32.mrb[0].mxu0
    %3549 = vmatprep.mubr.bf16.mxu0 %v3157
    %3550 = vmatmul.mubr.bf16.gmra.mrb[0].mxu0 %v2901
    %v3551 = vpop.f32.mrb[0].mxu0
    %v3552 = vadd.f32 0.0, %v3551
    %v3553 = vpop.f32.mrb[0].mxu0
    %v3554 = vpop.f32.mrb[0].mxu0
    %v3555 = vadd.f32 0.0, %v3554
    %v3556 = vpop.f32.mrb[0].mxu0
    %3557 = vmatprep.mubr.bf16.mxu0 %v3160
    %3558 = vmatmul.mubr.bf16.gmra.mrb[0].mxu0 %v2904
    %v3559 = vpop.f32.mrb[0].mxu0
    %v3560 = vadd.f32 0.0, %v3559
    %v3561 = vpop.f32.mrb[0].mxu0
    %v3562 = vpop.f32.mrb[0].mxu0
    %v3563 = vadd.f32 0.0, %v3562
    %v3564 = vpop.f32.mrb[0].mxu0
    %3565 = vmatprep.mubr.bf16.mxu0 %v3163
    %3566 = vmatmul.mubr.bf16.gmra.mrb[0].mxu0 %v2907
    %v3567 = vpop.f32.mrb[0].mxu0
    %v3568 = vadd.f32 0.0, %v3567
    %v3569 = vpop.f32.mrb[0].mxu0
    %v3570 = vpop.f32.mrb[0].mxu0
    %v3571 = vadd.f32 0.0, %v3570
    %v3572 = vpop.f32.mrb[0].mxu0
    %3573 = vmatprep.mubr.bf16.mxu0 %v3166
    %3574 = vmatmul.mubr.bf16.gmra.mrb[0].mxu0 %v2910
    %v3575 = vpop.f32.mrb[0].mxu0
    %v3576 = vadd.f32 0.0, %v3575
    %v3577 = vpop.f32.mrb[0].mxu0
    %v3578 = vpop.f32.mrb[0].mxu0
    %v3579 = vadd.f32 0.0, %v3578
    %v3580 = vpop.f32.mrb[0].mxu0
    %3581 = vmatprep.mubr.bf16.mxu0 %v3169
    %3582 = vmatmul.mubr.bf16.gmra.mrb[0].mxu0 %v2913
    %v3583 = vpop.f32.mrb[0].mxu0
    %v3584 = vadd.f32 0.0, %v3583
    %v3585 = vpop.f32.mrb[0].mxu0
    %v3586 = vpop.f32.mrb[0].mxu0
    %v3587 = vadd.f32 0.0, %v3586
    %v3588 = vpop.f32.mrb[0].mxu0
    %3589 = vmatprep.mubr.bf16.mxu0 %v3172
    %3590 = vmatmul.mubr.bf16.gmra.mrb[0].mxu0 %v2916
    %v3591 = vpop.f32.mrb[0].mxu0
    %v3592 = vadd.f32 0.0, %v3591
    %v3593 = vpop.f32.mrb[0].mxu0
    %v3594 = vpop.f32.mrb[0].mxu0
    %v3595 = vadd.f32 0.0, %v3594
    %v3596 = vpop.f32.mrb[0].mxu0
    %3597 = vmatprep.mubr.bf16.mxu0 %v3175
    %3598 = vmatmul.mubr.bf16.gmra.mrb[0].mxu0 %v2919
    %v3599 = vpop.f32.mrb[0].mxu0
    %v3600 = vadd.f32 0.0, %v3599
    %v3601 = vpop.f32.mrb[0].mxu0
    %v3602 = vpop.f32.mrb[0].mxu0
    %v3603 = vadd.f32 0.0, %v3602
    %v3604 = vpop.f32.mrb[0].mxu0
    %3605 = vmatprep.mubr.bf16.mxu0 %v3178
    %3606 = vmatmul.mubr.bf16.gmra.mrb[0].mxu0 %v2922
    %v3607 = vpop.f32.mrb[0].mxu0
    %v3608 = vadd.f32 0.0, %v3607
    %v3609 = vpop.f32.mrb[0].mxu0
    %v3610 = vpop.f32.mrb[0].mxu0
    %v3611 = vadd.f32 0.0, %v3610
    %v3612 = vpop.f32.mrb[0].mxu0
    %3613 = vmatprep.mubr.bf16.mxu0 %v3181
    %3614 = vmatmul.mubr.bf16.gmra.mrb[0].mxu0 %v2925
    %v3615 = vpop.f32.mrb[0].mxu0
    %v3616 = vadd.f32 0.0, %v3615
    %v3617 = vpop.f32.mrb[0].mxu0
    %v3618 = vpop.f32.mrb[0].mxu0
    %v3619 = vadd.f32 0.0, %v3618
    %v3620 = vpop.f32.mrb[0].mxu0
    %3621 = vmatprep.mubr.bf16.mxu0 %v3184
    %3622 = vmatmul.mubr.bf16.gmra.mrb[0].mxu0 %v2928
    %v3623 = vpop.f32.mrb[0].mxu0
    %v3624 = vadd.f32 0.0, %v3623
    %v3625 = vpop.f32.mrb[0].mxu0
    %v3626 = vpop.f32.mrb[0].mxu0
    %v3627 = vadd.f32 0.0, %v3626
    %v3628 = vpop.f32.mrb[0].mxu0
    %3629 = vmatprep.mubr.bf16.mxu0 %v3187
    %3630 = vmatmul.mubr.bf16.gmra.mrb[0].mxu0 %v2931
    %v3631 = vpop.f32.mrb[0].mxu0
    %v3632 = vadd.f32 0.0, %v3631
    %v3633 = vpop.f32.mrb[0].mxu0
    %v3634 = vpop.f32.mrb[0].mxu0
    %v3635 = vadd.f32 0.0, %v3634
    %v3636 = vpop.f32.mrb[0].mxu0
    %3637 = vmatprep.mubr.bf16.mxu0 %v3190
    %3638 = vmatmul.mubr.bf16.gmra.mrb[0].mxu0 %v2934
    %v3639 = vpop.f32.mrb[0].mxu0
    %v3640 = vadd.f32 0.0, %v3639
    %v3641 = vpop.f32.mrb[0].mxu0
    %v3642 = vpop.f32.mrb[0].mxu0
    %v3643 = vadd.f32 0.0, %v3642
    %v3644 = vpop.f32.mrb[0].mxu0
    %3645 = vmatprep.mubr.bf16.mxu0 %v3193
    %3646 = vmatmul.mubr.bf16.gmra.mrb[0].mxu0 %v2937
    %v3647 = vpop.f32.mrb[0].mxu0
    %v3648 = vadd.f32 0.0, %v3647
    %v3649 = vpop.f32.mrb[0].mxu0
    %v3650 = vpop.f32.mrb[0].mxu0
    %v3651 = vadd.f32 0.0, %v3650
    %v3652 = vpop.f32.mrb[0].mxu0
    %3653 = vmatprep.mubr.bf16.mxu0 %v3196
    %3654 = vmatmul.mubr.bf16.gmra.mrb[0].mxu0 %v2940
    %v3655 = vpop.f32.mrb[0].mxu0
    %v3656 = vadd.f32 0.0, %v3655
    %v3657 = vpop.f32.mrb[0].mxu0
    %v3658 = vpop.f32.mrb[0].mxu0
    %v3659 = vadd.f32 0.0, %v3658
    %v3660 = vpop.f32.mrb[0].mxu0
    %3661 = vmatprep.mubr.bf16.mxu0 %v3199
    %3662 = vmatmul.mubr.bf16.gmra.mrb[0].mxu0 %v2943
    %v3663 = vpop.f32.mrb[0].mxu0
    %v3664 = vadd.f32 0.0, %v3663
    %v3665 = vpop.f32.mrb[0].mxu0
    %v3666 = vpop.f32.mrb[0].mxu0
    %v3667 = vadd.f32 0.0, %v3666
    %v3668 = vpop.f32.mrb[0].mxu0
    %3669 = vmatprep.mubr.bf16.mxu0 %v3202
    %3670 = vmatmul.mubr.bf16.gmra.mrb[0].mxu0 %v2946
    %v3671 = vpop.f32.mrb[0].mxu0
    %v3672 = vadd.f32 0.0, %v3671
    %v3673 = vpop.f32.mrb[0].mxu0
    %v3674 = vpop.f32.mrb[0].mxu0
    %v3675 = vadd.f32 0.0, %v3674
    %v3676 = vpop.f32.mrb[0].mxu0
    %3677 = vmatprep.mubr.bf16.mxu0 %v3205
    %3678 = vmatmul.mubr.bf16.gmra.mrb[0].mxu0 %v2949
    %v3679 = vpop.f32.mrb[0].mxu0
    %v3680 = vadd.f32 0.0, %v3679
    %v3681 = vpop.f32.mrb[0].mxu0
    %v3682 = vpop.f32.mrb[0].mxu0
    %v3683 = vadd.f32 0.0, %v3682
    %v3684 = vpop.f32.mrb[0].mxu0
    %3685 = vmatprep.mubr.bf16.mxu0 %v3208
    %3686 = vmatmul.mubr.bf16.gmra.mrb[0].mxu0 %v2952
    %v3687 = vpop.f32.mrb[0].mxu0
    %v3688 = vadd.f32 0.0, %v3687
    %v3689 = vpop.f32.mrb[0].mxu0
    %v3690 = vpop.f32.mrb[0].mxu0
    %v3691 = vadd.f32 0.0, %v3690
    %v3692 = vpop.f32.mrb[0].mxu0
    %3693 = vmatprep.mubr.bf16.mxu0 %v3211
    %3694 = vmatmul.mubr.bf16.gmra.mrb[0].mxu0 %v2955
    %v3695 = vpop.f32.mrb[0].mxu0
    %v3696 = vadd.f32 0.0, %v3695
    %v3697 = vpop.f32.mrb[0].mxu0
    %v3698 = vpop.f32.mrb[0].mxu0
    %v3699 = vadd.f32 0.0, %v3698
    %v3700 = vpop.f32.mrb[0].mxu0
    %3701 = vmatprep.mubr.bf16.mxu0 %v3214
    %3702 = vmatmul.mubr.bf16.gmra.mrb[0].mxu0 %v2958
    %v3703 = vpop.f32.mrb[0].mxu0
    %v3704 = vadd.f32 0.0, %v3703
    %v3705 = vpop.f32.mrb[0].mxu0
    %v3706 = vpop.f32.mrb[0].mxu0
    %v3707 = vadd.f32 0.0, %v3706
    %v3708 = vpop.f32.mrb[0].mxu0
    %3709 = vmatprep.mubr.bf16.mxu0 %v3217
    %3710 = vmatmul.mubr.bf16.gmra.mrb[0].mxu0 %v2961
    %v3711 = vpop.f32.mrb[0].mxu0
    %v3712 = vadd.f32 0.0, %v3711
    %v3713 = vpop.f32.mrb[0].mxu0
    %v3714 = vpop.f32.mrb[0].mxu0
    %v3715 = vadd.f32 0.0, %v3714
    %v3716 = vpop.f32.mrb[0].mxu0
    %3717 = vmatprep.mubr.bf16.mxu0 %v3220
    %3718 = vmatmul.mubr.bf16.gmra.mrb[0].mxu0 %v2964
    %v3719 = vpop.f32.mrb[0].mxu0
    %v3720 = vadd.f32 0.0, %v3719
    %v3721 = vpop.f32.mrb[0].mxu0
    %v3722 = vpop.f32.mrb[0].mxu0
    %v3723 = vadd.f32 0.0, %v3722
    %v3724 = vpop.f32.mrb[0].mxu0
    %3725 = vmatprep.mubr.bf16.mxu0 %v3223
    %3726 = vmatmul.mubr.bf16.gmra.mrb[0].mxu0 %v2967
    %v3727 = vpop.f32.mrb[0].mxu0
    %v3728 = vadd.f32 0.0, %v3727
    %v3729 = vpop.f32.mrb[0].mxu0
    %v3730 = vpop.f32.mrb[0].mxu0
    %v3731 = vadd.f32 0.0, %v3730
    %v3732 = vpop.f32.mrb[0].mxu0
    %3733 = vmatprep.mubr.bf16.mxu0 %v3226
    %3734 = vmatmul.mubr.bf16.gmra.mrb[0].mxu0 %v2970
    %v3735 = vpop.f32.mrb[0].mxu0
    %v3736 = vadd.f32 0.0, %v3735
    %v3737 = vpop.f32.mrb[0].mxu0
    %v3738 = vpop.f32.mrb[0].mxu0
    %v3739 = vadd.f32 0.0, %v3738
    %v3740 = vpop.f32.mrb[0].mxu0
    %3741 = vmatprep.mubr.bf16.mxu0 %v3229
    %3742 = vmatmul.mubr.bf16.gmra.mrb[0].mxu0 %v2973
    %v3743 = vpop.f32.mrb[0].mxu0
    %v3744 = vadd.f32 0.0, %v3743
    %v3745 = vpop.f32.mrb[0].mxu0
    %v3746 = vpop.f32.mrb[0].mxu0
    %v3747 = vadd.f32 0.0, %v3746
    %v3748 = vpop.f32.mrb[0].mxu0
    %3749 = vmatprep.mubr.bf16.mxu0 %v3232
    %3750 = vmatmul.mubr.bf16.gmra.mrb[0].mxu0 %v2976
    %v3751 = vpop.f32.mrb[0].mxu0
    %v3752 = vadd.f32 0.0, %v3751
    %v3753 = vpop.f32.mrb[0].mxu0
    %v3754 = vpop.f32.mrb[0].mxu0
    %v3755 = vadd.f32 0.0, %v3754
    %v3756 = vpop.f32.mrb[0].mxu0
    %3757 = vmatprep.mubr.bf16.mxu0 %v3235
    %3758 = vmatmul.mubr.bf16.gmra.mrb[0].mxu0 %v2979
    %v3759 = vpop.f32.mrb[0].mxu0
    %v3760 = vadd.f32 0.0, %v3759
    %v3761 = vpop.f32.mrb[0].mxu0
    %v3762 = vpop.f32.mrb[0].mxu0
    %v3763 = vadd.f32 0.0, %v3762
    %v3764 = vpop.f32.mrb[0].mxu0
    %3765 = vdwg.mxu0
    %3766 = vmatprep.subr.bf16.mxu0 0
    %3767 = vmatpush1.bf16.msra.mxu0 %v3361
    %3768 = vmatprep.subr.bf16.mxu0 0
    %3769 = vmatpush1.bf16.msra.mxu0 %v3362
    %3770 = vmatprep.subr.bf16.mxu0 0
    %3771 = vmatpush1.bf16.msra.mxu0 0
    %3772 = vmatprep.subr.bf16.mxu0 0
    %3773 = vmatpush1.bf16.msra.mxu0 0
    %3774 = vmatprep.subr.bf16.mxu0 0
    %3775 = vmatpush1.bf16.msra.mxu0 0
    %3776 = vmatprep.subr.bf16.mxu0 0
    %3777 = vmatpush1.bf16.msra.mxu0 0
    %3778 = vmatprep.subr.bf16.mxu0 0
    %3779 = vmatpush1.bf16.msra.mxu0 0
    %3780 = vmatprep.subr.bf16.mxu0 0
    %3781 = vmatpush1.bf16.msra.mxu0 0
    %3782 = vmatprep.subr.bf16.mxu0 0
    %3783 = vmatpush1.bf16.msra.mxu0 0
    %3784 = vmatprep.subr.bf16.mxu0 0
    %3785 = vmatpush1.bf16.msra.mxu0 0
    %3786 = vmatprep.subr.bf16.mxu0 0
    %3787 = vmatpush1.bf16.msra.mxu0 0
    %3788 = vmatprep.subr.bf16.mxu0 0
    %3789 = vmatpush1.bf16.msra.mxu0 0
    %3790 = vmatprep.subr.bf16.mxu0 0
    %3791 = vmatpush1.bf16.msra.mxu0 0
    %3792 = vmatprep.subr.bf16.mxu0 0
    %3793 = vmatpush1.bf16.msra.mxu0 0
    %3794 = vmatprep.subr.bf16.mxu0 0
    %3795 = vmatpush1.bf16.msra.mxu0 0
    %3796 = vmatprep.subr.bf16.mxu0 0
    %3797 = vmatpush1.bf16.msra.mxu0 0
    %3798 = vmatprep.mubr.bf16.mxu0 0
    %3799 = vmatmul.mubr.bf16.gmra.mrb[0].mxu0 %v3382
    %v3800 = vpop.f32.mrb[0].mxu0
    %v3801 = vadd.f32 %v3512, %v3800
    %v3802 = vpop.f32.mrb[0].mxu0
    %v3803 = vpop.f32.mrb[0].mxu0
    %v3804 = vadd.f32 %v3515, %v3803
    %v3805 = vpop.f32.mrb[0].mxu0
    %3806 = vmatprep.mubr.bf16.mxu0 0
    %3807 = vmatmul.mubr.bf16.gmra.mrb[0].mxu0 %v3385
    %v3808 = vpop.f32.mrb[0].mxu0
    %v3809 = vadd.f32 %v3520, %v3808
    %v3810 = vpop.f32.mrb[0].mxu0
    %v3811 = vpop.f32.mrb[0].mxu0
    %v3812 = vadd.f32 %v3523, %v3811
    %v3813 = vpop.f32.mrb[0].mxu0
    %3814 = vmatprep.mubr.bf16.mxu0 0
    %3815 = vmatmul.mubr.bf16.gmra.mrb[0].mxu0 %v3388
    %v3816 = vpop.f32.mrb[0].mxu0
    %v3817 = vadd.f32 %v3528, %v3816
    %v3818 = vpop.f32.mrb[0].mxu0
    %v3819 = vpop.f32.mrb[0].mxu0
    %v3820 = vadd.f32 %v3531, %v3819
    %v3821 = vpop.f32.mrb[0].mxu0
    %3822 = vmatprep.mubr.bf16.mxu0 0
    %3823 = vmatmul.mubr.bf16.gmra.mrb[0].mxu0 %v3391
    %v3824 = vpop.f32.mrb[0].mxu0
    %v3825 = vadd.f32 %v3536, %v3824
    %v3826 = vpop.f32.mrb[0].mxu0
    %v3827 = vpop.f32.mrb[0].mxu0
    %v3828 = vadd.f32 %v3539, %v3827
    %v3829 = vpop.f32.mrb[0].mxu0
    %3830 = vmatprep.mubr.bf16.mxu0 0
    %3831 = vmatmul.mubr.bf16.gmra.mrb[0].mxu0 %v3394
    %v3832 = vpop.f32.mrb[0].mxu0
    %v3833 = vadd.f32 %v3544, %v3832
    %v3834 = vpop.f32.mrb[0].mxu0
    %v3835 = vpop.f32.mrb[0].mxu0
    %v3836 = vadd.f32 %v3547, %v3835
    %v3837 = vpop.f32.mrb[0].mxu0
    %3838 = vmatprep.mubr.bf16.mxu0 0
    %3839 = vmatmul.mubr.bf16.gmra.mrb[0].mxu0 %v3397
    %v3840 = vpop.f32.mrb[0].mxu0
    %v3841 = vadd.f32 %v3552, %v3840
    %v3842 = vpop.f32.mrb[0].mxu0
    %v3843 = vpop.f32.mrb[0].mxu0
    %v3844 = vadd.f32 %v3555, %v3843
    %v3845 = vpop.f32.mrb[0].mxu0
    %3846 = vmatprep.mubr.bf16.mxu0 0
    %3847 = vmatmul.mubr.bf16.gmra.mrb[0].mxu0 %v3400
    %v3848 = vpop.f32.mrb[0].mxu0
    %v3849 = vadd.f32 %v3560, %v3848
    %v3850 = vpop.f32.mrb[0].mxu0
    %v3851 = vpop.f32.mrb[0].mxu0
    %v3852 = vadd.f32 %v3563, %v3851
    %v3853 = vpop.f32.mrb[0].mxu0
    %3854 = vmatprep.mubr.bf16.mxu0 0
    %3855 = vmatmul.mubr.bf16.gmra.mrb[0].mxu0 %v3403
    %v3856 = vpop.f32.mrb[0].mxu0
    %v3857 = vadd.f32 %v3568, %v3856
    %v3858 = vpop.f32.mrb[0].mxu0
    %v3859 = vpop.f32.mrb[0].mxu0
    %v3860 = vadd.f32 %v3571, %v3859
    %v3861 = vpop.f32.mrb[0].mxu0
    %3862 = vmatprep.mubr.bf16.mxu0 0
    %3863 = vmatmul.mubr.bf16.gmra.mrb[0].mxu0 %v3406
    %v3864 = vpop.f32.mrb[0].mxu0
    %v3865 = vadd.f32 %v3576, %v3864
    %v3866 = vpop.f32.mrb[0].mxu0
    %v3867 = vpop.f32.mrb[0].mxu0
    %v3868 = vadd.f32 %v3579, %v3867
    %v3869 = vpop.f32.mrb[0].mxu0
    %3870 = vmatprep.mubr.bf16.mxu0 0
    %3871 = vmatmul.mubr.bf16.gmra.mrb[0].mxu0 %v3409
    %v3872 = vpop.f32.mrb[0].mxu0
    %v3873 = vadd.f32 %v3584, %v3872
    %v3874 = vpop.f32.mrb[0].mxu0
    %v3875 = vpop.f32.mrb[0].mxu0
    %v3876 = vadd.f32 %v3587, %v3875
    %v3877 = vpop.f32.mrb[0].mxu0
    %3878 = vmatprep.mubr.bf16.mxu0 0
    %3879 = vmatmul.mubr.bf16.gmra.mrb[0].mxu0 %v3412
    %v3880 = vpop.f32.mrb[0].mxu0
    %v3881 = vadd.f32 %v3592, %v3880
    %v3882 = vpop.f32.mrb[0].mxu0
    %v3883 = vpop.f32.mrb[0].mxu0
    %v3884 = vadd.f32 %v3595, %v3883
    %v3885 = vpop.f32.mrb[0].mxu0
    %3886 = vmatprep.mubr.bf16.mxu0 0
    %3887 = vmatmul.mubr.bf16.gmra.mrb[0].mxu0 %v3415
    %v3888 = vpop.f32.mrb[0].mxu0
    %v3889 = vadd.f32 %v3600, %v3888
    %v3890 = vpop.f32.mrb[0].mxu0
    %v3891 = vpop.f32.mrb[0].mxu0
    %v3892 = vadd.f32 %v3603, %v3891
    %v3893 = vpop.f32.mrb[0].mxu0
    %3894 = vmatprep.mubr.bf16.mxu0 0
    %3895 = vmatmul.mubr.bf16.gmra.mrb[0].mxu0 %v3418
    %v3896 = vpop.f32.mrb[0].mxu0
    %v3897 = vadd.f32 %v3608, %v3896
    %v3898 = vpop.f32.mrb[0].mxu0
    %v3899 = vpop.f32.mrb[0].mxu0
    %v3900 = vadd.f32 %v3611, %v3899
    %v3901 = vpop.f32.mrb[0].mxu0
    %3902 = vmatprep.mubr.bf16.mxu0 0
    %3903 = vmatmul.mubr.bf16.gmra.mrb[0].mxu0 %v3421
    %v3904 = vpop.f32.mrb[0].mxu0
    %v3905 = vadd.f32 %v3616, %v3904
    %v3906 = vpop.f32.mrb[0].mxu0
    %v3907 = vpop.f32.mrb[0].mxu0
    %v3908 = vadd.f32 %v3619, %v3907
    %v3909 = vpop.f32.mrb[0].mxu0
    %3910 = vmatprep.mubr.bf16.mxu0 0
    %3911 = vmatmul.mubr.bf16.gmra.mrb[0].mxu0 %v3424
    %v3912 = vpop.f32.mrb[0].mxu0
    %v3913 = vadd.f32 %v3624, %v3912
    %v3914 = vpop.f32.mrb[0].mxu0
    %v3915 = vpop.f32.mrb[0].mxu0
    %v3916 = vadd.f32 %v3627, %v3915
    %v3917 = vpop.f32.mrb[0].mxu0
    %3918 = vmatprep.mubr.bf16.mxu0 0
    %3919 = vmatmul.mubr.bf16.gmra.mrb[0].mxu0 %v3427
    %v3920 = vpop.f32.mrb[0].mxu0
    %v3921 = vadd.f32 %v3632, %v3920
    %v3922 = vpop.f32.mrb[0].mxu0
    %v3923 = vpop.f32.mrb[0].mxu0
    %v3924 = vadd.f32 %v3635, %v3923
    %v3925 = vpop.f32.mrb[0].mxu0
    %3926 = vmatprep.mubr.bf16.mxu0 0
    %3927 = vmatmul.mubr.bf16.gmra.mrb[0].mxu0 %v3430
    %v3928 = vpop.f32.mrb[0].mxu0
    %v3929 = vadd.f32 %v3640, %v3928
    %v3930 = vpop.f32.mrb[0].mxu0
    %v3931 = vpop.f32.mrb[0].mxu0
    %v3932 = vadd.f32 %v3643, %v3931
    %v3933 = vpop.f32.mrb[0].mxu0
    %3934 = vmatprep.mubr.bf16.mxu0 0
    %3935 = vmatmul.mubr.bf16.gmra.mrb[0].mxu0 %v3433
    %v3936 = vpop.f32.mrb[0].mxu0
    %v3937 = vadd.f32 %v3648, %v3936
    %v3938 = vpop.f32.mrb[0].mxu0
    %v3939 = vpop.f32.mrb[0].mxu0
    %v3940 = vadd.f32 %v3651, %v3939
    %v3941 = vpop.f32.mrb[0].mxu0
    %3942 = vmatprep.mubr.bf16.mxu0 0
    %3943 = vmatmul.mubr.bf16.gmra.mrb[0].mxu0 %v3436
    %v3944 = vpop.f32.mrb[0].mxu0
    %v3945 = vadd.f32 %v3656, %v3944
    %v3946 = vpop.f32.mrb[0].mxu0
    %v3947 = vpop.f32.mrb[0].mxu0
    %v3948 = vadd.f32 %v3659, %v3947
    %v3949 = vpop.f32.mrb[0].mxu0
    %3950 = vmatprep.mubr.bf16.mxu0 0
    %3951 = vmatmul.mubr.bf16.gmra.mrb[0].mxu0 %v3439
    %v3952 = vpop.f32.mrb[0].mxu0
    %v3953 = vadd.f32 %v3664, %v3952
    %v3954 = vpop.f32.mrb[0].mxu0
    %v3955 = vpop.f32.mrb[0].mxu0
    %v3956 = vadd.f32 %v3667, %v3955
    %v3957 = vpop.f32.mrb[0].mxu0
    %3958 = vmatprep.mubr.bf16.mxu0 0
    %3959 = vmatmul.mubr.bf16.gmra.mrb[0].mxu0 %v3442
    %v3960 = vpop.f32.mrb[0].mxu0
    %v3961 = vadd.f32 %v3672, %v3960
    %v3962 = vpop.f32.mrb[0].mxu0
    %v3963 = vpop.f32.mrb[0].mxu0
    %v3964 = vadd.f32 %v3675, %v3963
    %v3965 = vpop.f32.mrb[0].mxu0
    %3966 = vmatprep.mubr.bf16.mxu0 0
    %3967 = vmatmul.mubr.bf16.gmra.mrb[0].mxu0 %v3445
    %v3968 = vpop.f32.mrb[0].mxu0
    %v3969 = vadd.f32 %v3680, %v3968
    %v3970 = vpop.f32.mrb[0].mxu0
    %v3971 = vpop.f32.mrb[0].mxu0
    %v3972 = vadd.f32 %v3683, %v3971
    %v3973 = vpop.f32.mrb[0].mxu0
    %3974 = vmatprep.mubr.bf16.mxu0 0
    %3975 = vmatmul.mubr.bf16.gmra.mrb[0].mxu0 %v3448
    %v3976 = vpop.f32.mrb[0].mxu0
    %v3977 = vadd.f32 %v3688, %v3976
    %v3978 = vpop.f32.mrb[0].mxu0
    %v3979 = vpop.f32.mrb[0].mxu0
    %v3980 = vadd.f32 %v3691, %v3979
    %v3981 = vpop.f32.mrb[0].mxu0
    %3982 = vmatprep.mubr.bf16.mxu0 0
    %3983 = vmatmul.mubr.bf16.gmra.mrb[0].mxu0 %v3451
    %v3984 = vpop.f32.mrb[0].mxu0
    %v3985 = vadd.f32 %v3696, %v3984
    %v3986 = vpop.f32.mrb[0].mxu0
    %v3987 = vpop.f32.mrb[0].mxu0
    %v3988 = vadd.f32 %v3699, %v3987
    %v3989 = vpop.f32.mrb[0].mxu0
    %3990 = vmatprep.mubr.bf16.mxu0 0
    %3991 = vmatmul.mubr.bf16.gmra.mrb[0].mxu0 %v3454
    %v3992 = vpop.f32.mrb[0].mxu0
    %v3993 = vadd.f32 %v3704, %v3992
    %v3994 = vpop.f32.mrb[0].mxu0
    %v3995 = vpop.f32.mrb[0].mxu0
    %v3996 = vadd.f32 %v3707, %v3995
    %v3997 = vpop.f32.mrb[0].mxu0
    %3998 = vmatprep.mubr.bf16.mxu0 0
    %3999 = vmatmul.mubr.bf16.gmra.mrb[0].mxu0 %v3457
    %v4000 = vpop.f32.mrb[0].mxu0
    %v4001 = vadd.f32 %v3712, %v4000
    %v4002 = vpop.f32.mrb[0].mxu0
    %v4003 = vpop.f32.mrb[0].mxu0
    %v4004 = vadd.f32 %v3715, %v4003
    %v4005 = vpop.f32.mrb[0].mxu0
    %4006 = vmatprep.mubr.bf16.mxu0 0
    %4007 = vmatmul.mubr.bf16.gmra.mrb[0].mxu0 %v3460
    %v4008 = vpop.f32.mrb[0].mxu0
    %v4009 = vadd.f32 %v3720, %v4008
    %v4010 = vpop.f32.mrb[0].mxu0
    %v4011 = vpop.f32.mrb[0].mxu0
    %v4012 = vadd.f32 %v3723, %v4011
    %v4013 = vpop.f32.mrb[0].mxu0
    %4014 = vmatprep.mubr.bf16.mxu0 0
    %4015 = vmatmul.mubr.bf16.gmra.mrb[0].mxu0 %v3463
    %v4016 = vpop.f32.mrb[0].mxu0
    %v4017 = vadd.f32 %v3728, %v4016
    %v4018 = vpop.f32.mrb[0].mxu0
    %v4019 = vpop.f32.mrb[0].mxu0
    %v4020 = vadd.f32 %v3731, %v4019
    %v4021 = vpop.f32.mrb[0].mxu0
    %4022 = vmatprep.mubr.bf16.mxu0 0
    %4023 = vmatmul.mubr.bf16.gmra.mrb[0].mxu0 %v3466
    %v4024 = vpop.f32.mrb[0].mxu0
    %v4025 = vadd.f32 %v3736, %v4024
    %v4026 = vpop.f32.mrb[0].mxu0
    %v4027 = vpop.f32.mrb[0].mxu0
    %v4028 = vadd.f32 %v3739, %v4027
    %v4029 = vpop.f32.mrb[0].mxu0
    %4030 = vmatprep.mubr.bf16.mxu0 0
    %4031 = vmatmul.mubr.bf16.gmra.mrb[0].mxu0 %v3469
    %v4032 = vpop.f32.mrb[0].mxu0
    %v4033 = vadd.f32 %v3744, %v4032
    %v4034 = vpop.f32.mrb[0].mxu0
    %v4035 = vpop.f32.mrb[0].mxu0
    %v4036 = vadd.f32 %v3747, %v4035
    %v4037 = vpop.f32.mrb[0].mxu0
    %4038 = vmatprep.mubr.bf16.mxu0 0
    %4039 = vmatmul.mubr.bf16.gmra.mrb[0].mxu0 %v3472
    %v4040 = vpop.f32.mrb[0].mxu0
    %v4041 = vadd.f32 %v3752, %v4040
    %v4042 = vpop.f32.mrb[0].mxu0
    %v4043 = vpop.f32.mrb[0].mxu0
    %v4044 = vadd.f32 %v3755, %v4043
    %v4045 = vpop.f32.mrb[0].mxu0
    %4046 = vmatprep.mubr.bf16.mxu0 0
    %4047 = vmatmul.mubr.bf16.gmra.mrb[0].mxu0 %v3475
    %v4048 = vpop.f32.mrb[0].mxu0
    %v4049 = vadd.f32 %v3760, %v4048
    %v4050 = vpop.f32.mrb[0].mxu0
    %v4051 = vpop.f32.mrb[0].mxu0
    %v4052 = vadd.f32 %v3763, %v4051
    %v4053 = vpop.f32.mrb[0].mxu0
    %4054 = vdwg.mxu0
    %v4055 = vld [vmem:[%s5] sm:$0x1]
    %v4056 = vld [vmem:[%s6] sm:$0x1]
    %v4057 = vsel %vm502, %v3801, 0.0
    %v4058 = vsel %vm502, %v3804, 0.0
    %v4059 = vadd.f32 %v4057, %v4058
    %v4060 = vsel %vm502, %v3809, 0.0
    %v4061 = vadd.f32 %v4059, %v4060
    %v4062 = vsel %vm502, %v3812, 0.0
    %v4063 = vadd.f32 %v4061, %v4062
    %v4064 = vsel %vm502, %v3817, 0.0
    %v4065 = vadd.f32 %v4063, %v4064
    %v4066 = vsel %vm502, %v3820, 0.0
    %v4067 = vadd.f32 %v4065, %v4066
    %v4068 = vsel %vm502, %v3825, 0.0
    %v4069 = vadd.f32 %v4067, %v4068
    %v4070 = vsel %vm502, %v3828, 0.0
    %v4071 = vadd.f32 %v4069, %v4070
    %v4072 = vsel %vm502, %v3833, 0.0
    %v4073 = vadd.f32 %v4071, %v4072
    %v4074 = vsel %vm502, %v3836, 0.0
    %v4075 = vadd.f32 %v4073, %v4074
    %v4076 = vsel %vm502, %v3841, 0.0
    %v4077 = vadd.f32 %v4075, %v4076
    %v4078 = vsel %vm502, %v3844, 0.0
    %v4079 = vadd.f32 %v4077, %v4078
    %v4080 = vsel %vm502, %v3849, 0.0
    %v4081 = vadd.f32 %v4079, %v4080
    %v4082 = vsel %vm502, %v3852, 0.0
    %v4083 = vadd.f32 %v4081, %v4082
    %v4084 = vsel %vm502, %v3857, 0.0
    %v4085 = vadd.f32 %v4083, %v4084
    %v4086 = vsel %vm502, %v3860, 0.0
    %v4087 = vadd.f32 %v4085, %v4086
    %v4088 = vsel %vm502, %v3865, 0.0
    %v4089 = vadd.f32 %v4087, %v4088
    %v4090 = vsel %vm502, %v3868, 0.0
    %v4091 = vadd.f32 %v4089, %v4090
    %v4092 = vsel %vm502, %v3873, 0.0
    %v4093 = vadd.f32 %v4091, %v4092
    %v4094 = vsel %vm502, %v3876, 0.0
    %v4095 = vadd.f32 %v4093, %v4094
    %v4096 = vsel %vm502, %v3881, 0.0
    %v4097 = vadd.f32 %v4095, %v4096
    %v4098 = vsel %vm502, %v3884, 0.0
    %v4099 = vadd.f32 %v4097, %v4098
    %v4100 = vsel %vm502, %v3889, 0.0
    %v4101 = vadd.f32 %v4099, %v4100
    %v4102 = vsel %vm502, %v3892, 0.0
    %v4103 = vadd.f32 %v4101, %v4102
    %v4104 = vsel %vm502, %v3897, 0.0
    %v4105 = vadd.f32 %v4103, %v4104
    %v4106 = vsel %vm502, %v3900, 0.0
    %v4107 = vadd.f32 %v4105, %v4106
    %v4108 = vsel %vm502, %v3905, 0.0
    %v4109 = vadd.f32 %v4107, %v4108
    %v4110 = vsel %vm502, %v3908, 0.0
    %v4111 = vadd.f32 %v4109, %v4110
    %v4112 = vsel %vm502, %v3913, 0.0
    %v4113 = vadd.f32 %v4111, %v4112
    %v4114 = vsel %vm502, %v3916, 0.0
    %v4115 = vadd.f32 %v4113, %v4114
    %v4116 = vsel %vm502, %v3921, 0.0
    %v4117 = vadd.f32 %v4115, %v4116
    %v4118 = vsel %vm502, %v3924, 0.0
    %v4119 = vadd.f32 %v4117, %v4118
    %v4120 = vsel %vm502, %v3929, 0.0
    %v4121 = vadd.f32 %v4119, %v4120
    %v4122 = vsel %vm502, %v3932, 0.0
    %v4123 = vadd.f32 %v4121, %v4122
    %v4124 = vsel %vm502, %v3937, 0.0
    %v4125 = vadd.f32 %v4123, %v4124
    %v4126 = vsel %vm502, %v3940, 0.0
    %v4127 = vadd.f32 %v4125, %v4126
    %v4128 = vsel %vm502, %v3945, 0.0
    %v4129 = vadd.f32 %v4127, %v4128
    %v4130 = vsel %vm502, %v3948, 0.0
    %v4131 = vadd.f32 %v4129, %v4130
    %v4132 = vsel %vm502, %v3953, 0.0
    %v4133 = vadd.f32 %v4131, %v4132
    %v4134 = vsel %vm502, %v3956, 0.0
    %v4135 = vadd.f32 %v4133, %v4134
    %v4136 = vsel %vm502, %v3961, 0.0
    %v4137 = vadd.f32 %v4135, %v4136
    %v4138 = vsel %vm502, %v3964, 0.0
    %v4139 = vadd.f32 %v4137, %v4138
    %v4140 = vsel %vm502, %v3969, 0.0
    %v4141 = vadd.f32 %v4139, %v4140
    %v4142 = vsel %vm502, %v3972, 0.0
    %v4143 = vadd.f32 %v4141, %v4142
    %v4144 = vsel %vm502, %v3977, 0.0
    %v4145 = vadd.f32 %v4143, %v4144
    %v4146 = vsel %vm502, %v3980, 0.0
    %v4147 = vadd.f32 %v4145, %v4146
    %v4148 = vsel %vm502, %v3985, 0.0
    %v4149 = vadd.f32 %v4147, %v4148
    %v4150 = vsel %vm502, %v3988, 0.0
    %v4151 = vadd.f32 %v4149, %v4150
    %v4152 = vsel %vm502, %v3993, 0.0
    %v4153 = vadd.f32 %v4151, %v4152
    %v4154 = vsel %vm502, %v3996, 0.0
    %v4155 = vadd.f32 %v4153, %v4154
    %v4156 = vsel %vm502, %v4001, 0.0
    %v4157 = vadd.f32 %v4155, %v4156
    %v4158 = vsel %vm502, %v4004, 0.0
    %v4159 = vadd.f32 %v4157, %v4158
    %v4160 = vsel %vm502, %v4009, 0.0
    %v4161 = vadd.f32 %v4159, %v4160
    %v4162 = vsel %vm502, %v4012, 0.0
    %v4163 = vadd.f32 %v4161, %v4162
    %v4164 = vsel %vm502, %v4017, 0.0
    %v4165 = vadd.f32 %v4163, %v4164
    %v4166 = vsel %vm502, %v4020, 0.0
    %v4167 = vadd.f32 %v4165, %v4166
    %v4168 = vsel %vm502, %v4025, 0.0
    %v4169 = vadd.f32 %v4167, %v4168
    %v4170 = vsel %vm502, %v4028, 0.0
    %v4171 = vadd.f32 %v4169, %v4170
    %v4172 = vsel %vm502, %v4033, 0.0
    %v4173 = vadd.f32 %v4171, %v4172
    %v4174 = vsel %vm502, %v4036, 0.0
    %v4175 = vadd.f32 %v4173, %v4174
    %v4176 = vsel %vm502, %v4041, 0.0
    %v4177 = vadd.f32 %v4175, %v4176
    %v4178 = vsel %vm502, %v4044, 0.0
    %v4179 = vadd.f32 %v4177, %v4178
    %v4180 = vsel %vm502, %v4049, 0.0
    %v4181 = vadd.f32 %v4179, %v4180
    %v4182 = vsel %vm502, %v4052, 0.0
    %v4183 = vadd.f32 %v4181, %v4182
    %v4184 = vrot.slane %v4183, 4
    %v4185 = vadd.f32 %v4183, %v4184
    %v4186 = vrot.slane %v4185, 2
    %v4187 = vadd.f32 %v4185, %v4186
    %v4188 = vrot.slane %v4187, 1
    %v4189 = vadd.f32 %v4187, %v4188
    %v4190 = vmul.f32 %v3801, %v3801
    %v4191 = vmul.f32 %v3804, %v3804
    %v4192 = vmul.f32 %v3809, %v3809
    %v4193 = vmul.f32 %v3812, %v3812
    %v4194 = vmul.f32 %v3817, %v3817
    %v4195 = vmul.f32 %v3820, %v3820
    %v4196 = vmul.f32 %v3825, %v3825
    %v4197 = vmul.f32 %v3828, %v3828
    %v4198 = vmul.f32 %v3833, %v3833
    %v4199 = vmul.f32 %v3836, %v3836
    %v4200 = vmul.f32 %v3841, %v3841
    %v4201 = vmul.f32 %v3844, %v3844
    %v4202 = vmul.f32 %v3849, %v3849
    %v4203 = vmul.f32 %v3852, %v3852
    %v4204 = vmul.f32 %v3857, %v3857
    %v4205 = vmul.f32 %v3860, %v3860
    %v4206 = vmul.f32 %v3865, %v3865
    %v4207 = vmul.f32 %v3868, %v3868
    %v4208 = vmul.f32 %v3873, %v3873
    %v4209 = vmul.f32 %v3876, %v3876
    %v4210 = vmul.f32 %v3881, %v3881
    %v4211 = vmul.f32 %v3884, %v3884
    %v4212 = vmul.f32 %v3889, %v3889
    %v4213 = vmul.f32 %v3892, %v3892
    %v4214 = vmul.f32 %v3897, %v3897
    %v4215 = vmul.f32 %v3900, %v3900
    %v4216 = vmul.f32 %v3905, %v3905
    %v4217 = vmul.f32 %v3908, %v3908
    %v4218 = vmul.f32 %v3913, %v3913
    %v4219 = vmul.f32 %v3916, %v3916
    %v4220 = vmul.f32 %v3921, %v3921
    %v4221 = vmul.f32 %v3924, %v3924
    %v4222 = vmul.f32 %v3929, %v3929
    %v4223 = vmul.f32 %v3932, %v3932
    %v4224 = vmul.f32 %v3937, %v3937
    %v4225 = vmul.f32 %v3940, %v3940
    %v4226 = vmul.f32 %v3945, %v3945
    %v4227 = vmul.f32 %v3948, %v3948
    %v4228 = vmul.f32 %v3953, %v3953
    %v4229 = vmul.f32 %v3956, %v3956
    %v4230 = vmul.f32 %v3961, %v3961
    %v4231 = vmul.f32 %v3964, %v3964
    %v4232 = vmul.f32 %v3969, %v3969
    %v4233 = vmul.f32 %v3972, %v3972
    %v4234 = vmul.f32 %v3977, %v3977
    %v4235 = vmul.f32 %v3980, %v3980
    %v4236 = vmul.f32 %v3985, %v3985
    %v4237 = vmul.f32 %v3988, %v3988
    %v4238 = vmul.f32 %v3993, %v3993
    %v4239 = vmul.f32 %v3996, %v3996
    %v4240 = vmul.f32 %v4001, %v4001
    %v4241 = vmul.f32 %v4004, %v4004
    %v4242 = vmul.f32 %v4009, %v4009
    %v4243 = vmul.f32 %v4012, %v4012
    %v4244 = vmul.f32 %v4017, %v4017
    %v4245 = vmul.f32 %v4020, %v4020
    %v4246 = vmul.f32 %v4025, %v4025
    %v4247 = vmul.f32 %v4028, %v4028
    %v4248 = vmul.f32 %v4033, %v4033
    %v4249 = vmul.f32 %v4036, %v4036
    %v4250 = vmul.f32 %v4041, %v4041
    %v4251 = vmul.f32 %v4044, %v4044
    %v4252 = vmul.f32 %v4049, %v4049
    %v4253 = vmul.f32 %v4052, %v4052
    %v4254 = vsel %vm502, %v4190, 0.0
    %v4255 = vsel %vm502, %v4191, 0.0
    %v4256 = vadd.f32 %v4254, %v4255
    %v4257 = vsel %vm502, %v4192, 0.0
    %v4258 = vadd.f32 %v4256, %v4257
    %v4259 = vsel %vm502, %v4193, 0.0
    %v4260 = vadd.f32 %v4258, %v4259
    %v4261 = vsel %vm502, %v4194, 0.0
    %v4262 = vadd.f32 %v4260, %v4261
    %v4263 = vsel %vm502, %v4195, 0.0
    %v4264 = vadd.f32 %v4262, %v4263
    %v4265 = vsel %vm502, %v4196, 0.0
    %v4266 = vadd.f32 %v4264, %v4265
    %v4267 = vsel %vm502, %v4197, 0.0
    %v4268 = vadd.f32 %v4266, %v4267
    %v4269 = vsel %vm502, %v4198, 0.0
    %v4270 = vadd.f32 %v4268, %v4269
    %v4271 = vsel %vm502, %v4199, 0.0
    %v4272 = vadd.f32 %v4270, %v4271
    %v4273 = vsel %vm502, %v4200, 0.0
    %v4274 = vadd.f32 %v4272, %v4273
    %v4275 = vsel %vm502, %v4201, 0.0
    %v4276 = vadd.f32 %v4274, %v4275
    %v4277 = vsel %vm502, %v4202, 0.0
    %v4278 = vadd.f32 %v4276, %v4277
    %v4279 = vsel %vm502, %v4203, 0.0
    %v4280 = vadd.f32 %v4278, %v4279
    %v4281 = vsel %vm502, %v4204, 0.0
    %v4282 = vadd.f32 %v4280, %v4281
    %v4283 = vsel %vm502, %v4205, 0.0
    %v4284 = vadd.f32 %v4282, %v4283
    %v4285 = vsel %vm502, %v4206, 0.0
    %v4286 = vadd.f32 %v4284, %v4285
    %v4287 = vsel %vm502, %v4207, 0.0
    %v4288 = vadd.f32 %v4286, %v4287
    %v4289 = vsel %vm502, %v4208, 0.0
    %v4290 = vadd.f32 %v4288, %v4289
    %v4291 = vsel %vm502, %v4209, 0.0
    %v4292 = vadd.f32 %v4290, %v4291
    %v4293 = vsel %vm502, %v4210, 0.0
    %v4294 = vadd.f32 %v4292, %v4293
    %v4295 = vsel %vm502, %v4211, 0.0
    %v4296 = vadd.f32 %v4294, %v4295
    %v4297 = vsel %vm502, %v4212, 0.0
    %v4298 = vadd.f32 %v4296, %v4297
    %v4299 = vsel %vm502, %v4213, 0.0
    %v4300 = vadd.f32 %v4298, %v4299
    %v4301 = vsel %vm502, %v4214, 0.0
    %v4302 = vadd.f32 %v4300, %v4301
    %v4303 = vsel %vm502, %v4215, 0.0
    %v4304 = vadd.f32 %v4302, %v4303
    %v4305 = vsel %vm502, %v4216, 0.0
    %v4306 = vadd.f32 %v4304, %v4305
    %v4307 = vsel %vm502, %v4217, 0.0
    %v4308 = vadd.f32 %v4306, %v4307
    %v4309 = vsel %vm502, %v4218, 0.0
    %v4310 = vadd.f32 %v4308, %v4309
    %v4311 = vsel %vm502, %v4219, 0.0
    %v4312 = vadd.f32 %v4310, %v4311
    %v4313 = vsel %vm502, %v4220, 0.0
    %v4314 = vadd.f32 %v4312, %v4313
    %v4315 = vsel %vm502, %v4221, 0.0
    %v4316 = vadd.f32 %v4314, %v4315
    %v4317 = vsel %vm502, %v4222, 0.0
    %v4318 = vadd.f32 %v4316, %v4317
    %v4319 = vsel %vm502, %v4223, 0.0
    %v4320 = vadd.f32 %v4318, %v4319
    %v4321 = vsel %vm502, %v4224, 0.0
    %v4322 = vadd.f32 %v4320, %v4321
    %v4323 = vsel %vm502, %v4225, 0.0
    %v4324 = vadd.f32 %v4322, %v4323
    %v4325 = vsel %vm502, %v4226, 0.0
    %v4326 = vadd.f32 %v4324, %v4325
    %v4327 = vsel %vm502, %v4227, 0.0
    %v4328 = vadd.f32 %v4326, %v4327
    %v4329 = vsel %vm502, %v4228, 0.0
    %v4330 = vadd.f32 %v4328, %v4329
    %v4331 = vsel %vm502, %v4229, 0.0
    %v4332 = vadd.f32 %v4330, %v4331
    %v4333 = vsel %vm502, %v4230, 0.0
    %v4334 = vadd.f32 %v4332, %v4333
    %v4335 = vsel %vm502, %v4231, 0.0
    %v4336 = vadd.f32 %v4334, %v4335
    %v4337 = vsel %vm502, %v4232, 0.0
    %v4338 = vadd.f32 %v4336, %v4337
    %v4339 = vsel %vm502, %v4233, 0.0
    %v4340 = vadd.f32 %v4338, %v4339
    %v4341 = vsel %vm502, %v4234, 0.0
    %v4342 = vadd.f32 %v4340, %v4341
    %v4343 = vsel %vm502, %v4235, 0.0
    %v4344 = vadd.f32 %v4342, %v4343
    %v4345 = vsel %vm502, %v4236, 0.0
    %v4346 = vadd.f32 %v4344, %v4345
    %v4347 = vsel %vm502, %v4237, 0.0
    %v4348 = vadd.f32 %v4346, %v4347
    %v4349 = vsel %vm502, %v4238, 0.0
    %v4350 = vadd.f32 %v4348, %v4349
    %v4351 = vsel %vm502, %v4239, 0.0
    %v4352 = vadd.f32 %v4350, %v4351
    %v4353 = vsel %vm502, %v4240, 0.0
    %v4354 = vadd.f32 %v4352, %v4353
    %v4355 = vsel %vm502, %v4241, 0.0
    %v4356 = vadd.f32 %v4354, %v4355
    %v4357 = vsel %vm502, %v4242, 0.0
    %v4358 = vadd.f32 %v4356, %v4357
    %v4359 = vsel %vm502, %v4243, 0.0
    %v4360 = vadd.f32 %v4358, %v4359
    %v4361 = vsel %vm502, %v4244, 0.0
    %v4362 = vadd.f32 %v4360, %v4361
    %v4363 = vsel %vm502, %v4245, 0.0
    %v4364 = vadd.f32 %v4362, %v4363
    %v4365 = vsel %vm502, %v4246, 0.0
    %v4366 = vadd.f32 %v4364, %v4365
    %v4367 = vsel %vm502, %v4247, 0.0
    %v4368 = vadd.f32 %v4366, %v4367
    %v4369 = vsel %vm502, %v4248, 0.0
    %v4370 = vadd.f32 %v4368, %v4369
    %v4371 = vsel %vm502, %v4249, 0.0
    %v4372 = vadd.f32 %v4370, %v4371
    %v4373 = vsel %vm502, %v4250, 0.0
    %v4374 = vadd.f32 %v4372, %v4373
    %v4375 = vsel %vm502, %v4251, 0.0
    %v4376 = vadd.f32 %v4374, %v4375
    %v4377 = vsel %vm502, %v4252, 0.0
    %v4378 = vadd.f32 %v4376, %v4377
    %v4379 = vsel %vm502, %v4253, 0.0
    %v4380 = vadd.f32 %v4378, %v4379
    %v4381 = vrot.slane %v4380, 4
    %v4382 = vadd.f32 %v4380, %v4381
    %v4383 = vrot.slane %v4382, 2
    %v4384 = vadd.f32 %v4382, %v4383
    %v4385 = vrot.slane %v4384, 1
    %v4386 = vadd.f32 %v4384, %v4385
    %v4387 = vmul.f32 %v4189, 0.001953125
    %v4388 = vmul.f32 %v4386, 0.001953125
    %v4389 = vmul.f32 %v4387, %v4387
    %v4390 = vsub.f32 %v4388, %v4389
    %v4391 = vadd.f32 %v4390, 1e-05
    %v4392 = vrsqrt.pop %v4391
    %v4393 = vmul.f32 %v4055, %v4392
    %v4394 = vsub.f32 %v3801, %v4387
    %v4395 = vsub.f32 %v3804, %v4387
    %v4396 = vsub.f32 %v3809, %v4387
    %v4397 = vsub.f32 %v3812, %v4387
    %v4398 = vsub.f32 %v3817, %v4387
    %v4399 = vsub.f32 %v3820, %v4387
    %v4400 = vsub.f32 %v3825, %v4387
    %v4401 = vsub.f32 %v3828, %v4387
    %v4402 = vsub.f32 %v3833, %v4387
    %v4403 = vsub.f32 %v3836, %v4387
    %v4404 = vsub.f32 %v3841, %v4387
    %v4405 = vsub.f32 %v3844, %v4387
    %v4406 = vsub.f32 %v3849, %v4387
    %v4407 = vsub.f32 %v3852, %v4387
    %v4408 = vsub.f32 %v3857, %v4387
    %v4409 = vsub.f32 %v3860, %v4387
    %v4410 = vsub.f32 %v3865, %v4387
    %v4411 = vsub.f32 %v3868, %v4387
    %v4412 = vsub.f32 %v3873, %v4387
    %v4413 = vsub.f32 %v3876, %v4387
    %v4414 = vsub.f32 %v3881, %v4387
    %v4415 = vsub.f32 %v3884, %v4387
    %v4416 = vsub.f32 %v3889, %v4387
    %v4417 = vsub.f32 %v3892, %v4387
    %v4418 = vsub.f32 %v3897, %v4387
    %v4419 = vsub.f32 %v3900, %v4387
    %v4420 = vsub.f32 %v3905, %v4387
    %v4421 = vsub.f32 %v3908, %v4387
    %v4422 = vsub.f32 %v3913, %v4387
    %v4423 = vsub.f32 %v3916, %v4387
    %v4424 = vsub.f32 %v3921, %v4387
    %v4425 = vsub.f32 %v3924, %v4387
    %v4426 = vsub.f32 %v3929, %v4387
    %v4427 = vsub.f32 %v3932, %v4387
    %v4428 = vsub.f32 %v3937, %v4387
    %v4429 = vsub.f32 %v3940, %v4387
    %v4430 = vsub.f32 %v3945, %v4387
    %v4431 = vsub.f32 %v3948, %v4387
    %v4432 = vsub.f32 %v3953, %v4387
    %v4433 = vsub.f32 %v3956, %v4387
    %v4434 = vsub.f32 %v3961, %v4387
    %v4435 = vsub.f32 %v3964, %v4387
    %v4436 = vsub.f32 %v3969, %v4387
    %v4437 = vsub.f32 %v3972, %v4387
    %v4438 = vsub.f32 %v3977, %v4387
    %v4439 = vsub.f32 %v3980, %v4387
    %v4440 = vsub.f32 %v3985, %v4387
    %v4441 = vsub.f32 %v3988, %v4387
    %v4442 = vsub.f32 %v3993, %v4387
    %v4443 = vsub.f32 %v3996, %v4387
    %v4444 = vsub.f32 %v4001, %v4387
    %v4445 = vsub.f32 %v4004, %v4387
    %v4446 = vsub.f32 %v4009, %v4387
    %v4447 = vsub.f32 %v4012, %v4387
    %v4448 = vsub.f32 %v4017, %v4387
    %v4449 = vsub.f32 %v4020, %v4387
    %v4450 = vsub.f32 %v4025, %v4387
    %v4451 = vsub.f32 %v4028, %v4387
    %v4452 = vsub.f32 %v4033, %v4387
    %v4453 = vsub.f32 %v4036, %v4387
    %v4454 = vsub.f32 %v4041, %v4387
    %v4455 = vsub.f32 %v4044, %v4387
    %v4456 = vsub.f32 %v4049, %v4387
    %v4457 = vsub.f32 %v4052, %v4387
    %v4459 = vlaneseq
    %v4460 = vshrl.u32 %v4459, 7
    %v4461 = vsub.s32 0, %v4460
    %v4462 = vrot.slane %v4393, %v4461
    %v4464 = vmul.f32 %v4394, %v4462
    %v4465 = vmul.f32 %v4395, %v4462
    %v4466 = vmul.f32 %v4396, %v4462
    %v4467 = vmul.f32 %v4397, %v4462
    %v4468 = vmul.f32 %v4398, %v4462
    %v4469 = vmul.f32 %v4399, %v4462
    %v4470 = vmul.f32 %v4400, %v4462
    %v4471 = vmul.f32 %v4401, %v4462
    %v4472 = vmul.f32 %v4402, %v4462
    %v4473 = vmul.f32 %v4403, %v4462
    %v4474 = vmul.f32 %v4404, %v4462
    %v4475 = vmul.f32 %v4405, %v4462
    %v4476 = vmul.f32 %v4406, %v4462
    %v4477 = vmul.f32 %v4407, %v4462
    %v4478 = vmul.f32 %v4408, %v4462
    %v4479 = vmul.f32 %v4409, %v4462
    %v4480 = vmul.f32 %v4410, %v4462
    %v4481 = vmul.f32 %v4411, %v4462
    %v4482 = vmul.f32 %v4412, %v4462
    %v4483 = vmul.f32 %v4413, %v4462
    %v4484 = vmul.f32 %v4414, %v4462
    %v4485 = vmul.f32 %v4415, %v4462
    %v4486 = vmul.f32 %v4416, %v4462
    %v4487 = vmul.f32 %v4417, %v4462
    %v4488 = vmul.f32 %v4418, %v4462
    %v4489 = vmul.f32 %v4419, %v4462
    %v4490 = vmul.f32 %v4420, %v4462
    %v4491 = vmul.f32 %v4421, %v4462
    %v4492 = vmul.f32 %v4422, %v4462
    %v4493 = vmul.f32 %v4423, %v4462
    %v4494 = vmul.f32 %v4424, %v4462
    %v4495 = vmul.f32 %v4425, %v4462
    %v4496 = vmul.f32 %v4426, %v4462
    %v4497 = vmul.f32 %v4427, %v4462
    %v4498 = vmul.f32 %v4428, %v4462
    %v4499 = vmul.f32 %v4429, %v4462
    %v4500 = vmul.f32 %v4430, %v4462
    %v4501 = vmul.f32 %v4431, %v4462
    %v4502 = vmul.f32 %v4432, %v4462
    %v4503 = vmul.f32 %v4433, %v4462
    %v4504 = vmul.f32 %v4434, %v4462
    %v4505 = vmul.f32 %v4435, %v4462
    %v4506 = vmul.f32 %v4436, %v4462
    %v4507 = vmul.f32 %v4437, %v4462
    %v4508 = vmul.f32 %v4438, %v4462
    %v4509 = vmul.f32 %v4439, %v4462
    %v4510 = vmul.f32 %v4440, %v4462
    %v4511 = vmul.f32 %v4441, %v4462
    %v4512 = vmul.f32 %v4442, %v4462
    %v4513 = vmul.f32 %v4443, %v4462
    %v4514 = vmul.f32 %v4444, %v4462
    %v4515 = vmul.f32 %v4445, %v4462
    %v4516 = vmul.f32 %v4446, %v4462
    %v4517 = vmul.f32 %v4447, %v4462
    %v4518 = vmul.f32 %v4448, %v4462
    %v4519 = vmul.f32 %v4449, %v4462
    %v4520 = vmul.f32 %v4450, %v4462
    %v4521 = vmul.f32 %v4451, %v4462
    %v4522 = vmul.f32 %v4452, %v4462
    %v4523 = vmul.f32 %v4453, %v4462
    %v4524 = vmul.f32 %v4454, %v4462
    %v4525 = vmul.f32 %v4455, %v4462
    %v4526 = vmul.f32 %v4456, %v4462
    %v4527 = vmul.f32 %v4457, %v4462
    %v4529 = vlaneseq
    %v4530 = vshrl.u32 %v4529, 7
    %v4531 = vsub.s32 0, %v4530
    %v4532 = vrot.slane %v4056, %v4531
    %v4534 = vadd.f32 %v4464, %v4532
    %v4535 = vadd.f32 %v4465, %v4532
    %v4536 = vadd.f32 %v4466, %v4532
    %v4537 = vadd.f32 %v4467, %v4532
    %v4538 = vadd.f32 %v4468, %v4532
    %v4539 = vadd.f32 %v4469, %v4532
    %v4540 = vadd.f32 %v4470, %v4532
    %v4541 = vadd.f32 %v4471, %v4532
    %v4542 = vadd.f32 %v4472, %v4532
    %v4543 = vadd.f32 %v4473, %v4532
    %v4544 = vadd.f32 %v4474, %v4532
    %v4545 = vadd.f32 %v4475, %v4532
    %v4546 = vadd.f32 %v4476, %v4532
    %v4547 = vadd.f32 %v4477, %v4532
    %v4548 = vadd.f32 %v4478, %v4532
    %v4549 = vadd.f32 %v4479, %v4532
    %v4550 = vadd.f32 %v4480, %v4532
    %v4551 = vadd.f32 %v4481, %v4532
    %v4552 = vadd.f32 %v4482, %v4532
    %v4553 = vadd.f32 %v4483, %v4532
    %v4554 = vadd.f32 %v4484, %v4532
    %v4555 = vadd.f32 %v4485, %v4532
    %v4556 = vadd.f32 %v4486, %v4532
    %v4557 = vadd.f32 %v4487, %v4532
    %v4558 = vadd.f32 %v4488, %v4532
    %v4559 = vadd.f32 %v4489, %v4532
    %v4560 = vadd.f32 %v4490, %v4532
    %v4561 = vadd.f32 %v4491, %v4532
    %v4562 = vadd.f32 %v4492, %v4532
    %v4563 = vadd.f32 %v4493, %v4532
    %v4564 = vadd.f32 %v4494, %v4532
    %v4565 = vadd.f32 %v4495, %v4532
    %v4566 = vadd.f32 %v4496, %v4532
    %v4567 = vadd.f32 %v4497, %v4532
    %v4568 = vadd.f32 %v4498, %v4532
    %v4569 = vadd.f32 %v4499, %v4532
    %v4570 = vadd.f32 %v4500, %v4532
    %v4571 = vadd.f32 %v4501, %v4532
    %v4572 = vadd.f32 %v4502, %v4532
    %v4573 = vadd.f32 %v4503, %v4532
    %v4574 = vadd.f32 %v4504, %v4532
    %v4575 = vadd.f32 %v4505, %v4532
    %v4576 = vadd.f32 %v4506, %v4532
    %v4577 = vadd.f32 %v4507, %v4532
    %v4578 = vadd.f32 %v4508, %v4532
    %v4579 = vadd.f32 %v4509, %v4532
    %v4580 = vadd.f32 %v4510, %v4532
    %v4581 = vadd.f32 %v4511, %v4532
    %v4582 = vadd.f32 %v4512, %v4532
    %v4583 = vadd.f32 %v4513, %v4532
    %v4584 = vadd.f32 %v4514, %v4532
    %v4585 = vadd.f32 %v4515, %v4532
    %v4586 = vadd.f32 %v4516, %v4532
    %v4587 = vadd.f32 %v4517, %v4532
    %v4588 = vadd.f32 %v4518, %v4532
    %v4589 = vadd.f32 %v4519, %v4532
    %v4590 = vadd.f32 %v4520, %v4532
    %v4591 = vadd.f32 %v4521, %v4532
    %v4592 = vadd.f32 %v4522, %v4532
    %v4593 = vadd.f32 %v4523, %v4532
    %v4594 = vadd.f32 %v4524, %v4532
    %v4595 = vadd.f32 %v4525, %v4532
    %v4596 = vadd.f32 %v4526, %v4532
    %v4597 = vadd.f32 %v4527, %v4532
    %v4598 = vmax.f32 %v4534, 0.0
    %v4599 = vmax.f32 %v4535, 0.0
    %v4600 = vmax.f32 %v4536, 0.0
    %v4601 = vmax.f32 %v4537, 0.0
    %v4602 = vmax.f32 %v4538, 0.0
    %v4603 = vmax.f32 %v4539, 0.0
    %v4604 = vmax.f32 %v4540, 0.0
    %v4605 = vmax.f32 %v4541, 0.0
    %v4606 = vmax.f32 %v4542, 0.0
    %v4607 = vmax.f32 %v4543, 0.0
    %v4608 = vmax.f32 %v4544, 0.0
    %v4609 = vmax.f32 %v4545, 0.0
    %v4610 = vmax.f32 %v4546, 0.0
    %v4611 = vmax.f32 %v4547, 0.0
    %v4612 = vmax.f32 %v4548, 0.0
    %v4613 = vmax.f32 %v4549, 0.0
    %v4614 = vmax.f32 %v4550, 0.0
    %v4615 = vmax.f32 %v4551, 0.0
    %v4616 = vmax.f32 %v4552, 0.0
    %v4617 = vmax.f32 %v4553, 0.0
    %v4618 = vmax.f32 %v4554, 0.0
    %v4619 = vmax.f32 %v4555, 0.0
    %v4620 = vmax.f32 %v4556, 0.0
    %v4621 = vmax.f32 %v4557, 0.0
    %v4622 = vmax.f32 %v4558, 0.0
    %v4623 = vmax.f32 %v4559, 0.0
    %v4624 = vmax.f32 %v4560, 0.0
    %v4625 = vmax.f32 %v4561, 0.0
    %v4626 = vmax.f32 %v4562, 0.0
    %v4627 = vmax.f32 %v4563, 0.0
    %v4628 = vmax.f32 %v4564, 0.0
    %v4629 = vmax.f32 %v4565, 0.0
    %v4630 = vmax.f32 %v4566, 0.0
    %v4631 = vmax.f32 %v4567, 0.0
    %v4632 = vmax.f32 %v4568, 0.0
    %v4633 = vmax.f32 %v4569, 0.0
    %v4634 = vmax.f32 %v4570, 0.0
    %v4635 = vmax.f32 %v4571, 0.0
    %v4636 = vmax.f32 %v4572, 0.0
    %v4637 = vmax.f32 %v4573, 0.0
    %v4638 = vmax.f32 %v4574, 0.0
    %v4639 = vmax.f32 %v4575, 0.0
    %v4640 = vmax.f32 %v4576, 0.0
    %v4641 = vmax.f32 %v4577, 0.0
    %v4642 = vmax.f32 %v4578, 0.0
    %v4643 = vmax.f32 %v4579, 0.0
    %v4644 = vmax.f32 %v4580, 0.0
    %v4645 = vmax.f32 %v4581, 0.0
    %v4646 = vmax.f32 %v4582, 0.0
    %v4647 = vmax.f32 %v4583, 0.0
    %v4648 = vmax.f32 %v4584, 0.0
    %v4649 = vmax.f32 %v4585, 0.0
    %v4650 = vmax.f32 %v4586, 0.0
    %v4651 = vmax.f32 %v4587, 0.0
    %v4652 = vmax.f32 %v4588, 0.0
    %v4653 = vmax.f32 %v4589, 0.0
    %v4654 = vmax.f32 %v4590, 0.0
    %v4655 = vmax.f32 %v4591, 0.0
    %v4656 = vmax.f32 %v4592, 0.0
    %v4657 = vmax.f32 %v4593, 0.0
    %v4658 = vmax.f32 %v4594, 0.0
    %v4659 = vmax.f32 %v4595, 0.0
    %v4660 = vmax.f32 %v4596, 0.0
    %v4661 = vmax.f32 %v4597, 0.0
    %v4662 = vpack.c.bf16 %v4599, %v4598
    %v4663 = vpack.c.bf16 %v4601, %v4600
    %v4664 = vpack.c.bf16 %v4603, %v4602
    %v4665 = vpack.c.bf16 %v4605, %v4604
    %v4666 = vpack.c.bf16 %v4607, %v4606
    %v4667 = vpack.c.bf16 %v4609, %v4608
    %v4668 = vpack.c.bf16 %v4611, %v4610
    %v4669 = vpack.c.bf16 %v4613, %v4612
    %v4670 = vpack.c.bf16 %v4615, %v4614
    %v4671 = vpack.c.bf16 %v4617, %v4616
    %v4672 = vpack.c.bf16 %v4619, %v4618
    %v4673 = vpack.c.bf16 %v4621, %v4620
    %v4674 = vpack.c.bf16 %v4623, %v4622
    %v4675 = vpack.c.bf16 %v4625, %v4624
    %v4676 = vpack.c.bf16 %v4627, %v4626
    %v4677 = vpack.c.bf16 %v4629, %v4628
    %v4678 = vpack.c.bf16 %v4631, %v4630
    %v4679 = vpack.c.bf16 %v4633, %v4632
    %v4680 = vpack.c.bf16 %v4635, %v4634
    %v4681 = vpack.c.bf16 %v4637, %v4636
    %v4682 = vpack.c.bf16 %v4639, %v4638
    %v4683 = vpack.c.bf16 %v4641, %v4640
    %v4684 = vpack.c.bf16 %v4643, %v4642
    %v4685 = vpack.c.bf16 %v4645, %v4644
    %v4686 = vpack.c.bf16 %v4647, %v4646
    %v4687 = vpack.c.bf16 %v4649, %v4648
    %v4688 = vpack.c.bf16 %v4651, %v4650
    %v4689 = vpack.c.bf16 %v4653, %v4652
    %v4690 = vpack.c.bf16 %v4655, %v4654
    %v4691 = vpack.c.bf16 %v4657, %v4656
    %v4692 = vpack.c.bf16 %v4659, %v4658
    %v4693 = vpack.c.bf16 %v4661, %v4660
    %v4694 = vld [vmem:[%s7] sm:$0xf]
    %v4695 = vld [vmem:[%s7 + $0x4] sm:$0xf]
    %v4696 = vld [vmem:[%s7 + $0x8] sm:$0xf]
    %v4697 = vld [vmem:[%s7 + $0xc] sm:$0xf]
    %v4702 = vunpack.c.l.b16 %v4694
    %v4703 = vunpack.c.l.b16 %v4695
    %v4704 = vunpack.c.l.b16 %v4696
    %v4705 = vunpack.c.l.b16 %v4697
    %v4706 = vpack.c.b16 %v4703, %v4702
    %v4707 = vpack.c.b16 %v4705, %v4704
    %v4711 = vsel %vm502, %v4662, 0
    %v4714 = vsel %vm502, %v4663, 0
    %v4717 = vsel %vm502, %v4664, 0
    %v4720 = vsel %vm502, %v4665, 0
    %v4723 = vsel %vm502, %v4666, 0
    %v4726 = vsel %vm502, %v4667, 0
    %v4729 = vsel %vm502, %v4668, 0
    %v4732 = vsel %vm502, %v4669, 0
    %v4735 = vsel %vm502, %v4670, 0
    %v4738 = vsel %vm502, %v4671, 0
    %v4741 = vsel %vm502, %v4672, 0
    %v4744 = vsel %vm502, %v4673, 0
    %v4747 = vsel %vm502, %v4674, 0
    %v4750 = vsel %vm502, %v4675, 0
    %v4753 = vsel %vm502, %v4676, 0
    %v4756 = vsel %vm502, %v4677, 0
    %v4759 = vsel %vm502, %v4678, 0
    %v4762 = vsel %vm502, %v4679, 0
    %v4765 = vsel %vm502, %v4680, 0
    %v4768 = vsel %vm502, %v4681, 0
    %v4771 = vsel %vm502, %v4682, 0
    %v4774 = vsel %vm502, %v4683, 0
    %v4777 = vsel %vm502, %v4684, 0
    %v4780 = vsel %vm502, %v4685, 0
    %v4783 = vsel %vm502, %v4686, 0
    %v4786 = vsel %vm502, %v4687, 0
    %v4789 = vsel %vm502, %v4688, 0
    %v4792 = vsel %vm502, %v4689, 0
    %v4795 = vsel %vm502, %v4690, 0
    %v4798 = vsel %vm502, %v4691, 0
    %v4801 = vsel %vm502, %v4692, 0
    %v4804 = vsel %vm502, %v4693, 0
    %4806 = vmatprep.subr.bf16.mxu0 0
    %4807 = vmatpush1.bf16.msra.mxu0 %v4706
    %4808 = vmatprep.subr.bf16.mxu0 0
    %4809 = vmatpush1.bf16.msra.mxu0 %v4707
    %4810 = vmatprep.subr.bf16.mxu0 0
    %4811 = vmatpush1.bf16.msra.mxu0 0
    %4812 = vmatprep.subr.bf16.mxu0 0
    %4813 = vmatpush1.bf16.msra.mxu0 0
    %4814 = vmatprep.subr.bf16.mxu0 0
    %4815 = vmatpush1.bf16.msra.mxu0 0
    %4816 = vmatprep.subr.bf16.mxu0 0
    %4817 = vmatpush1.bf16.msra.mxu0 0
    %4818 = vmatprep.subr.bf16.mxu0 0
    %4819 = vmatpush1.bf16.msra.mxu0 0
    %4820 = vmatprep.subr.bf16.mxu0 0
    %4821 = vmatpush1.bf16.msra.mxu0 0
    %4822 = vmatprep.subr.bf16.mxu0 0
    %4823 = vmatpush1.bf16.msra.mxu0 0
    %4824 = vmatprep.subr.bf16.mxu0 0
    %4825 = vmatpush1.bf16.msra.mxu0 0
    %4826 = vmatprep.subr.bf16.mxu0 0
    %4827 = vmatpush1.bf16.msra.mxu0 0
    %4828 = vmatprep.subr.bf16.mxu0 0
    %4829 = vmatpush1.bf16.msra.mxu0 0
    %4830 = vmatprep.subr.bf16.mxu0 0
    %4831 = vmatpush1.bf16.msra.mxu0 0
    %4832 = vmatprep.subr.bf16.mxu0 0
    %4833 = vmatpush1.bf16.msra.mxu0 0
    %4834 = vmatprep.subr.bf16.mxu0 0
    %4835 = vmatpush1.bf16.msra.mxu0 0
    %4836 = vmatprep.subr.bf16.mxu0 0
    %4837 = vmatpush1.bf16.msra.mxu0 0
    %4838 = vmatprep.mubr.bf16.mxu0 0
    %4839 = vmatmul.mubr.bf16.gmra.mrb[0].mxu0 %v4711
    %v4840 = vpop.f32.mrb[0].mxu0
    %v4841 = vadd.f32 0.0, %v4840
    %v4842 = vpop.f32.mrb[0].mxu0
    %v4843 = vpop.f32.mrb[0].mxu0
    %v4844 = vadd.f32 0.0, %v4843
    %v4845 = vpop.f32.mrb[0].mxu0
    %4846 = vmatprep.mubr.bf16.mxu0 0
    %4847 = vmatmul.mubr.bf16.gmra.mrb[0].mxu0 %v4714
    %v4848 = vpop.f32.mrb[0].mxu0
    %v4849 = vadd.f32 0.0, %v4848
    %v4850 = vpop.f32.mrb[0].mxu0
    %v4851 = vpop.f32.mrb[0].mxu0
    %v4852 = vadd.f32 0.0, %v4851
    %v4853 = vpop.f32.mrb[0].mxu0
    %4854 = vmatprep.mubr.bf16.mxu0 0
    %4855 = vmatmul.mubr.bf16.gmra.mrb[0].mxu0 %v4717
    %v4856 = vpop.f32.mrb[0].mxu0
    %v4857 = vadd.f32 0.0, %v4856
    %v4858 = vpop.f32.mrb[0].mxu0
    %v4859 = vpop.f32.mrb[0].mxu0
    %v4860 = vadd.f32 0.0, %v4859
    %v4861 = vpop.f32.mrb[0].mxu0
    %4862 = vmatprep.mubr.bf16.mxu0 0
    %4863 = vmatmul.mubr.bf16.gmra.mrb[0].mxu0 %v4720
    %v4864 = vpop.f32.mrb[0].mxu0
    %v4865 = vadd.f32 0.0, %v4864
    %v4866 = vpop.f32.mrb[0].mxu0
    %v4867 = vpop.f32.mrb[0].mxu0
    %v4868 = vadd.f32 0.0, %v4867
    %v4869 = vpop.f32.mrb[0].mxu0
    %4870 = vmatprep.mubr.bf16.mxu0 0
    %4871 = vmatmul.mubr.bf16.gmra.mrb[0].mxu0 %v4723
    %v4872 = vpop.f32.mrb[0].mxu0
    %v4873 = vadd.f32 0.0, %v4872
    %v4874 = vpop.f32.mrb[0].mxu0
    %v4875 = vpop.f32.mrb[0].mxu0
    %v4876 = vadd.f32 0.0, %v4875
    %v4877 = vpop.f32.mrb[0].mxu0
    %4878 = vmatprep.mubr.bf16.mxu0 0
    %4879 = vmatmul.mubr.bf16.gmra.mrb[0].mxu0 %v4726
    %v4880 = vpop.f32.mrb[0].mxu0
    %v4881 = vadd.f32 0.0, %v4880
    %v4882 = vpop.f32.mrb[0].mxu0
    %v4883 = vpop.f32.mrb[0].mxu0
    %v4884 = vadd.f32 0.0, %v4883
    %v4885 = vpop.f32.mrb[0].mxu0
    %4886 = vmatprep.mubr.bf16.mxu0 0
    %4887 = vmatmul.mubr.bf16.gmra.mrb[0].mxu0 %v4729
    %v4888 = vpop.f32.mrb[0].mxu0
    %v4889 = vadd.f32 0.0, %v4888
    %v4890 = vpop.f32.mrb[0].mxu0
    %v4891 = vpop.f32.mrb[0].mxu0
    %v4892 = vadd.f32 0.0, %v4891
    %v4893 = vpop.f32.mrb[0].mxu0
    %4894 = vmatprep.mubr.bf16.mxu0 0
    %4895 = vmatmul.mubr.bf16.gmra.mrb[0].mxu0 %v4732
    %v4896 = vpop.f32.mrb[0].mxu0
    %v4897 = vadd.f32 0.0, %v4896
    %v4898 = vpop.f32.mrb[0].mxu0
    %v4899 = vpop.f32.mrb[0].mxu0
    %v4900 = vadd.f32 0.0, %v4899
    %v4901 = vpop.f32.mrb[0].mxu0
    %4902 = vmatprep.mubr.bf16.mxu0 0
    %4903 = vmatmul.mubr.bf16.gmra.mrb[0].mxu0 %v4735
    %v4904 = vpop.f32.mrb[0].mxu0
    %v4905 = vadd.f32 0.0, %v4904
    %v4906 = vpop.f32.mrb[0].mxu0
    %v4907 = vpop.f32.mrb[0].mxu0
    %v4908 = vadd.f32 0.0, %v4907
    %v4909 = vpop.f32.mrb[0].mxu0
    %4910 = vmatprep.mubr.bf16.mxu0 0
    %4911 = vmatmul.mubr.bf16.gmra.mrb[0].mxu0 %v4738
    %v4912 = vpop.f32.mrb[0].mxu0
    %v4913 = vadd.f32 0.0, %v4912
    %v4914 = vpop.f32.mrb[0].mxu0
    %v4915 = vpop.f32.mrb[0].mxu0
    %v4916 = vadd.f32 0.0, %v4915
    %v4917 = vpop.f32.mrb[0].mxu0
    %4918 = vmatprep.mubr.bf16.mxu0 0
    %4919 = vmatmul.mubr.bf16.gmra.mrb[0].mxu0 %v4741
    %v4920 = vpop.f32.mrb[0].mxu0
    %v4921 = vadd.f32 0.0, %v4920
    %v4922 = vpop.f32.mrb[0].mxu0
    %v4923 = vpop.f32.mrb[0].mxu0
    %v4924 = vadd.f32 0.0, %v4923
    %v4925 = vpop.f32.mrb[0].mxu0
    %4926 = vmatprep.mubr.bf16.mxu0 0
    %4927 = vmatmul.mubr.bf16.gmra.mrb[0].mxu0 %v4744
    %v4928 = vpop.f32.mrb[0].mxu0
    %v4929 = vadd.f32 0.0, %v4928
    %v4930 = vpop.f32.mrb[0].mxu0
    %v4931 = vpop.f32.mrb[0].mxu0
    %v4932 = vadd.f32 0.0, %v4931
    %v4933 = vpop.f32.mrb[0].mxu0
    %4934 = vmatprep.mubr.bf16.mxu0 0
    %4935 = vmatmul.mubr.bf16.gmra.mrb[0].mxu0 %v4747
    %v4936 = vpop.f32.mrb[0].mxu0
    %v4937 = vadd.f32 0.0, %v4936
    %v4938 = vpop.f32.mrb[0].mxu0
    %v4939 = vpop.f32.mrb[0].mxu0
    %v4940 = vadd.f32 0.0, %v4939
    %v4941 = vpop.f32.mrb[0].mxu0
    %4942 = vmatprep.mubr.bf16.mxu0 0
    %4943 = vmatmul.mubr.bf16.gmra.mrb[0].mxu0 %v4750
    %v4944 = vpop.f32.mrb[0].mxu0
    %v4945 = vadd.f32 0.0, %v4944
    %v4946 = vpop.f32.mrb[0].mxu0
    %v4947 = vpop.f32.mrb[0].mxu0
    %v4948 = vadd.f32 0.0, %v4947
    %v4949 = vpop.f32.mrb[0].mxu0
    %4950 = vmatprep.mubr.bf16.mxu0 0
    %4951 = vmatmul.mubr.bf16.gmra.mrb[0].mxu0 %v4753
    %v4952 = vpop.f32.mrb[0].mxu0
    %v4953 = vadd.f32 0.0, %v4952
    %v4954 = vpop.f32.mrb[0].mxu0
    %v4955 = vpop.f32.mrb[0].mxu0
    %v4956 = vadd.f32 0.0, %v4955
    %v4957 = vpop.f32.mrb[0].mxu0
    %4958 = vmatprep.mubr.bf16.mxu0 0
    %4959 = vmatmul.mubr.bf16.gmra.mrb[0].mxu0 %v4756
    %v4960 = vpop.f32.mrb[0].mxu0
    %v4961 = vadd.f32 0.0, %v4960
    %v4962 = vpop.f32.mrb[0].mxu0
    %v4963 = vpop.f32.mrb[0].mxu0
    %v4964 = vadd.f32 0.0, %v4963
    %v4965 = vpop.f32.mrb[0].mxu0
    %4966 = vmatprep.mubr.bf16.mxu0 0
    %4967 = vmatmul.mubr.bf16.gmra.mrb[0].mxu0 %v4759
    %v4968 = vpop.f32.mrb[0].mxu0
    %v4969 = vadd.f32 0.0, %v4968
    %v4970 = vpop.f32.mrb[0].mxu0
    %v4971 = vpop.f32.mrb[0].mxu0
    %v4972 = vadd.f32 0.0, %v4971
    %v4973 = vpop.f32.mrb[0].mxu0
    %4974 = vmatprep.mubr.bf16.mxu0 0
    %4975 = vmatmul.mubr.bf16.gmra.mrb[0].mxu0 %v4762
    %v4976 = vpop.f32.mrb[0].mxu0
    %v4977 = vadd.f32 0.0, %v4976
    %v4978 = vpop.f32.mrb[0].mxu0
    %v4979 = vpop.f32.mrb[0].mxu0
    %v4980 = vadd.f32 0.0, %v4979
    %v4981 = vpop.f32.mrb[0].mxu0
    %4982 = vmatprep.mubr.bf16.mxu0 0
    %4983 = vmatmul.mubr.bf16.gmra.mrb[0].mxu0 %v4765
    %v4984 = vpop.f32.mrb[0].mxu0
    %v4985 = vadd.f32 0.0, %v4984
    %v4986 = vpop.f32.mrb[0].mxu0
    %v4987 = vpop.f32.mrb[0].mxu0
    %v4988 = vadd.f32 0.0, %v4987
    %v4989 = vpop.f32.mrb[0].mxu0
    %4990 = vmatprep.mubr.bf16.mxu0 0
    %4991 = vmatmul.mubr.bf16.gmra.mrb[0].mxu0 %v4768
    %v4992 = vpop.f32.mrb[0].mxu0
    %v4993 = vadd.f32 0.0, %v4992
    %v4994 = vpop.f32.mrb[0].mxu0
    %v4995 = vpop.f32.mrb[0].mxu0
    %v4996 = vadd.f32 0.0, %v4995
    %v4997 = vpop.f32.mrb[0].mxu0
    %4998 = vmatprep.mubr.bf16.mxu0 0
    %4999 = vmatmul.mubr.bf16.gmra.mrb[0].mxu0 %v4771
    %v5000 = vpop.f32.mrb[0].mxu0
    %v5001 = vadd.f32 0.0, %v5000
    %v5002 = vpop.f32.mrb[0].mxu0
    %v5003 = vpop.f32.mrb[0].mxu0
    %v5004 = vadd.f32 0.0, %v5003
    %v5005 = vpop.f32.mrb[0].mxu0
    %5006 = vmatprep.mubr.bf16.mxu0 0
    %5007 = vmatmul.mubr.bf16.gmra.mrb[0].mxu0 %v4774
    %v5008 = vpop.f32.mrb[0].mxu0
    %v5009 = vadd.f32 0.0, %v5008
    %v5010 = vpop.f32.mrb[0].mxu0
    %v5011 = vpop.f32.mrb[0].mxu0
    %v5012 = vadd.f32 0.0, %v5011
    %v5013 = vpop.f32.mrb[0].mxu0
    %5014 = vmatprep.mubr.bf16.mxu0 0
    %5015 = vmatmul.mubr.bf16.gmra.mrb[0].mxu0 %v4777
    %v5016 = vpop.f32.mrb[0].mxu0
    %v5017 = vadd.f32 0.0, %v5016
    %v5018 = vpop.f32.mrb[0].mxu0
    %v5019 = vpop.f32.mrb[0].mxu0
    %v5020 = vadd.f32 0.0, %v5019
    %v5021 = vpop.f32.mrb[0].mxu0
    %5022 = vmatprep.mubr.bf16.mxu0 0
    %5023 = vmatmul.mubr.bf16.gmra.mrb[0].mxu0 %v4780
    %v5024 = vpop.f32.mrb[0].mxu0
    %v5025 = vadd.f32 0.0, %v5024
    %v5026 = vpop.f32.mrb[0].mxu0
    %v5027 = vpop.f32.mrb[0].mxu0
    %v5028 = vadd.f32 0.0, %v5027
    %v5029 = vpop.f32.mrb[0].mxu0
    %5030 = vmatprep.mubr.bf16.mxu0 0
    %5031 = vmatmul.mubr.bf16.gmra.mrb[0].mxu0 %v4783
    %v5032 = vpop.f32.mrb[0].mxu0
    %v5033 = vadd.f32 0.0, %v5032
    %v5034 = vpop.f32.mrb[0].mxu0
    %v5035 = vpop.f32.mrb[0].mxu0
    %v5036 = vadd.f32 0.0, %v5035
    %v5037 = vpop.f32.mrb[0].mxu0
    %5038 = vmatprep.mubr.bf16.mxu0 0
    %5039 = vmatmul.mubr.bf16.gmra.mrb[0].mxu0 %v4786
    %v5040 = vpop.f32.mrb[0].mxu0
    %v5041 = vadd.f32 0.0, %v5040
    %v5042 = vpop.f32.mrb[0].mxu0
    %v5043 = vpop.f32.mrb[0].mxu0
    %v5044 = vadd.f32 0.0, %v5043
    %v5045 = vpop.f32.mrb[0].mxu0
    %5046 = vmatprep.mubr.bf16.mxu0 0
    %5047 = vmatmul.mubr.bf16.gmra.mrb[0].mxu0 %v4789
    %v5048 = vpop.f32.mrb[0].mxu0
    %v5049 = vadd.f32 0.0, %v5048
    %v5050 = vpop.f32.mrb[0].mxu0
    %v5051 = vpop.f32.mrb[0].mxu0
    %v5052 = vadd.f32 0.0, %v5051
    %v5053 = vpop.f32.mrb[0].mxu0
    %5054 = vmatprep.mubr.bf16.mxu0 0
    %5055 = vmatmul.mubr.bf16.gmra.mrb[0].mxu0 %v4792
    %v5056 = vpop.f32.mrb[0].mxu0
    %v5057 = vadd.f32 0.0, %v5056
    %v5058 = vpop.f32.mrb[0].mxu0
    %v5059 = vpop.f32.mrb[0].mxu0
    %v5060 = vadd.f32 0.0, %v5059
    %v5061 = vpop.f32.mrb[0].mxu0
    %5062 = vmatprep.mubr.bf16.mxu0 0
    %5063 = vmatmul.mubr.bf16.gmra.mrb[0].mxu0 %v4795
    %v5064 = vpop.f32.mrb[0].mxu0
    %v5065 = vadd.f32 0.0, %v5064
    %v5066 = vpop.f32.mrb[0].mxu0
    %v5067 = vpop.f32.mrb[0].mxu0
    %v5068 = vadd.f32 0.0, %v5067
    %v5069 = vpop.f32.mrb[0].mxu0
    %5070 = vmatprep.mubr.bf16.mxu0 0
    %5071 = vmatmul.mubr.bf16.gmra.mrb[0].mxu0 %v4798
    %v5072 = vpop.f32.mrb[0].mxu0
    %v5073 = vadd.f32 0.0, %v5072
    %v5074 = vpop.f32.mrb[0].mxu0
    %v5075 = vpop.f32.mrb[0].mxu0
    %v5076 = vadd.f32 0.0, %v5075
    %v5077 = vpop.f32.mrb[0].mxu0
    %5078 = vmatprep.mubr.bf16.mxu0 0
    %5079 = vmatmul.mubr.bf16.gmra.mrb[0].mxu0 %v4801
    %v5080 = vpop.f32.mrb[0].mxu0
    %v5081 = vadd.f32 0.0, %v5080
    %v5082 = vpop.f32.mrb[0].mxu0
    %v5083 = vpop.f32.mrb[0].mxu0
    %v5084 = vadd.f32 0.0, %v5083
    %v5085 = vpop.f32.mrb[0].mxu0
    %5086 = vmatprep.mubr.bf16.mxu0 0
    %5087 = vmatmul.mubr.bf16.gmra.mrb[0].mxu0 %v4804
    %v5088 = vpop.f32.mrb[0].mxu0
    %v5089 = vadd.f32 0.0, %v5088
    %v5090 = vpop.f32.mrb[0].mxu0
    %v5091 = vpop.f32.mrb[0].mxu0
    %v5092 = vadd.f32 0.0, %v5091
    %v5093 = vpop.f32.mrb[0].mxu0
    %5094 = vdwg.mxu0
    %v5095 = vld [vmem:[%s8] sm:$0x1]
    %v5096 = vld [vmem:[%s9] sm:$0x1]
    %v5097 = vadd.f32 %v4841, %v4844
    %v5098 = vadd.f32 %v5097, %v4849
    %v5099 = vadd.f32 %v5098, %v4852
    %v5100 = vadd.f32 %v5099, %v4857
    %v5101 = vadd.f32 %v5100, %v4860
    %v5102 = vadd.f32 %v5101, %v4865
    %v5103 = vadd.f32 %v5102, %v4868
    %v5104 = vadd.f32 %v5103, %v4873
    %v5105 = vadd.f32 %v5104, %v4876
    %v5106 = vadd.f32 %v5105, %v4881
    %v5107 = vadd.f32 %v5106, %v4884
    %v5108 = vadd.f32 %v5107, %v4889
    %v5109 = vadd.f32 %v5108, %v4892
    %v5110 = vadd.f32 %v5109, %v4897
    %v5111 = vadd.f32 %v5110, %v4900
    %v5112 = vadd.f32 %v5111, %v4905
    %v5113 = vadd.f32 %v5112, %v4908
    %v5114 = vadd.f32 %v5113, %v4913
    %v5115 = vadd.f32 %v5114, %v4916
    %v5116 = vadd.f32 %v5115, %v4921
    %v5117 = vadd.f32 %v5116, %v4924
    %v5118 = vadd.f32 %v5117, %v4929
    %v5119 = vadd.f32 %v5118, %v4932
    %v5120 = vadd.f32 %v5119, %v4937
    %v5121 = vadd.f32 %v5120, %v4940
    %v5122 = vadd.f32 %v5121, %v4945
    %v5123 = vadd.f32 %v5122, %v4948
    %v5124 = vadd.f32 %v5123, %v4953
    %v5125 = vadd.f32 %v5124, %v4956
    %v5126 = vadd.f32 %v5125, %v4961
    %v5127 = vadd.f32 %v5126, %v4964
    %v5128 = vadd.f32 %v5127, %v4969
    %v5129 = vadd.f32 %v5128, %v4972
    %v5130 = vadd.f32 %v5129, %v4977
    %v5131 = vadd.f32 %v5130, %v4980
    %v5132 = vadd.f32 %v5131, %v4985
    %v5133 = vadd.f32 %v5132, %v4988
    %v5134 = vadd.f32 %v5133, %v4993
    %v5135 = vadd.f32 %v5134, %v4996
    %v5136 = vadd.f32 %v5135, %v5001
    %v5137 = vadd.f32 %v5136, %v5004
    %v5138 = vadd.f32 %v5137, %v5009
    %v5139 = vadd.f32 %v5138, %v5012
    %v5140 = vadd.f32 %v5139, %v5017
    %v5141 = vadd.f32 %v5140, %v5020
    %v5142 = vadd.f32 %v5141, %v5025
    %v5143 = vadd.f32 %v5142, %v5028
    %v5144 = vadd.f32 %v5143, %v5033
    %v5145 = vadd.f32 %v5144, %v5036
    %v5146 = vadd.f32 %v5145, %v5041
    %v5147 = vadd.f32 %v5146, %v5044
    %v5148 = vadd.f32 %v5147, %v5049
    %v5149 = vadd.f32 %v5148, %v5052
    %v5150 = vadd.f32 %v5149, %v5057
    %v5151 = vadd.f32 %v5150, %v5060
    %v5152 = vadd.f32 %v5151, %v5065
    %v5153 = vadd.f32 %v5152, %v5068
    %v5154 = vadd.f32 %v5153, %v5073
    %v5155 = vadd.f32 %v5154, %v5076
    %v5156 = vadd.f32 %v5155, %v5081
    %v5157 = vadd.f32 %v5156, %v5084
    %v5158 = vadd.f32 %v5157, %v5089
    %v5159 = vadd.f32 %v5158, %v5092
    %v5160 = vrot.slane %v5159, 4
    %v5161 = vadd.f32 %v5159, %v5160
    %v5162 = vrot.slane %v5161, 2
    %v5163 = vadd.f32 %v5161, %v5162
    %v5164 = vrot.slane %v5163, 1
    %v5165 = vadd.f32 %v5163, %v5164
    %v5166 = vmul.f32 %v4841, %v4841
    %v5167 = vmul.f32 %v4844, %v4844
    %v5168 = vmul.f32 %v4849, %v4849
    %v5169 = vmul.f32 %v4852, %v4852
    %v5170 = vmul.f32 %v4857, %v4857
    %v5171 = vmul.f32 %v4860, %v4860
    %v5172 = vmul.f32 %v4865, %v4865
    %v5173 = vmul.f32 %v4868, %v4868
    %v5174 = vmul.f32 %v4873, %v4873
    %v5175 = vmul.f32 %v4876, %v4876
    %v5176 = vmul.f32 %v4881, %v4881
    %v5177 = vmul.f32 %v4884, %v4884
    %v5178 = vmul.f32 %v4889, %v4889
    %v5179 = vmul.f32 %v4892, %v4892
    %v5180 = vmul.f32 %v4897, %v4897
    %v5181 = vmul.f32 %v4900, %v4900
    %v5182 = vmul.f32 %v4905, %v4905
    %v5183 = vmul.f32 %v4908, %v4908
    %v5184 = vmul.f32 %v4913, %v4913
    %v5185 = vmul.f32 %v4916, %v4916
    %v5186 = vmul.f32 %v4921, %v4921
    %v5187 = vmul.f32 %v4924, %v4924
    %v5188 = vmul.f32 %v4929, %v4929
    %v5189 = vmul.f32 %v4932, %v4932
    %v5190 = vmul.f32 %v4937, %v4937
    %v5191 = vmul.f32 %v4940, %v4940
    %v5192 = vmul.f32 %v4945, %v4945
    %v5193 = vmul.f32 %v4948, %v4948
    %v5194 = vmul.f32 %v4953, %v4953
    %v5195 = vmul.f32 %v4956, %v4956
    %v5196 = vmul.f32 %v4961, %v4961
    %v5197 = vmul.f32 %v4964, %v4964
    %v5198 = vmul.f32 %v4969, %v4969
    %v5199 = vmul.f32 %v4972, %v4972
    %v5200 = vmul.f32 %v4977, %v4977
    %v5201 = vmul.f32 %v4980, %v4980
    %v5202 = vmul.f32 %v4985, %v4985
    %v5203 = vmul.f32 %v4988, %v4988
    %v5204 = vmul.f32 %v4993, %v4993
    %v5205 = vmul.f32 %v4996, %v4996
    %v5206 = vmul.f32 %v5001, %v5001
    %v5207 = vmul.f32 %v5004, %v5004
    %v5208 = vmul.f32 %v5009, %v5009
    %v5209 = vmul.f32 %v5012, %v5012
    %v5210 = vmul.f32 %v5017, %v5017
    %v5211 = vmul.f32 %v5020, %v5020
    %v5212 = vmul.f32 %v5025, %v5025
    %v5213 = vmul.f32 %v5028, %v5028
    %v5214 = vmul.f32 %v5033, %v5033
    %v5215 = vmul.f32 %v5036, %v5036
    %v5216 = vmul.f32 %v5041, %v5041
    %v5217 = vmul.f32 %v5044, %v5044
    %v5218 = vmul.f32 %v5049, %v5049
    %v5219 = vmul.f32 %v5052, %v5052
    %v5220 = vmul.f32 %v5057, %v5057
    %v5221 = vmul.f32 %v5060, %v5060
    %v5222 = vmul.f32 %v5065, %v5065
    %v5223 = vmul.f32 %v5068, %v5068
    %v5224 = vmul.f32 %v5073, %v5073
    %v5225 = vmul.f32 %v5076, %v5076
    %v5226 = vmul.f32 %v5081, %v5081
    %v5227 = vmul.f32 %v5084, %v5084
    %v5228 = vmul.f32 %v5089, %v5089
    %v5229 = vmul.f32 %v5092, %v5092
    %v5230 = vadd.f32 %v5166, %v5167
    %v5231 = vadd.f32 %v5230, %v5168
    %v5232 = vadd.f32 %v5231, %v5169
    %v5233 = vadd.f32 %v5232, %v5170
    %v5234 = vadd.f32 %v5233, %v5171
    %v5235 = vadd.f32 %v5234, %v5172
    %v5236 = vadd.f32 %v5235, %v5173
    %v5237 = vadd.f32 %v5236, %v5174
    %v5238 = vadd.f32 %v5237, %v5175
    %v5239 = vadd.f32 %v5238, %v5176
    %v5240 = vadd.f32 %v5239, %v5177
    %v5241 = vadd.f32 %v5240, %v5178
    %v5242 = vadd.f32 %v5241, %v5179
    %v5243 = vadd.f32 %v5242, %v5180
    %v5244 = vadd.f32 %v5243, %v5181
    %v5245 = vadd.f32 %v5244, %v5182
    %v5246 = vadd.f32 %v5245, %v5183
    %v5247 = vadd.f32 %v5246, %v5184
    %v5248 = vadd.f32 %v5247, %v5185
    %v5249 = vadd.f32 %v5248, %v5186
    %v5250 = vadd.f32 %v5249, %v5187
    %v5251 = vadd.f32 %v5250, %v5188
    %v5252 = vadd.f32 %v5251, %v5189
    %v5253 = vadd.f32 %v5252, %v5190
    %v5254 = vadd.f32 %v5253, %v5191
    %v5255 = vadd.f32 %v5254, %v5192
    %v5256 = vadd.f32 %v5255, %v5193
    %v5257 = vadd.f32 %v5256, %v5194
    %v5258 = vadd.f32 %v5257, %v5195
    %v5259 = vadd.f32 %v5258, %v5196
    %v5260 = vadd.f32 %v5259, %v5197
    %v5261 = vadd.f32 %v5260, %v5198
    %v5262 = vadd.f32 %v5261, %v5199
    %v5263 = vadd.f32 %v5262, %v5200
    %v5264 = vadd.f32 %v5263, %v5201
    %v5265 = vadd.f32 %v5264, %v5202
    %v5266 = vadd.f32 %v5265, %v5203
    %v5267 = vadd.f32 %v5266, %v5204
    %v5268 = vadd.f32 %v5267, %v5205
    %v5269 = vadd.f32 %v5268, %v5206
    %v5270 = vadd.f32 %v5269, %v5207
    %v5271 = vadd.f32 %v5270, %v5208
    %v5272 = vadd.f32 %v5271, %v5209
    %v5273 = vadd.f32 %v5272, %v5210
    %v5274 = vadd.f32 %v5273, %v5211
    %v5275 = vadd.f32 %v5274, %v5212
    %v5276 = vadd.f32 %v5275, %v5213
    %v5277 = vadd.f32 %v5276, %v5214
    %v5278 = vadd.f32 %v5277, %v5215
    %v5279 = vadd.f32 %v5278, %v5216
    %v5280 = vadd.f32 %v5279, %v5217
    %v5281 = vadd.f32 %v5280, %v5218
    %v5282 = vadd.f32 %v5281, %v5219
    %v5283 = vadd.f32 %v5282, %v5220
    %v5284 = vadd.f32 %v5283, %v5221
    %v5285 = vadd.f32 %v5284, %v5222
    %v5286 = vadd.f32 %v5285, %v5223
    %v5287 = vadd.f32 %v5286, %v5224
    %v5288 = vadd.f32 %v5287, %v5225
    %v5289 = vadd.f32 %v5288, %v5226
    %v5290 = vadd.f32 %v5289, %v5227
    %v5291 = vadd.f32 %v5290, %v5228
    %v5292 = vadd.f32 %v5291, %v5229
    %v5293 = vrot.slane %v5292, 4
    %v5294 = vadd.f32 %v5292, %v5293
    %v5295 = vrot.slane %v5294, 2
    %v5296 = vadd.f32 %v5294, %v5295
    %v5297 = vrot.slane %v5296, 1
    %v5298 = vadd.f32 %v5296, %v5297
    %v5299 = vmul.f32 %v5165, 0.001953125
    %v5300 = vmul.f32 %v5298, 0.001953125
    %v5301 = vmul.f32 %v5299, %v5299
    %v5302 = vsub.f32 %v5300, %v5301
    %v5303 = vadd.f32 %v5302, 1e-05
    %v5304 = vrsqrt.pop %v5303
    %v5305 = vmul.f32 %v5095, %v5304
    %v5306 = vsub.f32 %v4841, %v5299
    %v5307 = vsub.f32 %v4844, %v5299
    %v5308 = vsub.f32 %v4849, %v5299
    %v5309 = vsub.f32 %v4852, %v5299
    %v5310 = vsub.f32 %v4857, %v5299
    %v5311 = vsub.f32 %v4860, %v5299
    %v5312 = vsub.f32 %v4865, %v5299
    %v5313 = vsub.f32 %v4868, %v5299
    %v5314 = vsub.f32 %v4873, %v5299
    %v5315 = vsub.f32 %v4876, %v5299
    %v5316 = vsub.f32 %v4881, %v5299
    %v5317 = vsub.f32 %v4884, %v5299
    %v5318 = vsub.f32 %v4889, %v5299
    %v5319 = vsub.f32 %v4892, %v5299
    %v5320 = vsub.f32 %v4897, %v5299
    %v5321 = vsub.f32 %v4900, %v5299
    %v5322 = vsub.f32 %v4905, %v5299
    %v5323 = vsub.f32 %v4908, %v5299
    %v5324 = vsub.f32 %v4913, %v5299
    %v5325 = vsub.f32 %v4916, %v5299
    %v5326 = vsub.f32 %v4921, %v5299
    %v5327 = vsub.f32 %v4924, %v5299
    %v5328 = vsub.f32 %v4929, %v5299
    %v5329 = vsub.f32 %v4932, %v5299
    %v5330 = vsub.f32 %v4937, %v5299
    %v5331 = vsub.f32 %v4940, %v5299
    %v5332 = vsub.f32 %v4945, %v5299
    %v5333 = vsub.f32 %v4948, %v5299
    %v5334 = vsub.f32 %v4953, %v5299
    %v5335 = vsub.f32 %v4956, %v5299
    %v5336 = vsub.f32 %v4961, %v5299
    %v5337 = vsub.f32 %v4964, %v5299
    %v5338 = vsub.f32 %v4969, %v5299
    %v5339 = vsub.f32 %v4972, %v5299
    %v5340 = vsub.f32 %v4977, %v5299
    %v5341 = vsub.f32 %v4980, %v5299
    %v5342 = vsub.f32 %v4985, %v5299
    %v5343 = vsub.f32 %v4988, %v5299
    %v5344 = vsub.f32 %v4993, %v5299
    %v5345 = vsub.f32 %v4996, %v5299
    %v5346 = vsub.f32 %v5001, %v5299
    %v5347 = vsub.f32 %v5004, %v5299
    %v5348 = vsub.f32 %v5009, %v5299
    %v5349 = vsub.f32 %v5012, %v5299
    %v5350 = vsub.f32 %v5017, %v5299
    %v5351 = vsub.f32 %v5020, %v5299
    %v5352 = vsub.f32 %v5025, %v5299
    %v5353 = vsub.f32 %v5028, %v5299
    %v5354 = vsub.f32 %v5033, %v5299
    %v5355 = vsub.f32 %v5036, %v5299
    %v5356 = vsub.f32 %v5041, %v5299
    %v5357 = vsub.f32 %v5044, %v5299
    %v5358 = vsub.f32 %v5049, %v5299
    %v5359 = vsub.f32 %v5052, %v5299
    %v5360 = vsub.f32 %v5057, %v5299
    %v5361 = vsub.f32 %v5060, %v5299
    %v5362 = vsub.f32 %v5065, %v5299
    %v5363 = vsub.f32 %v5068, %v5299
    %v5364 = vsub.f32 %v5073, %v5299
    %v5365 = vsub.f32 %v5076, %v5299
    %v5366 = vsub.f32 %v5081, %v5299
    %v5367 = vsub.f32 %v5084, %v5299
    %v5368 = vsub.f32 %v5089, %v5299
    %v5369 = vsub.f32 %v5092, %v5299
    %v5371 = vlaneseq
    %v5372 = vshrl.u32 %v5371, 7
    %v5373 = vsub.s32 0, %v5372
    %v5374 = vrot.slane %v5305, %v5373
    %v5376 = vmul.f32 %v5306, %v5374
    %v5377 = vmul.f32 %v5307, %v5374
    %v5378 = vmul.f32 %v5308, %v5374
    %v5379 = vmul.f32 %v5309, %v5374
    %v5380 = vmul.f32 %v5310, %v5374
    %v5381 = vmul.f32 %v5311, %v5374
    %v5382 = vmul.f32 %v5312, %v5374
    %v5383 = vmul.f32 %v5313, %v5374
    %v5384 = vmul.f32 %v5314, %v5374
    %v5385 = vmul.f32 %v5315, %v5374
    %v5386 = vmul.f32 %v5316, %v5374
    %v5387 = vmul.f32 %v5317, %v5374
    %v5388 = vmul.f32 %v5318, %v5374
    %v5389 = vmul.f32 %v5319, %v5374
    %v5390 = vmul.f32 %v5320, %v5374
    %v5391 = vmul.f32 %v5321, %v5374
    %v5392 = vmul.f32 %v5322, %v5374
    %v5393 = vmul.f32 %v5323, %v5374
    %v5394 = vmul.f32 %v5324, %v5374
    %v5395 = vmul.f32 %v5325, %v5374
    %v5396 = vmul.f32 %v5326, %v5374
    %v5397 = vmul.f32 %v5327, %v5374
    %v5398 = vmul.f32 %v5328, %v5374
    %v5399 = vmul.f32 %v5329, %v5374
    %v5400 = vmul.f32 %v5330, %v5374
    %v5401 = vmul.f32 %v5331, %v5374
    %v5402 = vmul.f32 %v5332, %v5374
    %v5403 = vmul.f32 %v5333, %v5374
    %v5404 = vmul.f32 %v5334, %v5374
    %v5405 = vmul.f32 %v5335, %v5374
    %v5406 = vmul.f32 %v5336, %v5374
    %v5407 = vmul.f32 %v5337, %v5374
    %v5408 = vmul.f32 %v5338, %v5374
    %v5409 = vmul.f32 %v5339, %v5374
    %v5410 = vmul.f32 %v5340, %v5374
    %v5411 = vmul.f32 %v5341, %v5374
    %v5412 = vmul.f32 %v5342, %v5374
    %v5413 = vmul.f32 %v5343, %v5374
    %v5414 = vmul.f32 %v5344, %v5374
    %v5415 = vmul.f32 %v5345, %v5374
    %v5416 = vmul.f32 %v5346, %v5374
    %v5417 = vmul.f32 %v5347, %v5374
    %v5418 = vmul.f32 %v5348, %v5374
    %v5419 = vmul.f32 %v5349, %v5374
    %v5420 = vmul.f32 %v5350, %v5374
    %v5421 = vmul.f32 %v5351, %v5374
    %v5422 = vmul.f32 %v5352, %v5374
    %v5423 = vmul.f32 %v5353, %v5374
    %v5424 = vmul.f32 %v5354, %v5374
    %v5425 = vmul.f32 %v5355, %v5374
    %v5426 = vmul.f32 %v5356, %v5374
    %v5427 = vmul.f32 %v5357, %v5374
    %v5428 = vmul.f32 %v5358, %v5374
    %v5429 = vmul.f32 %v5359, %v5374
    %v5430 = vmul.f32 %v5360, %v5374
    %v5431 = vmul.f32 %v5361, %v5374
    %v5432 = vmul.f32 %v5362, %v5374
    %v5433 = vmul.f32 %v5363, %v5374
    %v5434 = vmul.f32 %v5364, %v5374
    %v5435 = vmul.f32 %v5365, %v5374
    %v5436 = vmul.f32 %v5366, %v5374
    %v5437 = vmul.f32 %v5367, %v5374
    %v5438 = vmul.f32 %v5368, %v5374
    %v5439 = vmul.f32 %v5369, %v5374
    %v5441 = vlaneseq
    %v5442 = vshrl.u32 %v5441, 7
    %v5443 = vsub.s32 0, %v5442
    %v5444 = vrot.slane %v5096, %v5443
    %v5446 = vadd.f32 %v5376, %v5444
    %v5447 = vadd.f32 %v5377, %v5444
    %v5448 = vadd.f32 %v5378, %v5444
    %v5449 = vadd.f32 %v5379, %v5444
    %v5450 = vadd.f32 %v5380, %v5444
    %v5451 = vadd.f32 %v5381, %v5444
    %v5452 = vadd.f32 %v5382, %v5444
    %v5453 = vadd.f32 %v5383, %v5444
    %v5454 = vadd.f32 %v5384, %v5444
    %v5455 = vadd.f32 %v5385, %v5444
    %v5456 = vadd.f32 %v5386, %v5444
    %v5457 = vadd.f32 %v5387, %v5444
    %v5458 = vadd.f32 %v5388, %v5444
    %v5459 = vadd.f32 %v5389, %v5444
    %v5460 = vadd.f32 %v5390, %v5444
    %v5461 = vadd.f32 %v5391, %v5444
    %v5462 = vadd.f32 %v5392, %v5444
    %v5463 = vadd.f32 %v5393, %v5444
    %v5464 = vadd.f32 %v5394, %v5444
    %v5465 = vadd.f32 %v5395, %v5444
    %v5466 = vadd.f32 %v5396, %v5444
    %v5467 = vadd.f32 %v5397, %v5444
    %v5468 = vadd.f32 %v5398, %v5444
    %v5469 = vadd.f32 %v5399, %v5444
    %v5470 = vadd.f32 %v5400, %v5444
    %v5471 = vadd.f32 %v5401, %v5444
    %v5472 = vadd.f32 %v5402, %v5444
    %v5473 = vadd.f32 %v5403, %v5444
    %v5474 = vadd.f32 %v5404, %v5444
    %v5475 = vadd.f32 %v5405, %v5444
    %v5476 = vadd.f32 %v5406, %v5444
    %v5477 = vadd.f32 %v5407, %v5444
    %v5478 = vadd.f32 %v5408, %v5444
    %v5479 = vadd.f32 %v5409, %v5444
    %v5480 = vadd.f32 %v5410, %v5444
    %v5481 = vadd.f32 %v5411, %v5444
    %v5482 = vadd.f32 %v5412, %v5444
    %v5483 = vadd.f32 %v5413, %v5444
    %v5484 = vadd.f32 %v5414, %v5444
    %v5485 = vadd.f32 %v5415, %v5444
    %v5486 = vadd.f32 %v5416, %v5444
    %v5487 = vadd.f32 %v5417, %v5444
    %v5488 = vadd.f32 %v5418, %v5444
    %v5489 = vadd.f32 %v5419, %v5444
    %v5490 = vadd.f32 %v5420, %v5444
    %v5491 = vadd.f32 %v5421, %v5444
    %v5492 = vadd.f32 %v5422, %v5444
    %v5493 = vadd.f32 %v5423, %v5444
    %v5494 = vadd.f32 %v5424, %v5444
    %v5495 = vadd.f32 %v5425, %v5444
    %v5496 = vadd.f32 %v5426, %v5444
    %v5497 = vadd.f32 %v5427, %v5444
    %v5498 = vadd.f32 %v5428, %v5444
    %v5499 = vadd.f32 %v5429, %v5444
    %v5500 = vadd.f32 %v5430, %v5444
    %v5501 = vadd.f32 %v5431, %v5444
    %v5502 = vadd.f32 %v5432, %v5444
    %v5503 = vadd.f32 %v5433, %v5444
    %v5504 = vadd.f32 %v5434, %v5444
    %v5505 = vadd.f32 %v5435, %v5444
    %v5506 = vadd.f32 %v5436, %v5444
    %v5507 = vadd.f32 %v5437, %v5444
    %v5508 = vadd.f32 %v5438, %v5444
    %v5509 = vadd.f32 %v5439, %v5444
    %v5510 = vld [vmem:[#allocation3] sm:$0xff]
    %v5511 = vld [vmem:[#allocation3 + $0x8] sm:$0xff]
    %v5512 = vld [vmem:[#allocation3 + $0x10] sm:$0xff]
    %v5513 = vld [vmem:[#allocation3 + $0x18] sm:$0xff]
    %v5514 = vld [vmem:[#allocation3 + $0x20] sm:$0xff]
    %v5515 = vld [vmem:[#allocation3 + $0x28] sm:$0xff]
    %v5516 = vld [vmem:[#allocation3 + $0x30] sm:$0xff]
    %v5517 = vld [vmem:[#allocation3 + $0x38] sm:$0xff]
    %v5518 = vld [vmem:[#allocation3 + $0x40] sm:$0xff]
    %v5519 = vld [vmem:[#allocation3 + $0x48] sm:$0xff]
    %v5520 = vld [vmem:[#allocation3 + $0x50] sm:$0xff]
    %v5521 = vld [vmem:[#allocation3 + $0x58] sm:$0xff]
    %v5522 = vld [vmem:[#allocation3 + $0x60] sm:$0xff]
    %v5523 = vld [vmem:[#allocation3 + $0x68] sm:$0xff]
    %v5524 = vld [vmem:[#allocation3 + $0x70] sm:$0xff]
    %v5525 = vld [vmem:[#allocation3 + $0x78] sm:$0xff]
    %v5526 = vld [vmem:[#allocation3 + $0x80] sm:$0xff]
    %v5527 = vld [vmem:[#allocation3 + $0x88] sm:$0xff]
    %v5528 = vld [vmem:[#allocation3 + $0x90] sm:$0xff]
    %v5529 = vld [vmem:[#allocation3 + $0x98] sm:$0xff]
    %v5530 = vld [vmem:[#allocation3 + $0xa0] sm:$0xff]
    %v5531 = vld [vmem:[#allocation3 + $0xa8] sm:$0xff]
    %v5532 = vld [vmem:[#allocation3 + $0xb0] sm:$0xff]
    %v5533 = vld [vmem:[#allocation3 + $0xb8] sm:$0xff]
    %v5534 = vld [vmem:[#allocation3 + $0xc0] sm:$0xff]
    %v5535 = vld [vmem:[#allocation3 + $0xc8] sm:$0xff]
    %v5536 = vld [vmem:[#allocation3 + $0xd0] sm:$0xff]
    %v5537 = vld [vmem:[#allocation3 + $0xd8] sm:$0xff]
    %v5538 = vld [vmem:[#allocation3 + $0xe0] sm:$0xff]
    %v5539 = vld [vmem:[#allocation3 + $0xe8] sm:$0xff]
    %v5540 = vld [vmem:[#allocation3 + $0xf0] sm:$0xff]
    %v5541 = vld [vmem:[#allocation3 + $0xf8] sm:$0xff]
    %v5542 = vld [vmem:[#allocation3 + $0x100] sm:$0xff]
    %v5543 = vld [vmem:[#allocation3 + $0x108] sm:$0xff]
    %v5544 = vld [vmem:[#allocation3 + $0x110] sm:$0xff]
    %v5545 = vld [vmem:[#allocation3 + $0x118] sm:$0xff]
    %v5546 = vld [vmem:[#allocation3 + $0x120] sm:$0xff]
    %v5547 = vld [vmem:[#allocation3 + $0x128] sm:$0xff]
    %v5548 = vld [vmem:[#allocation3 + $0x130] sm:$0xff]
    %v5549 = vld [vmem:[#allocation3 + $0x138] sm:$0xff]
    %v5550 = vld [vmem:[#allocation3 + $0x140] sm:$0xff]
    %v5551 = vld [vmem:[#allocation3 + $0x148] sm:$0xff]
    %v5552 = vld [vmem:[#allocation3 + $0x150] sm:$0xff]
    %v5553 = vld [vmem:[#allocation3 + $0x158] sm:$0xff]
    %v5554 = vld [vmem:[#allocation3 + $0x160] sm:$0xff]
    %v5555 = vld [vmem:[#allocation3 + $0x168] sm:$0xff]
    %v5556 = vld [vmem:[#allocation3 + $0x170] sm:$0xff]
    %v5557 = vld [vmem:[#allocation3 + $0x178] sm:$0xff]
    %v5558 = vld [vmem:[#allocation3 + $0x180] sm:$0xff]
    %v5559 = vld [vmem:[#allocation3 + $0x188] sm:$0xff]
    %v5560 = vld [vmem:[#allocation3 + $0x190] sm:$0xff]
    %v5561 = vld [vmem:[#allocation3 + $0x198] sm:$0xff]
    %v5562 = vld [vmem:[#allocation3 + $0x1a0] sm:$0xff]
    %v5563 = vld [vmem:[#allocation3 + $0x1a8] sm:$0xff]
    %v5564 = vld [vmem:[#allocation3 + $0x1b0] sm:$0xff]
    %v5565 = vld [vmem:[#allocation3 + $0x1b8] sm:$0xff]
    %v5566 = vld [vmem:[#allocation3 + $0x1c0] sm:$0xff]
    %v5567 = vld [vmem:[#allocation3 + $0x1c8] sm:$0xff]
    %v5568 = vld [vmem:[#allocation3 + $0x1d0] sm:$0xff]
    %v5569 = vld [vmem:[#allocation3 + $0x1d8] sm:$0xff]
    %v5570 = vld [vmem:[#allocation3 + $0x1e0] sm:$0xff]
    %v5571 = vld [vmem:[#allocation3 + $0x1e8] sm:$0xff]
    %v5572 = vld [vmem:[#allocation3 + $0x1f0] sm:$0xff]
    %v5573 = vld [vmem:[#allocation3 + $0x1f8] sm:$0xff]
    %v5574 = vadd.f32 %v5446, %v5510
    %v5575 = vadd.f32 %v5447, %v5511
    %v5576 = vadd.f32 %v5448, %v5512
    %v5577 = vadd.f32 %v5449, %v5513
    %v5578 = vadd.f32 %v5450, %v5514
    %v5579 = vadd.f32 %v5451, %v5515
    %v5580 = vadd.f32 %v5452, %v5516
    %v5581 = vadd.f32 %v5453, %v5517
    %v5582 = vadd.f32 %v5454, %v5518
    %v5583 = vadd.f32 %v5455, %v5519
    %v5584 = vadd.f32 %v5456, %v5520
    %v5585 = vadd.f32 %v5457, %v5521
    %v5586 = vadd.f32 %v5458, %v5522
    %v5587 = vadd.f32 %v5459, %v5523
    %v5588 = vadd.f32 %v5460, %v5524
    %v5589 = vadd.f32 %v5461, %v5525
    %v5590 = vadd.f32 %v5462, %v5526
    %v5591 = vadd.f32 %v5463, %v5527
    %v5592 = vadd.f32 %v5464, %v5528
    %v5593 = vadd.f32 %v5465, %v5529
    %v5594 = vadd.f32 %v5466, %v5530
    %v5595 = vadd.f32 %v5467, %v5531
    %v5596 = vadd.f32 %v5468, %v5532
    %v5597 = vadd.f32 %v5469, %v5533
    %v5598 = vadd.f32 %v5470, %v5534
    %v5599 = vadd.f32 %v5471, %v5535
    %v5600 = vadd.f32 %v5472, %v5536
    %v5601 = vadd.f32 %v5473, %v5537
    %v5602 = vadd.f32 %v5474, %v5538
    %v5603 = vadd.f32 %v5475, %v5539
    %v5604 = vadd.f32 %v5476, %v5540
    %v5605 = vadd.f32 %v5477, %v5541
    %v5606 = vadd.f32 %v5478, %v5542
    %v5607 = vadd.f32 %v5479, %v5543
    %v5608 = vadd.f32 %v5480, %v5544
    %v5609 = vadd.f32 %v5481, %v5545
    %v5610 = vadd.f32 %v5482, %v5546
    %v5611 = vadd.f32 %v5483, %v5547
    %v5612 = vadd.f32 %v5484, %v5548
    %v5613 = vadd.f32 %v5485, %v5549
    %v5614 = vadd.f32 %v5486, %v5550
    %v5615 = vadd.f32 %v5487, %v5551
    %v5616 = vadd.f32 %v5488, %v5552
    %v5617 = vadd.f32 %v5489, %v5553
    %v5618 = vadd.f32 %v5490, %v5554
    %v5619 = vadd.f32 %v5491, %v5555
    %v5620 = vadd.f32 %v5492, %v5556
    %v5621 = vadd.f32 %v5493, %v5557
    %v5622 = vadd.f32 %v5494, %v5558
    %v5623 = vadd.f32 %v5495, %v5559
    %v5624 = vadd.f32 %v5496, %v5560
    %v5625 = vadd.f32 %v5497, %v5561
    %v5626 = vadd.f32 %v5498, %v5562
    %v5627 = vadd.f32 %v5499, %v5563
    %v5628 = vadd.f32 %v5500, %v5564
    %v5629 = vadd.f32 %v5501, %v5565
    %v5630 = vadd.f32 %v5502, %v5566
    %v5631 = vadd.f32 %v5503, %v5567
    %v5632 = vadd.f32 %v5504, %v5568
    %v5633 = vadd.f32 %v5505, %v5569
    %v5634 = vadd.f32 %v5506, %v5570
    %v5635 = vadd.f32 %v5507, %v5571
    %v5636 = vadd.f32 %v5508, %v5572
    %v5637 = vadd.f32 %v5509, %v5573
    %v5638 = vmax.f32 %v5574, 0.0
    %v5639 = vmax.f32 %v5575, 0.0
    %v5640 = vmax.f32 %v5576, 0.0
    %v5641 = vmax.f32 %v5577, 0.0
    %v5642 = vmax.f32 %v5578, 0.0
    %v5643 = vmax.f32 %v5579, 0.0
    %v5644 = vmax.f32 %v5580, 0.0
    %v5645 = vmax.f32 %v5581, 0.0
    %v5646 = vmax.f32 %v5582, 0.0
    %v5647 = vmax.f32 %v5583, 0.0
    %v5648 = vmax.f32 %v5584, 0.0
    %v5649 = vmax.f32 %v5585, 0.0
    %v5650 = vmax.f32 %v5586, 0.0
    %v5651 = vmax.f32 %v5587, 0.0
    %v5652 = vmax.f32 %v5588, 0.0
    %v5653 = vmax.f32 %v5589, 0.0
    %v5654 = vmax.f32 %v5590, 0.0
    %v5655 = vmax.f32 %v5591, 0.0
    %v5656 = vmax.f32 %v5592, 0.0
    %v5657 = vmax.f32 %v5593, 0.0
    %v5658 = vmax.f32 %v5594, 0.0
    %v5659 = vmax.f32 %v5595, 0.0
    %v5660 = vmax.f32 %v5596, 0.0
    %v5661 = vmax.f32 %v5597, 0.0
    %v5662 = vmax.f32 %v5598, 0.0
    %v5663 = vmax.f32 %v5599, 0.0
    %v5664 = vmax.f32 %v5600, 0.0
    %v5665 = vmax.f32 %v5601, 0.0
    %v5666 = vmax.f32 %v5602, 0.0
    %v5667 = vmax.f32 %v5603, 0.0
    %v5668 = vmax.f32 %v5604, 0.0
    %v5669 = vmax.f32 %v5605, 0.0
    %v5670 = vmax.f32 %v5606, 0.0
    %v5671 = vmax.f32 %v5607, 0.0
    %v5672 = vmax.f32 %v5608, 0.0
    %v5673 = vmax.f32 %v5609, 0.0
    %v5674 = vmax.f32 %v5610, 0.0
    %v5675 = vmax.f32 %v5611, 0.0
    %v5676 = vmax.f32 %v5612, 0.0
    %v5677 = vmax.f32 %v5613, 0.0
    %v5678 = vmax.f32 %v5614, 0.0
    %v5679 = vmax.f32 %v5615, 0.0
    %v5680 = vmax.f32 %v5616, 0.0
    %v5681 = vmax.f32 %v5617, 0.0
    %v5682 = vmax.f32 %v5618, 0.0
    %v5683 = vmax.f32 %v5619, 0.0
    %v5684 = vmax.f32 %v5620, 0.0
    %v5685 = vmax.f32 %v5621, 0.0
    %v5686 = vmax.f32 %v5622, 0.0
    %v5687 = vmax.f32 %v5623, 0.0
    %v5688 = vmax.f32 %v5624, 0.0
    %v5689 = vmax.f32 %v5625, 0.0
    %v5690 = vmax.f32 %v5626, 0.0
    %v5691 = vmax.f32 %v5627, 0.0
    %v5692 = vmax.f32 %v5628, 0.0
    %v5693 = vmax.f32 %v5629, 0.0
    %v5694 = vmax.f32 %v5630, 0.0
    %v5695 = vmax.f32 %v5631, 0.0
    %v5696 = vmax.f32 %v5632, 0.0
    %v5697 = vmax.f32 %v5633, 0.0
    %v5698 = vmax.f32 %v5634, 0.0
    %v5699 = vmax.f32 %v5635, 0.0
    %v5700 = vmax.f32 %v5636, 0.0
    %v5701 = vmax.f32 %v5637, 0.0
    %5702 = vst [vmem:[#allocation6] sm:$0xff] %v5638
    %5703 = vst [vmem:[#allocation6 + $0x8] sm:$0xff] %v5639
    %5704 = vst [vmem:[#allocation6 + $0x10] sm:$0xff] %v5640
    %5705 = vst [vmem:[#allocation6 + $0x18] sm:$0xff] %v5641
    %5706 = vst [vmem:[#allocation6 + $0x20] sm:$0xff] %v5642
    %5707 = vst [vmem:[#allocation6 + $0x28] sm:$0xff] %v5643
    %5708 = vst [vmem:[#allocation6 + $0x30] sm:$0xff] %v5644
    %5709 = vst [vmem:[#allocation6 + $0x38] sm:$0xff] %v5645
    %5710 = vst [vmem:[#allocation6 + $0x40] sm:$0xff] %v5646
    %5711 = vst [vmem:[#allocation6 + $0x48] sm:$0xff] %v5647
    %5712 = vst [vmem:[#allocation6 + $0x50] sm:$0xff] %v5648
    %5713 = vst [vmem:[#allocation6 + $0x58] sm:$0xff] %v5649
    %5714 = vst [vmem:[#allocation6 + $0x60] sm:$0xff] %v5650
    %5715 = vst [vmem:[#allocation6 + $0x68] sm:$0xff] %v5651
    %5716 = vst [vmem:[#allocation6 + $0x70] sm:$0xff] %v5652
    %5717 = vst [vmem:[#allocation6 + $0x78] sm:$0xff] %v5653
    %5718 = vst [vmem:[#allocation6 + $0x80] sm:$0xff] %v5654
    %5719 = vst [vmem:[#allocation6 + $0x88] sm:$0xff] %v5655
    %5720 = vst [vmem:[#allocation6 + $0x90] sm:$0xff] %v5656
    %5721 = vst [vmem:[#allocation6 + $0x98] sm:$0xff] %v5657
    %5722 = vst [vmem:[#allocation6 + $0xa0] sm:$0xff] %v5658
    %5723 = vst [vmem:[#allocation6 + $0xa8] sm:$0xff] %v5659
    %5724 = vst [vmem:[#allocation6 + $0xb0] sm:$0xff] %v5660
    %5725 = vst [vmem:[#allocation6 + $0xb8] sm:$0xff] %v5661
    %5726 = vst [vmem:[#allocation6 + $0xc0] sm:$0xff] %v5662
    %5727 = vst [vmem:[#allocation6 + $0xc8] sm:$0xff] %v5663
    %5728 = vst [vmem:[#allocation6 + $0xd0] sm:$0xff] %v5664
    %5729 = vst [vmem:[#allocation6 + $0xd8] sm:$0xff] %v5665
    %5730 = vst [vmem:[#allocation6 + $0xe0] sm:$0xff] %v5666
    %5731 = vst [vmem:[#allocation6 + $0xe8] sm:$0xff] %v5667
    %5732 = vst [vmem:[#allocation6 + $0xf0] sm:$0xff] %v5668
    %5733 = vst [vmem:[#allocation6 + $0xf8] sm:$0xff] %v5669
    %5734 = vst [vmem:[#allocation6 + $0x100] sm:$0xff] %v5670
    %5735 = vst [vmem:[#allocation6 + $0x108] sm:$0xff] %v5671
    %5736 = vst [vmem:[#allocation6 + $0x110] sm:$0xff] %v5672
    %5737 = vst [vmem:[#allocation6 + $0x118] sm:$0xff] %v5673
    %5738 = vst [vmem:[#allocation6 + $0x120] sm:$0xff] %v5674
    %5739 = vst [vmem:[#allocation6 + $0x128] sm:$0xff] %v5675
    %5740 = vst [vmem:[#allocation6 + $0x130] sm:$0xff] %v5676
    %5741 = vst [vmem:[#allocation6 + $0x138] sm:$0xff] %v5677
    %5742 = vst [vmem:[#allocation6 + $0x140] sm:$0xff] %v5678
    %5743 = vst [vmem:[#allocation6 + $0x148] sm:$0xff] %v5679
    %5744 = vst [vmem:[#allocation6 + $0x150] sm:$0xff] %v5680
    %5745 = vst [vmem:[#allocation6 + $0x158] sm:$0xff] %v5681
    %5746 = vst [vmem:[#allocation6 + $0x160] sm:$0xff] %v5682
    %5747 = vst [vmem:[#allocation6 + $0x168] sm:$0xff] %v5683
    %5748 = vst [vmem:[#allocation6 + $0x170] sm:$0xff] %v5684
    %5749 = vst [vmem:[#allocation6 + $0x178] sm:$0xff] %v5685
    %5750 = vst [vmem:[#allocation6 + $0x180] sm:$0xff] %v5686
    %5751 = vst [vmem:[#allocation6 + $0x188] sm:$0xff] %v5687
    %5752 = vst [vmem:[#allocation6 + $0x190] sm:$0xff] %v5688
    %5753 = vst [vmem:[#allocation6 + $0x198] sm:$0xff] %v5689
    %5754 = vst [vmem:[#allocation6 + $0x1a0] sm:$0xff] %v5690
    %5755 = vst [vmem:[#allocation6 + $0x1a8] sm:$0xff] %v5691
    %5756 = vst [vmem:[#allocation6 + $0x1b0] sm:$0xff] %v5692
    %5757 = vst [vmem:[#allocation6 + $0x1b8] sm:$0xff] %v5693
    %5758 = vst [vmem:[#allocation6 + $0x1c0] sm:$0xff] %v5694
    %5759 = vst [vmem:[#allocation6 + $0x1c8] sm:$0xff] %v5695
    %5760 = vst [vmem:[#allocation6 + $0x1d0] sm:$0xff] %v5696
    %5761 = vst [vmem:[#allocation6 + $0x1d8] sm:$0xff] %v5697
    %5762 = vst [vmem:[#allocation6 + $0x1e0] sm:$0xff] %v5698
    %5763 = vst [vmem:[#allocation6 + $0x1e8] sm:$0xff] %v5699
    %5764 = vst [vmem:[#allocation6 + $0x1f0] sm:$0xff] %v5700
    %5765 = vst [vmem:[#allocation6 + $0x1f8] sm:$0xff] %v5701
    // Predicated region
    $region46: #{tpu_custom_call.1} parent=1 // pred_check
      _
    $region47: #{tpu_custom_call.1} parent=1 // pred_check_branch
      %5767 = sbr.rel (0) target = $region49
    $region48: #{tpu_custom_call.1} parent=1 // pred_region
      %s5769 = ssub.s32 8192, 8192
      %5770 = vsyncadd [#allocation5], %s5769
      %s5771 = sshll.u32 [#allocation6], 4
      %s5772 = int_to_ptr.vmem [resolvable:$true] %s5771
      %5777 = dma.vmem_to_hbm [thread:$0]  %s5772, 8192, %s10, [#allocation5], 128, 128, 8
    $region49: #{tpu_custom_call.1} parent=1 // pred_fallthru
      _
    // Predicated region
    $region50: #{tpu_custom_call.1} parent=1 // pred_check
      _
    $region51: #{tpu_custom_call.1} parent=1 // pred_check_branch
      %5779 = sbr.rel (0) target = $region53
    $region52: #{tpu_custom_call.1} parent=1 // pred_region
      %5780 = dma.done [#allocation5], 8192
    $region53: #{tpu_custom_call.1} parent=1 // pred_fallthru
      _
    %5781 = vsyncpa [#allocation4], 1
    %5782 = vsyncpa [#allocation5], 1

</llo_original>
